<compile_context>
chip_gen: v6e
topology: v6e:2x2x1
jax: 0.10.0
libtpu: 0.0.40
codegen_flags: <defaults>
</compile_context>

<pallas_src>
import math

import jax
import jax.numpy as jnp
from jax import lax
from jax.experimental import pallas as pl
from jax.experimental.pallas import tpu as pltpu

HID = 32          # opt['hidden_size']
HEADS = 4         # opt['multihead']
DH = HID // HEADS
FFN_SIZE = 64     # opt['ffn_size']
ORDERS = 2        # opt['orders']
LN_EPS = 1e-6
NEG = -1e9
_SCALE = 1.0 / math.sqrt(DH)


# ----------------------------------------------------------------------------
# In-kernel helpers
# ----------------------------------------------------------------------------
def _softmax_last(s, approx=True):
    """Row softmax over the last axis; reciprocal on the EUP when approx=True."""
    m = jnp.max(s, axis=-1, keepdims=True)
    e = jnp.exp(s - m)
    d = jnp.sum(e, axis=-1, keepdims=True)
    if approx:
        return e * pl.reciprocal(d, approx=True)
    return e / d


def _layernorm(z, g, b):
    u = jnp.mean(z, axis=-1, keepdims=True)
    var = jnp.mean((z - u) ** 2, axis=-1, keepdims=True)
    return (z - u) * lax.rsqrt(var + LN_EPS) * g + b


def _split_heads(t):
    # (L, HID) -> (HEADS, L, DH): lane slices stacked on a new leading (batch) axis.
    return jnp.stack([t[:, h * DH:(h + 1) * DH] for h in range(HEADS)], axis=0)


def _merge_heads(t):
    # (HEADS, L, DH) -> (L, HID)
    return jnp.concatenate([t[h] for h in range(HEADS)], axis=-1)


# ----------------------------------------------------------------------------
# Fused kernel: one batch element per grid step, everything stays in VMEM.
# ----------------------------------------------------------------------------
def _fused_kernel(x_ref, y_ref, xmask_ref, ymasks_ref,
                  wqkv2_ref, bqkv2_ref, wm2_ref, bm2_ref,
                  wq1_ref, bq1_ref, wkv1_ref, bkv1_ref, wm1_ref, bm1_ref,
                  rw1_ref, rw2_ref, rb2_ref,
                  wf1_ref, bf1_ref, wf2_ref, bf2_ref,
                  lng_ref, lnb_ref,
                  o_ref):
    x = x_ref[0]                                     # (Lx, D)
    y = y_ref[0]                                     # (Ly, D)
    lng = lng_ref[...]                               # (3, D): [norm2, norm1, norm3]
    lnb = lnb_ref[...]

    # Additive mask biases, hoisted out of all head/order loops.
    key_bias = xmask_ref[0] * NEG                    # (1, Lx)        self-attn key mask
    order_bias = ymasks_ref[...] * NEG               # (ORDERS, 1, Lx, Ly)

    # ---------------- MHAtt (self-attention) + residual + LN ----------------
    qkv = jnp.dot(x, wqkv2_ref[...], preferred_element_type=jnp.float32) + bqkv2_ref[...]
    q = _split_heads(qkv[:, 0 * HID:1 * HID])        # (H, Lx, DH)
    k = _split_heads(qkv[:, 1 * HID:2 * HID])
    v = _split_heads(qkv[:, 2 * HID:3 * HID])
    s = jnp.einsum('hqd,hkd->hqk', q, k,
                   preferred_element_type=jnp.float32) * _SCALE      # (H, Lx, Lx)
    p = _softmax_last(s + key_bias[None])                            # one stacked softmax
    att = _merge_heads(jnp.einsum('hqk,hkd->hqd', p, v,
                                  preferred_element_type=jnp.float32))
    att = jnp.dot(att, wm2_ref[...], preferred_element_type=jnp.float32) + bm2_ref[...]
    x = _layernorm(x + att, lng[0:1], lnb[0:1])

    # -------- SARoutingBlock: SoftRoutingBlock (avg pool) + routed attention --------
    pooled = jnp.mean(y, axis=0, keepdims=True)                      # (1, D)
    hdn = jnp.maximum(jnp.dot(pooled, rw1_ref[...],
                              preferred_element_type=jnp.float32), 0.0)
    logits = jnp.dot(hdn, rw2_ref[...],
                     preferred_element_type=jnp.float32) + rb2_ref[...]   # (1, ORDERS)
    alphas = _softmax_last(logits, approx=False)                     # (1, ORDERS)

    kv = jnp.dot(y, wkv1_ref[...], preferred_element_type=jnp.float32) + bkv1_ref[...]
    k1 = _split_heads(kv[:, :HID])                                   # (H, Ly, DH)
    v1 = _split_heads(kv[:, HID:])
    q1 = _split_heads(jnp.dot(x, wq1_ref[...],
                              preferred_element_type=jnp.float32) + bq1_ref[...])
    s1 = jnp.einsum('hqd,hkd->hqk', q1, k1,
                    preferred_element_type=jnp.float32) * _SCALE     # (H, Lx, Ly)

    # Stack orders on the leading axis: one softmax over (ORDERS*H, Lx, Ly).
    s_all = jnp.concatenate([s1 + order_bias[o, 0][None] for o in range(ORDERS)], axis=0)
    p_all = _softmax_last(s_all)
    # einsum('bl,blcnm->bcnm') folded: weighted sum of per-order attention maps.
    att1 = alphas[:, 0:1] * p_all[:HEADS]
    for o in range(1, ORDERS):
        att1 = att1 + alphas[:, o:o + 1] * p_all[o * HEADS:(o + 1) * HEADS]
    merged = _merge_heads(jnp.einsum('hqk,hkd->hqd', att1, v1,
                                     preferred_element_type=jnp.float32))
    merged = jnp.dot(merged, wm1_ref[...], preferred_element_type=jnp.float32) + bm1_ref[...]
    x = _layernorm(x + merged, lng[1:2], lnb[1:2])

    # ---------------- FFN + residual + LN ----------------
    h = jnp.maximum(jnp.dot(x, wf1_ref[...],
                            preferred_element_type=jnp.float32) + bf1_ref[...], 0.0)
    ff = jnp.dot(h, wf2_ref[...], preferred_element_type=jnp.float32) + bf2_ref[...]
    x = _layernorm(x + ff, lng[2:3], lnb[2:3])

    o_ref[0] = x


# ----------------------------------------------------------------------------
# Wrapper: single pallas_call, grid over batch (parallel -> both TCs on v7x).
# ----------------------------------------------------------------------------
def _batch_spec(L, D):
    return pl.BlockSpec((1, L, D), lambda b: (b, 0, 0))


def _const_spec(shape):
    n = len(shape)
    return pl.BlockSpec(shape, lambda b, _n=n: (0,) * _n)


def sa_multitrar_forward(x, y, y_masks, x_mask, params):
    B, Lx, D = x.shape
    _, Ly, _ = y.shape
    p2, p1, pf = params['mhatt2'], params['mhatt1'], params['ffn']

    # Pack weights (tiny concats; folded into the surrounding jit graph).
    wqkv2 = jnp.concatenate([p2['wq'], p2['wk'], p2['wv']], axis=1)   # (D, 3D)
    bqkv2 = jnp.concatenate([p2['bq'], p2['bk'], p2['bv']], axis=1)   # (1, 3D)
    wkv1 = jnp.concatenate([p1['wk'], p1['wv']], axis=1)              # (D, 2D)
    bkv1 = jnp.concatenate([p1['bk'], p1['bv']], axis=1)              # (1, 2D)
    lng = jnp.concatenate([params['norm2']['g'], params['norm1']['g'],
                           params['norm3']['g']], axis=0)             # (3, D)
    lnb = jnp.concatenate([params['norm2']['b'], params['norm1']['b'],
                           params['norm3']['b']], axis=0)             # (3, D)

    return pl.pallas_call(
        _fused_kernel,
        out_shape=jax.ShapeDtypeStruct((B, Lx, D), jnp.float32),
        grid=(B,),
        in_specs=[
            _batch_spec(Lx, D),                                        # x
            _batch_spec(Ly, D),                                        # y
            pl.BlockSpec((1, 1, Lx), lambda b: (b, 0, 0)),             # x_mask
            pl.BlockSpec((ORDERS, 1, Lx, Ly), lambda b: (0, b, 0, 0)),  # y_masks
            _const_spec((D, 3 * D)), _const_spec((1, 3 * D)),          # wqkv2, bqkv2
            _const_spec((D, D)), _const_spec((1, D)),                  # wm2, bm2
            _const_spec((D, D)), _const_spec((1, D)),                  # wq1, bq1
            _const_spec((D, 2 * D)), _const_spec((1, 2 * D)),          # wkv1, bkv1
            _const_spec((D, D)), _const_spec((1, D)),                  # wm1, bm1
            _const_spec((D, D // 2)),                                  # rw1
            _const_spec((D // 2, ORDERS)),                             # rw2
            _const_spec((1, ORDERS)),                                  # rb2
            _const_spec((D, FFN_SIZE)), _const_spec((1, FFN_SIZE)),    # ffn w1, b1
            _const_spec((FFN_SIZE, D)), _const_spec((1, D)),           # ffn w2, b2
            _const_spec((3, D)), _const_spec((3, D)),                  # LN gamma, beta
        ],
        out_specs=_batch_spec(Lx, D),
        compiler_params=pltpu.CompilerParams(dimension_semantics=("parallel",)),
    )(x, y, x_mask, y_masks,
      wqkv2, bqkv2, p2['wm'], p2['bm'],
      p1['wq'], p1['bq'], wkv1, bkv1, p1['wm'], p1['bm'],
      p1['rw1'], p1['rw2'], p1['rb2'],
      pf['w1'], pf['b1'], pf['w2'], pf['b2'],
      lng, lnb)


# ----------------------------------------------------------------------------
# Deterministic parameter init + pure-JAX reference (for self-check)
# ----------------------------------------------------------------------------
def init_params(key):
    ks = iter(jax.random.split(key, 40))

    def w(shape, scale=0.15):
        return (scale * jax.random.normal(next(ks), shape)).astype(jnp.float32)

    def attn_params():
        return dict(wq=w((HID, HID)), bq=w((1, HID)),
                    wk=w((HID, HID)), bk=w((1, HID)),
                    wv=w((HID, HID)), bv=w((1, HID)),
                    wm=w((HID, HID)), bm=w((1, HID)))

    mhatt1 = attn_params()
    mhatt1.update(rw1=w((HID, HID // 2)),             # Linear(in, in//2, bias=False)
                  rw2=w((HID // 2, ORDERS)),           # Linear(in//2, orders)
                  rb2=w((1, ORDERS)))
    params = dict(
        mhatt2=attn_params(),
        mhatt1=mhatt1,
        ffn=dict(w1=w((HID, FFN_SIZE)), b1=w((1, FFN_SIZE)),
                 w2=w((FFN_SIZE, HID)), b2=w((1, HID))),
        norm1=dict(g=jnp.ones((1, HID), jnp.float32), b=jnp.zeros((1, HID), jnp.float32)),
        norm2=dict(g=jnp.ones((1, HID), jnp.float32), b=jnp.zeros((1, HID), jnp.float32)),
        norm3=dict(g=jnp.ones((1, HID), jnp.float32), b=jnp.zeros((1, HID), jnp.float32)),
    )
    return params


def ref_forward(x, y, y_masks, x_mask, params):
    B, Lx, D = x.shape

    def ln(z, p):
        u = z.mean(-1, keepdims=True)
        s = ((z - u) ** 2).mean(-1, keepdims=True)
        return (z - u) / jnp.sqrt(s + LN_EPS) * p['g'] + p['b']

    def split_heads(t):
        b, l, _ = t.shape
        return t.reshape(b, l, HEADS, DH).transpose(0, 2, 1, 3)

    # mhatt2
    p = params['mhatt2']
    q = split_heads(x @ p['wq'] + p['bq'])
    k = split_heads(x @ p['wk'] + p['bk'])
    v = split_heads(x @ p['wv'] + p['bv'])
    s = q @ jnp.swapaxes(k, -1, -2) / math.sqrt(DH)
    s = jnp.where(x_mask[:, :, None, :] > 0.5, NEG, s)
    att = jax.nn.softmax(s, -1)
    atted = (att @ v).transpose(0, 2, 1, 3).reshape(B, Lx, HID) @ p['wm'] + p['bm']
    x = ln(x + atted, params['norm2'])

    # mhatt1 (SARoutingBlock, soft routing, avg pooling)
    p = params['mhatt1']
    pooled = y.mean(axis=1)
    logits = jnp.maximum(pooled @ p['rw1'], 0.0) @ p['rw2'] + p['rb2']
    alphas = jax.nn.softmax(logits, -1)                                  # (B, ORDERS)
    q = split_heads(x @ p['wq'] + p['bq'])
    k = split_heads(y @ p['wk'] + p['bk'])
    v = split_heads(y @ p['wv'] + p['bv'])
    s = q @ jnp.swapaxes(k, -1, -2) / math.sqrt(DH)                      # (B,H,Lx,Ly)
    att_list = jnp.stack(
        [jax.nn.softmax(jnp.where(y_masks[o][:, None] > 0.5, NEG, s), -1)
         for o in range(ORDERS)], axis=1)                                # (B,O,H,Lx,Ly)
    att_map = jnp.einsum('bl,blcnm->bcnm', alphas, att_list)
    atted = (att_map @ v).transpose(0, 2, 1, 3).reshape(B, Lx, HID) @ p['wm'] + p['bm']
    x = ln(x + atted, params['norm1'])

    # ffn
    p = params['ffn']
    ff = jnp.maximum(x @ p['w1'] + p['b1'], 0.0) @ p['w2'] + p['b2']
    x = ln(x + ff, params['norm3'])
    return x


# ----------------------------------------------------------------------------
if __name__ == "__main__":
    B, Lx, Ly = 2, 8, 16
    key = jax.random.PRNGKey(0)
    kx, ky, kp = jax.random.split(key, 3)

    x = jax.random.normal(kx, (B, Lx, HID), jnp.float32)
    y = jax.random.normal(ky, (B, Ly, HID), jnp.float32)

    # x_mask: (B, 1, Lx) key mask for self-attention (1.0 == masked)
    x_mask = jnp.zeros((B, 1, Lx), jnp.float32).at[1, 0, Lx - 2:].set(1.0)
    # y_masks: (ORDERS, B, Lx, Ly) per-order masks for routed cross-attention
    y_masks = jnp.zeros((ORDERS, B, Lx, Ly), jnp.float32)
    y_masks = y_masks.at[1, :, :, Ly // 2:].set(1.0)

    params = init_params(kp)

    fwd = jax.jit(sa_multitrar_forward)
    out = jax.block_until_ready(fwd(x, y, y_masks, x_mask, params))
    ref = ref_forward(x, y, y_masks, x_mask, params)

    assert out.shape == (B, Lx, HID)
    # Slightly relaxed tolerance: kernel softmax uses the EUP approximate reciprocal.
    assert jnp.allclose(out, ref, atol=5e-3, rtol=5e-3), \
        f"max abs err {jnp.max(jnp.abs(out - ref))}"
    print("KERNEL_OK")
</pallas_src>

<mosaic_0001>
module attributes {stable_mosaic.version = 11 : i64} {
  func.func @_fused_kernel(%arg0: i32, %arg1: memref<1x8x32xf32, #tpu.memory_space<vmem>>, %arg2: memref<1x16x32xf32, #tpu.memory_space<vmem>>, %arg3: memref<1x1x8xf32, #tpu.memory_space<vmem>>, %arg4: memref<2x1x8x16xf32, #tpu.memory_space<vmem>>, %arg5: memref<32x96xf32, #tpu.memory_space<vmem>>, %arg6: memref<1x96xf32, #tpu.memory_space<vmem>>, %arg7: memref<32x32xf32, #tpu.memory_space<vmem>>, %arg8: memref<1x32xf32, #tpu.memory_space<vmem>>, %arg9: memref<32x32xf32, #tpu.memory_space<vmem>>, %arg10: memref<1x32xf32, #tpu.memory_space<vmem>>, %arg11: memref<32x64xf32, #tpu.memory_space<vmem>>, %arg12: memref<1x64xf32, #tpu.memory_space<vmem>>, %arg13: memref<32x32xf32, #tpu.memory_space<vmem>>, %arg14: memref<1x32xf32, #tpu.memory_space<vmem>>, %arg15: memref<32x16xf32, #tpu.memory_space<vmem>>, %arg16: memref<16x2xf32, #tpu.memory_space<vmem>>, %arg17: memref<1x2xf32, #tpu.memory_space<vmem>>, %arg18: memref<32x64xf32, #tpu.memory_space<vmem>>, %arg19: memref<1x64xf32, #tpu.memory_space<vmem>>, %arg20: memref<64x32xf32, #tpu.memory_space<vmem>>, %arg21: memref<1x32xf32, #tpu.memory_space<vmem>>, %arg22: memref<3x32xf32, #tpu.memory_space<vmem>>, %arg23: memref<3x32xf32, #tpu.memory_space<vmem>>, %arg24: memref<1x8x32xf32, #tpu.memory_space<vmem>>) attributes {dimension_semantics = [#tpu.dimension_semantics<parallel>], iteration_bounds = array<i64: 2>, scalar_prefetch = 0 : i64, scratch_operands = 0 : i64, tpu.core_type = #tpu.core_type<tc>, window_params = [{transform_indices = @transform_0, window_bounds = array<i64: 1, 8, 32>}, {transform_indices = @transform_1, window_bounds = array<i64: 1, 16, 32>}, {transform_indices = @transform_2, window_bounds = array<i64: 1, 1, 8>}, {transform_indices = @transform_3, window_bounds = array<i64: 2, 1, 8, 16>}, {pipeline_mode = #tpu.pipeline_mode<synchronous>, transform_indices = @transform_4, window_bounds = array<i64: 32, 96>}, {pipeline_mode = #tpu.pipeline_mode<synchronous>, transform_indices = @transform_5, window_bounds = array<i64: 1, 96>}, {pipeline_mode = #tpu.pipeline_mode<synchronous>, transform_indices = @transform_6, window_bounds = array<i64: 32, 32>}, {pipeline_mode = #tpu.pipeline_mode<synchronous>, transform_indices = @transform_7, window_bounds = array<i64: 1, 32>}, {pipeline_mode = #tpu.pipeline_mode<synchronous>, transform_indices = @transform_8, window_bounds = array<i64: 32, 32>}, {pipeline_mode = #tpu.pipeline_mode<synchronous>, transform_indices = @transform_9, window_bounds = array<i64: 1, 32>}, {pipeline_mode = #tpu.pipeline_mode<synchronous>, transform_indices = @transform_10, window_bounds = array<i64: 32, 64>}, {pipeline_mode = #tpu.pipeline_mode<synchronous>, transform_indices = @transform_11, window_bounds = array<i64: 1, 64>}, {pipeline_mode = #tpu.pipeline_mode<synchronous>, transform_indices = @transform_12, window_bounds = array<i64: 32, 32>}, {pipeline_mode = #tpu.pipeline_mode<synchronous>, transform_indices = @transform_13, window_bounds = array<i64: 1, 32>}, {pipeline_mode = #tpu.pipeline_mode<synchronous>, transform_indices = @transform_14, window_bounds = array<i64: 32, 16>}, {pipeline_mode = #tpu.pipeline_mode<synchronous>, transform_indices = @transform_15, window_bounds = array<i64: 16, 2>}, {pipeline_mode = #tpu.pipeline_mode<synchronous>, transform_indices = @transform_16, window_bounds = array<i64: 1, 2>}, {pipeline_mode = #tpu.pipeline_mode<synchronous>, transform_indices = @transform_17, window_bounds = array<i64: 32, 64>}, {pipeline_mode = #tpu.pipeline_mode<synchronous>, transform_indices = @transform_18, window_bounds = array<i64: 1, 64>}, {pipeline_mode = #tpu.pipeline_mode<synchronous>, transform_indices = @transform_19, window_bounds = array<i64: 64, 32>}, {pipeline_mode = #tpu.pipeline_mode<synchronous>, transform_indices = @transform_20, window_bounds = array<i64: 1, 32>}, {pipeline_mode = #tpu.pipeline_mode<synchronous>, transform_indices = @transform_21, window_bounds = array<i64: 3, 32>}, {pipeline_mode = #tpu.pipeline_mode<synchronous>, transform_indices = @transform_22, window_bounds = array<i64: 3, 32>}, {transform_indices = @transform_23, window_bounds = array<i64: 1, 8, 32>}]} {
    %c0 = arith.constant 0 : index
    %c0_0 = arith.constant 0 : index
    %c0_1 = arith.constant 0 : index
    %0 = vector.load %arg1[%c0, %c0_0, %c0_1] : memref<1x8x32xf32, #tpu.memory_space<vmem>>, vector<1x8x32xf32>
    %1 = vector.shape_cast %0 : vector<1x8x32xf32> to vector<8x32xf32>
    %c0_2 = arith.constant 0 : index
    %c0_3 = arith.constant 0 : index
    %c0_4 = arith.constant 0 : index
    %2 = vector.load %arg2[%c0_2, %c0_3, %c0_4] : memref<1x16x32xf32, #tpu.memory_space<vmem>>, vector<1x16x32xf32>
    %3 = vector.shape_cast %2 : vector<1x16x32xf32> to vector<16x32xf32>
    %c0_5 = arith.constant 0 : index
    %c0_6 = arith.constant 0 : index
    %4 = vector.load %arg22[%c0_5, %c0_6] : memref<3x32xf32, #tpu.memory_space<vmem>>, vector<3x32xf32>
    %c0_7 = arith.constant 0 : index
    %c0_8 = arith.constant 0 : index
    %5 = vector.load %arg23[%c0_7, %c0_8] : memref<3x32xf32, #tpu.memory_space<vmem>>, vector<3x32xf32>
    %c0_9 = arith.constant 0 : index
    %c0_10 = arith.constant 0 : index
    %c0_11 = arith.constant 0 : index
    %6 = vector.load %arg3[%c0_9, %c0_10, %c0_11] : memref<1x1x8xf32, #tpu.memory_space<vmem>>, vector<1x1x8xf32>
    %7 = vector.shape_cast %6 : vector<1x1x8xf32> to vector<1x8xf32>
    %cst = arith.constant -1.000000e+09 : f32
    %8 = vector.broadcast %cst : f32 to vector<1x8xf32>
    %9 = arith.mulf %7, %8 : vector<1x8xf32>
    %c0_12 = arith.constant 0 : index
    %c0_13 = arith.constant 0 : index
    %c0_14 = arith.constant 0 : index
    %c0_15 = arith.constant 0 : index
    %10 = vector.load %arg4[%c0_12, %c0_13, %c0_14, %c0_15] : memref<2x1x8x16xf32, #tpu.memory_space<vmem>>, vector<2x1x8x16xf32>
    %cst_16 = arith.constant -1.000000e+09 : f32
    %11 = vector.broadcast %cst_16 : f32 to vector<2x1x8x16xf32>
    %12 = arith.mulf %10, %11 : vector<2x1x8x16xf32>
    %c0_17 = arith.constant 0 : index
    %c0_18 = arith.constant 0 : index
    %13 = vector.load %arg5[%c0_17, %c0_18] : memref<32x96xf32, #tpu.memory_space<vmem>>, vector<32x96xf32>
    %cst_19 = arith.constant dense<0.000000e+00> : vector<8x96xf32>
    %14 = tpu.matmul %1, %13, %cst_19 {dimension_numbers = #tpu.dot_dimension_numbers<[1], [0], [0], [1], [0, 0, 1, 1], [], []>} : vector<8x32xf32>, vector<32x96xf32>, vector<8x96xf32> -> vector<8x96xf32>
    %c0_20 = arith.constant 0 : index
    %c0_21 = arith.constant 0 : index
    %15 = vector.load %arg6[%c0_20, %c0_21] : memref<1x96xf32, #tpu.memory_space<vmem>>, vector<1x96xf32>
    %16 = vector.broadcast %15 : vector<1x96xf32> to vector<8x96xf32>
    %17 = arith.addf %14, %16 : vector<8x96xf32>
    %18 = vector.extract_strided_slice %17 {offsets = [0, 0], sizes = [8, 32], strides = [1, 1]} : vector<8x96xf32> to vector<8x32xf32>
    %19 = vector.extract_strided_slice %18 {offsets = [0, 0], sizes = [8, 8], strides = [1, 1]} : vector<8x32xf32> to vector<8x8xf32>
    %20 = vector.extract_strided_slice %18 {offsets = [0, 8], sizes = [8, 8], strides = [1, 1]} : vector<8x32xf32> to vector<8x8xf32>
    %21 = vector.extract_strided_slice %18 {offsets = [0, 16], sizes = [8, 8], strides = [1, 1]} : vector<8x32xf32> to vector<8x8xf32>
    %22 = vector.extract_strided_slice %18 {offsets = [0, 24], sizes = [8, 8], strides = [1, 1]} : vector<8x32xf32> to vector<8x8xf32>
    %23 = vector.shape_cast %19 : vector<8x8xf32> to vector<1x8x8xf32>
    %24 = vector.shape_cast %20 : vector<8x8xf32> to vector<1x8x8xf32>
    %25 = vector.shape_cast %21 : vector<8x8xf32> to vector<1x8x8xf32>
    %26 = vector.shape_cast %22 : vector<8x8xf32> to vector<1x8x8xf32>
    %27 = tpu.concatenate %23, %24, %25, %26 in 0 : vector<1x8x8xf32>, vector<1x8x8xf32>, vector<1x8x8xf32>, vector<1x8x8xf32> -> vector<4x8x8xf32>
    %28 = vector.extract_strided_slice %17 {offsets = [0, 32], sizes = [8, 32], strides = [1, 1]} : vector<8x96xf32> to vector<8x32xf32>
    %29 = vector.extract_strided_slice %28 {offsets = [0, 0], sizes = [8, 8], strides = [1, 1]} : vector<8x32xf32> to vector<8x8xf32>
    %30 = vector.extract_strided_slice %28 {offsets = [0, 8], sizes = [8, 8], strides = [1, 1]} : vector<8x32xf32> to vector<8x8xf32>
    %31 = vector.extract_strided_slice %28 {offsets = [0, 16], sizes = [8, 8], strides = [1, 1]} : vector<8x32xf32> to vector<8x8xf32>
    %32 = vector.extract_strided_slice %28 {offsets = [0, 24], sizes = [8, 8], strides = [1, 1]} : vector<8x32xf32> to vector<8x8xf32>
    %33 = vector.shape_cast %29 : vector<8x8xf32> to vector<1x8x8xf32>
    %34 = vector.shape_cast %30 : vector<8x8xf32> to vector<1x8x8xf32>
    %35 = vector.shape_cast %31 : vector<8x8xf32> to vector<1x8x8xf32>
    %36 = vector.shape_cast %32 : vector<8x8xf32> to vector<1x8x8xf32>
    %37 = tpu.concatenate %33, %34, %35, %36 in 0 : vector<1x8x8xf32>, vector<1x8x8xf32>, vector<1x8x8xf32>, vector<1x8x8xf32> -> vector<4x8x8xf32>
    %38 = vector.extract_strided_slice %17 {offsets = [0, 64], sizes = [8, 32], strides = [1, 1]} : vector<8x96xf32> to vector<8x32xf32>
    %39 = vector.extract_strided_slice %38 {offsets = [0, 0], sizes = [8, 8], strides = [1, 1]} : vector<8x32xf32> to vector<8x8xf32>
    %40 = vector.extract_strided_slice %38 {offsets = [0, 8], sizes = [8, 8], strides = [1, 1]} : vector<8x32xf32> to vector<8x8xf32>
    %41 = vector.extract_strided_slice %38 {offsets = [0, 16], sizes = [8, 8], strides = [1, 1]} : vector<8x32xf32> to vector<8x8xf32>
    %42 = vector.extract_strided_slice %38 {offsets = [0, 24], sizes = [8, 8], strides = [1, 1]} : vector<8x32xf32> to vector<8x8xf32>
    %43 = vector.shape_cast %39 : vector<8x8xf32> to vector<1x8x8xf32>
    %44 = vector.shape_cast %40 : vector<8x8xf32> to vector<1x8x8xf32>
    %45 = vector.shape_cast %41 : vector<8x8xf32> to vector<1x8x8xf32>
    %46 = vector.shape_cast %42 : vector<8x8xf32> to vector<1x8x8xf32>
    %47 = tpu.concatenate %43, %44, %45, %46 in 0 : vector<1x8x8xf32>, vector<1x8x8xf32>, vector<1x8x8xf32>, vector<1x8x8xf32> -> vector<4x8x8xf32>
    "tpu.trace_start"() <{level = 10 : i32, message = "hqd,hkd->hqk"}> : () -> ()
    %cst_22 = arith.constant dense<0.000000e+00> : vector<4x8x8xf32>
    %48 = tpu.matmul %27, %37, %cst_22 {dimension_numbers = #tpu.dot_dimension_numbers<[2], [2], [1], [1], [0, 0, 0, 1, 1, 1], [0], [0]>} : vector<4x8x8xf32>, vector<4x8x8xf32>, vector<4x8x8xf32> -> vector<4x8x8xf32>
    "tpu.trace_stop"() : () -> ()
    %cst_23 = arith.constant 0.353553385 : f32
    %49 = vector.broadcast %cst_23 : f32 to vector<4x8x8xf32>
    %50 = arith.mulf %48, %49 : vector<4x8x8xf32>
    %51 = vector.shape_cast %9 : vector<1x8xf32> to vector<1x1x8xf32>
    %52 = vector.broadcast %51 : vector<1x1x8xf32> to vector<4x8x8xf32>
    %53 = arith.addf %50, %52 : vector<4x8x8xf32>
    %cst_24 = arith.constant dense<0xFF800000> : vector<4x8xf32>
    %54 = vector.multi_reduction <maximumf>, %53, %cst_24 [2] : vector<4x8x8xf32> to vector<4x8xf32>
    %55 = vector.shape_cast %54 : vector<4x8xf32> to vector<4x8x1xf32>
    %56 = vector.broadcast %55 : vector<4x8x1xf32> to vector<4x8x8xf32>
    %57 = arith.subf %53, %56 : vector<4x8x8xf32>
    %58 = math.exp %57 : vector<4x8x8xf32>
    %cst_25 = arith.constant dense<0.000000e+00> : vector<4x8xf32>
    %59 = vector.multi_reduction <add>, %58, %cst_25 [2] : vector<4x8x8xf32> to vector<4x8xf32>
    %60 = vector.shape_cast %59 : vector<4x8xf32> to vector<4x8x1xf32>
    %61 = tpu.reciprocal %60 {approx = true} : vector<4x8x1xf32> -> vector<4x8x1xf32>
    %62 = vector.broadcast %61 : vector<4x8x1xf32> to vector<4x8x8xf32>
    %63 = arith.mulf %58, %62 : vector<4x8x8xf32>
    "tpu.trace_start"() <{level = 10 : i32, message = "hqk,hkd->hqd"}> : () -> ()
    %cst_26 = arith.constant dense<0.000000e+00> : vector<4x8x8xf32>
    %64 = tpu.matmul %63, %47, %cst_26 {dimension_numbers = #tpu.dot_dimension_numbers<[2], [1], [1], [2], [0, 0, 0, 1, 1, 2], [0], [0]>} : vector<4x8x8xf32>, vector<4x8x8xf32>, vector<4x8x8xf32> -> vector<4x8x8xf32>
    "tpu.trace_stop"() : () -> ()
    %65 = vector.extract_strided_slice %64 {offsets = [0, 0, 0], sizes = [1, 8, 8], strides = [1, 1, 1]} : vector<4x8x8xf32> to vector<1x8x8xf32>
    %66 = vector.shape_cast %65 : vector<1x8x8xf32> to vector<8x8xf32>
    %67 = vector.extract_strided_slice %64 {offsets = [1, 0, 0], sizes = [1, 8, 8], strides = [1, 1, 1]} : vector<4x8x8xf32> to vector<1x8x8xf32>
    %68 = vector.shape_cast %67 : vector<1x8x8xf32> to vector<8x8xf32>
    %69 = vector.extract_strided_slice %64 {offsets = [2, 0, 0], sizes = [1, 8, 8], strides = [1, 1, 1]} : vector<4x8x8xf32> to vector<1x8x8xf32>
    %70 = vector.shape_cast %69 : vector<1x8x8xf32> to vector<8x8xf32>
    %71 = vector.extract_strided_slice %64 {offsets = [3, 0, 0], sizes = [1, 8, 8], strides = [1, 1, 1]} : vector<4x8x8xf32> to vector<1x8x8xf32>
    %72 = vector.shape_cast %71 : vector<1x8x8xf32> to vector<8x8xf32>
    %73 = tpu.concatenate %66, %68, %70, %72 in 1 : vector<8x8xf32>, vector<8x8xf32>, vector<8x8xf32>, vector<8x8xf32> -> vector<8x32xf32>
    %c0_27 = arith.constant 0 : index
    %c0_28 = arith.constant 0 : index
    %74 = vector.load %arg7[%c0_27, %c0_28] : memref<32x32xf32, #tpu.memory_space<vmem>>, vector<32x32xf32>
    %cst_29 = arith.constant dense<0.000000e+00> : vector<8x32xf32>
    %75 = tpu.matmul %73, %74, %cst_29 {dimension_numbers = #tpu.dot_dimension_numbers<[1], [0], [0], [1], [0, 0, 1, 1], [], []>} : vector<8x32xf32>, vector<32x32xf32>, vector<8x32xf32> -> vector<8x32xf32>
    %c0_30 = arith.constant 0 : index
    %c0_31 = arith.constant 0 : index
    %76 = vector.load %arg8[%c0_30, %c0_31] : memref<1x32xf32, #tpu.memory_space<vmem>>, vector<1x32xf32>
    %77 = vector.broadcast %76 : vector<1x32xf32> to vector<8x32xf32>
    %78 = arith.addf %75, %77 : vector<8x32xf32>
    %79 = arith.addf %1, %78 : vector<8x32xf32>
    %80 = vector.extract_strided_slice %4 {offsets = [0, 0], sizes = [1, 32], strides = [1, 1]} : vector<3x32xf32> to vector<1x32xf32>
    %81 = vector.extract_strided_slice %5 {offsets = [0, 0], sizes = [1, 32], strides = [1, 1]} : vector<3x32xf32> to vector<1x32xf32>
    %cst_32 = arith.constant dense<0.000000e+00> : vector<8xf32>
    %82 = vector.multi_reduction <add>, %79, %cst_32 [1] : vector<8x32xf32> to vector<8xf32>
    %83 = vector.shape_cast %82 : vector<8xf32> to vector<8x1xf32>
    %cst_33 = arith.constant 3.200000e+01 : f32
    %84 = vector.broadcast %cst_33 : f32 to vector<8x1xf32>
    %85 = arith.divf %83, %84 : vector<8x1xf32>
    %86 = vector.broadcast %85 : vector<8x1xf32> to vector<8x32xf32>
    %87 = arith.subf %79, %86 : vector<8x32xf32>
    %88 = arith.mulf %87, %87 : vector<8x32xf32>
    %cst_34 = arith.constant dense<0.000000e+00> : vector<8xf32>
    %89 = vector.multi_reduction <add>, %88, %cst_34 [1] : vector<8x32xf32> to vector<8xf32>
    %90 = vector.shape_cast %89 : vector<8xf32> to vector<8x1xf32>
    %cst_35 = arith.constant 3.200000e+01 : f32
    %91 = vector.broadcast %cst_35 : f32 to vector<8x1xf32>
    %92 = arith.divf %90, %91 : vector<8x1xf32>
    %93 = vector.broadcast %85 : vector<8x1xf32> to vector<8x32xf32>
    %94 = arith.subf %79, %93 : vector<8x32xf32>
    %cst_36 = arith.constant 9.99999997E-7 : f32
    %95 = vector.broadcast %cst_36 : f32 to vector<8x1xf32>
    %96 = arith.addf %92, %95 : vector<8x1xf32>
    %97 = math.rsqrt %96 : vector<8x1xf32>
    %98 = vector.broadcast %97 : vector<8x1xf32> to vector<8x32xf32>
    %99 = arith.mulf %94, %98 : vector<8x32xf32>
    %100 = vector.broadcast %80 : vector<1x32xf32> to vector<8x32xf32>
    %101 = arith.mulf %99, %100 : vector<8x32xf32>
    %102 = vector.broadcast %81 : vector<1x32xf32> to vector<8x32xf32>
    %103 = arith.addf %101, %102 : vector<8x32xf32>
    %cst_37 = arith.constant dense<0.000000e+00> : vector<32xf32>
    %104 = vector.multi_reduction <add>, %3, %cst_37 [0] : vector<16x32xf32> to vector<32xf32>
    %105 = vector.shape_cast %104 : vector<32xf32> to vector<1x32xf32>
    %cst_38 = arith.constant 1.600000e+01 : f32
    %106 = vector.broadcast %cst_38 : f32 to vector<1x32xf32>
    %107 = arith.divf %105, %106 : vector<1x32xf32>
    %c0_39 = arith.constant 0 : index
    %c0_40 = arith.constant 0 : index
    %108 = vector.load %arg15[%c0_39, %c0_40] : memref<32x16xf32, #tpu.memory_space<vmem>>, vector<32x16xf32>
    %cst_41 = arith.constant dense<0.000000e+00> : vector<1x16xf32>
    %109 = tpu.matmul %107, %108, %cst_41 {dimension_numbers = #tpu.dot_dimension_numbers<[1], [0], [0], [1], [0, 0, 1, 1], [], []>} : vector<1x32xf32>, vector<32x16xf32>, vector<1x16xf32> -> vector<1x16xf32>
    %cst_42 = arith.constant 0.000000e+00 : f32
    %110 = vector.broadcast %cst_42 : f32 to vector<1x16xf32>
    %111 = arith.maximumf %109, %110 : vector<1x16xf32>
    %c0_43 = arith.constant 0 : index
    %c0_44 = arith.constant 0 : index
    %112 = vector.load %arg16[%c0_43, %c0_44] : memref<16x2xf32, #tpu.memory_space<vmem>>, vector<16x2xf32>
    %cst_45 = arith.constant dense<0.000000e+00> : vector<1x2xf32>
    %113 = tpu.matmul %111, %112, %cst_45 {dimension_numbers = #tpu.dot_dimension_numbers<[1], [0], [0], [1], [0, 0, 1, 1], [], []>} : vector<1x16xf32>, vector<16x2xf32>, vector<1x2xf32> -> vector<1x2xf32>
    %c0_46 = arith.constant 0 : index
    %c0_47 = arith.constant 0 : index
    %114 = vector.load %arg17[%c0_46, %c0_47] : memref<1x2xf32, #tpu.memory_space<vmem>>, vector<1x2xf32>
    %115 = arith.addf %113, %114 : vector<1x2xf32>
    %cst_48 = arith.constant dense<0xFF800000> : vector<1xf32>
    %116 = vector.multi_reduction <maximumf>, %115, %cst_48 [1] : vector<1x2xf32> to vector<1xf32>
    %117 = vector.shape_cast %116 : vector<1xf32> to vector<1x1xf32>
    %118 = vector.broadcast %117 : vector<1x1xf32> to vector<1x2xf32>
    %119 = arith.subf %115, %118 : vector<1x2xf32>
    %120 = math.exp %119 : vector<1x2xf32>
    %cst_49 = arith.constant dense<0.000000e+00> : vector<1xf32>
    %121 = vector.multi_reduction <add>, %120, %cst_49 [1] : vector<1x2xf32> to vector<1xf32>
    %122 = vector.shape_cast %121 : vector<1xf32> to vector<1x1xf32>
    %123 = vector.broadcast %122 : vector<1x1xf32> to vector<1x2xf32>
    %124 = arith.divf %120, %123 : vector<1x2xf32>
    %c0_50 = arith.constant 0 : index
    %c0_51 = arith.constant 0 : index
    %125 = vector.load %arg11[%c0_50, %c0_51] : memref<32x64xf32, #tpu.memory_space<vmem>>, vector<32x64xf32>
    %cst_52 = arith.constant dense<0.000000e+00> : vector<16x64xf32>
    %126 = tpu.matmul %3, %125, %cst_52 {dimension_numbers = #tpu.dot_dimension_numbers<[1], [0], [0], [1], [0, 0, 1, 1], [], []>} : vector<16x32xf32>, vector<32x64xf32>, vector<16x64xf32> -> vector<16x64xf32>
    %c0_53 = arith.constant 0 : index
    %c0_54 = arith.constant 0 : index
    %127 = vector.load %arg12[%c0_53, %c0_54] : memref<1x64xf32, #tpu.memory_space<vmem>>, vector<1x64xf32>
    %128 = vector.broadcast %127 : vector<1x64xf32> to vector<16x64xf32>
    %129 = arith.addf %126, %128 : vector<16x64xf32>
    %130 = vector.extract_strided_slice %129 {offsets = [0, 0], sizes = [16, 32], strides = [1, 1]} : vector<16x64xf32> to vector<16x32xf32>
    %131 = vector.extract_strided_slice %130 {offsets = [0, 0], sizes = [16, 8], strides = [1, 1]} : vector<16x32xf32> to vector<16x8xf32>
    %132 = vector.extract_strided_slice %130 {offsets = [0, 8], sizes = [16, 8], strides = [1, 1]} : vector<16x32xf32> to vector<16x8xf32>
    %133 = vector.extract_strided_slice %130 {offsets = [0, 16], sizes = [16, 8], strides = [1, 1]} : vector<16x32xf32> to vector<16x8xf32>
    %134 = vector.extract_strided_slice %130 {offsets = [0, 24], sizes = [16, 8], strides = [1, 1]} : vector<16x32xf32> to vector<16x8xf32>
    %135 = vector.shape_cast %131 : vector<16x8xf32> to vector<1x16x8xf32>
    %136 = vector.shape_cast %132 : vector<16x8xf32> to vector<1x16x8xf32>
    %137 = vector.shape_cast %133 : vector<16x8xf32> to vector<1x16x8xf32>
    %138 = vector.shape_cast %134 : vector<16x8xf32> to vector<1x16x8xf32>
    %139 = tpu.concatenate %135, %136, %137, %138 in 0 : vector<1x16x8xf32>, vector<1x16x8xf32>, vector<1x16x8xf32>, vector<1x16x8xf32> -> vector<4x16x8xf32>
    %140 = vector.extract_strided_slice %129 {offsets = [0, 32], sizes = [16, 32], strides = [1, 1]} : vector<16x64xf32> to vector<16x32xf32>
    %141 = vector.extract_strided_slice %140 {offsets = [0, 0], sizes = [16, 8], strides = [1, 1]} : vector<16x32xf32> to vector<16x8xf32>
    %142 = vector.extract_strided_slice %140 {offsets = [0, 8], sizes = [16, 8], strides = [1, 1]} : vector<16x32xf32> to vector<16x8xf32>
    %143 = vector.extract_strided_slice %140 {offsets = [0, 16], sizes = [16, 8], strides = [1, 1]} : vector<16x32xf32> to vector<16x8xf32>
    %144 = vector.extract_strided_slice %140 {offsets = [0, 24], sizes = [16, 8], strides = [1, 1]} : vector<16x32xf32> to vector<16x8xf32>
    %145 = vector.shape_cast %141 : vector<16x8xf32> to vector<1x16x8xf32>
    %146 = vector.shape_cast %142 : vector<16x8xf32> to vector<1x16x8xf32>
    %147 = vector.shape_cast %143 : vector<16x8xf32> to vector<1x16x8xf32>
    %148 = vector.shape_cast %144 : vector<16x8xf32> to vector<1x16x8xf32>
    %149 = tpu.concatenate %145, %146, %147, %148 in 0 : vector<1x16x8xf32>, vector<1x16x8xf32>, vector<1x16x8xf32>, vector<1x16x8xf32> -> vector<4x16x8xf32>
    %c0_55 = arith.constant 0 : index
    %c0_56 = arith.constant 0 : index
    %150 = vector.load %arg9[%c0_55, %c0_56] : memref<32x32xf32, #tpu.memory_space<vmem>>, vector<32x32xf32>
    %cst_57 = arith.constant dense<0.000000e+00> : vector<8x32xf32>
    %151 = tpu.matmul %103, %150, %cst_57 {dimension_numbers = #tpu.dot_dimension_numbers<[1], [0], [0], [1], [0, 0, 1, 1], [], []>} : vector<8x32xf32>, vector<32x32xf32>, vector<8x32xf32> -> vector<8x32xf32>
    %c0_58 = arith.constant 0 : index
    %c0_59 = arith.constant 0 : index
    %152 = vector.load %arg10[%c0_58, %c0_59] : memref<1x32xf32, #tpu.memory_space<vmem>>, vector<1x32xf32>
    %153 = vector.broadcast %152 : vector<1x32xf32> to vector<8x32xf32>
    %154 = arith.addf %151, %153 : vector<8x32xf32>
    %155 = vector.extract_strided_slice %154 {offsets = [0, 0], sizes = [8, 8], strides = [1, 1]} : vector<8x32xf32> to vector<8x8xf32>
    %156 = vector.extract_strided_slice %154 {offsets = [0, 8], sizes = [8, 8], strides = [1, 1]} : vector<8x32xf32> to vector<8x8xf32>
    %157 = vector.extract_strided_slice %154 {offsets = [0, 16], sizes = [8, 8], strides = [1, 1]} : vector<8x32xf32> to vector<8x8xf32>
    %158 = vector.extract_strided_slice %154 {offsets = [0, 24], sizes = [8, 8], strides = [1, 1]} : vector<8x32xf32> to vector<8x8xf32>
    %159 = vector.shape_cast %155 : vector<8x8xf32> to vector<1x8x8xf32>
    %160 = vector.shape_cast %156 : vector<8x8xf32> to vector<1x8x8xf32>
    %161 = vector.shape_cast %157 : vector<8x8xf32> to vector<1x8x8xf32>
    %162 = vector.shape_cast %158 : vector<8x8xf32> to vector<1x8x8xf32>
    %163 = tpu.concatenate %159, %160, %161, %162 in 0 : vector<1x8x8xf32>, vector<1x8x8xf32>, vector<1x8x8xf32>, vector<1x8x8xf32> -> vector<4x8x8xf32>
    "tpu.trace_start"() <{level = 10 : i32, message = "hqd,hkd->hqk"}> : () -> ()
    %cst_60 = arith.constant dense<0.000000e+00> : vector<4x8x16xf32>
    %164 = tpu.matmul %163, %139, %cst_60 {dimension_numbers = #tpu.dot_dimension_numbers<[2], [2], [1], [1], [0, 0, 0, 1, 1, 1], [0], [0]>} : vector<4x8x8xf32>, vector<4x16x8xf32>, vector<4x8x16xf32> -> vector<4x8x16xf32>
    "tpu.trace_stop"() : () -> ()
    %cst_61 = arith.constant 0.353553385 : f32
    %165 = vector.broadcast %cst_61 : f32 to vector<4x8x16xf32>
    %166 = arith.mulf %164, %165 : vector<4x8x16xf32>
    %167 = vector.extract_strided_slice %12 {offsets = [0, 0, 0, 0], sizes = [1, 1, 8, 16], strides = [1, 1, 1, 1]} : vector<2x1x8x16xf32> to vector<1x1x8x16xf32>
    %168 = vector.shape_cast %167 : vector<1x1x8x16xf32> to vector<8x16xf32>
    %169 = vector.shape_cast %168 : vector<8x16xf32> to vector<1x8x16xf32>
    %170 = vector.broadcast %169 : vector<1x8x16xf32> to vector<4x8x16xf32>
    %171 = arith.addf %166, %170 : vector<4x8x16xf32>
    %172 = vector.extract_strided_slice %12 {offsets = [1, 0, 0, 0], sizes = [1, 1, 8, 16], strides = [1, 1, 1, 1]} : vector<2x1x8x16xf32> to vector<1x1x8x16xf32>
    %173 = vector.shape_cast %172 : vector<1x1x8x16xf32> to vector<8x16xf32>
    %174 = vector.shape_cast %173 : vector<8x16xf32> to vector<1x8x16xf32>
    %175 = vector.broadcast %174 : vector<1x8x16xf32> to vector<4x8x16xf32>
    %176 = arith.addf %166, %175 : vector<4x8x16xf32>
    %177 = tpu.concatenate %171, %176 in 0 : vector<4x8x16xf32>, vector<4x8x16xf32> -> vector<8x8x16xf32>
    %cst_62 = arith.constant dense<0xFF800000> : vector<8x8xf32>
    %178 = vector.multi_reduction <maximumf>, %177, %cst_62 [2] : vector<8x8x16xf32> to vector<8x8xf32>
    %179 = vector.shape_cast %178 : vector<8x8xf32> to vector<8x8x1xf32>
    %180 = vector.broadcast %179 : vector<8x8x1xf32> to vector<8x8x16xf32>
    %181 = arith.subf %177, %180 : vector<8x8x16xf32>
    %182 = math.exp %181 : vector<8x8x16xf32>
    %cst_63 = arith.constant dense<0.000000e+00> : vector<8x8xf32>
    %183 = vector.multi_reduction <add>, %182, %cst_63 [2] : vector<8x8x16xf32> to vector<8x8xf32>
    %184 = vector.shape_cast %183 : vector<8x8xf32> to vector<8x8x1xf32>
    %185 = tpu.reciprocal %184 {approx = true} : vector<8x8x1xf32> -> vector<8x8x1xf32>
    %186 = vector.broadcast %185 : vector<8x8x1xf32> to vector<8x8x16xf32>
    %187 = arith.mulf %182, %186 : vector<8x8x16xf32>
    %188 = vector.extract_strided_slice %124 {offsets = [0, 0], sizes = [1, 1], strides = [1, 1]} : vector<1x2xf32> to vector<1x1xf32>
    %189 = vector.extract_strided_slice %187 {offsets = [0, 0, 0], sizes = [4, 8, 16], strides = [1, 1, 1]} : vector<8x8x16xf32> to vector<4x8x16xf32>
    %190 = vector.shape_cast %188 : vector<1x1xf32> to vector<1x1x1xf32>
    %191 = vector.broadcast %190 : vector<1x1x1xf32> to vector<4x8x16xf32>
    %192 = arith.mulf %191, %189 : vector<4x8x16xf32>
    %193 = vector.extract_strided_slice %124 {offsets = [0, 1], sizes = [1, 1], strides = [1, 1]} : vector<1x2xf32> to vector<1x1xf32>
    %194 = vector.extract_strided_slice %187 {offsets = [4, 0, 0], sizes = [4, 8, 16], strides = [1, 1, 1]} : vector<8x8x16xf32> to vector<4x8x16xf32>
    %195 = vector.shape_cast %193 : vector<1x1xf32> to vector<1x1x1xf32>
    %196 = vector.broadcast %195 : vector<1x1x1xf32> to vector<4x8x16xf32>
    %197 = arith.mulf %196, %194 : vector<4x8x16xf32>
    %198 = arith.addf %192, %197 : vector<4x8x16xf32>
    "tpu.trace_start"() <{level = 10 : i32, message = "hqk,hkd->hqd"}> : () -> ()
    %cst_64 = arith.constant dense<0.000000e+00> : vector<4x8x8xf32>
    %199 = tpu.matmul %198, %149, %cst_64 {dimension_numbers = #tpu.dot_dimension_numbers<[2], [1], [1], [2], [0, 0, 0, 1, 1, 2], [0], [0]>} : vector<4x8x16xf32>, vector<4x16x8xf32>, vector<4x8x8xf32> -> vector<4x8x8xf32>
    "tpu.trace_stop"() : () -> ()
    %200 = vector.extract_strided_slice %199 {offsets = [0, 0, 0], sizes = [1, 8, 8], strides = [1, 1, 1]} : vector<4x8x8xf32> to vector<1x8x8xf32>
    %201 = vector.shape_cast %200 : vector<1x8x8xf32> to vector<8x8xf32>
    %202 = vector.extract_strided_slice %199 {offsets = [1, 0, 0], sizes = [1, 8, 8], strides = [1, 1, 1]} : vector<4x8x8xf32> to vector<1x8x8xf32>
    %203 = vector.shape_cast %202 : vector<1x8x8xf32> to vector<8x8xf32>
    %204 = vector.extract_strided_slice %199 {offsets = [2, 0, 0], sizes = [1, 8, 8], strides = [1, 1, 1]} : vector<4x8x8xf32> to vector<1x8x8xf32>
    %205 = vector.shape_cast %204 : vector<1x8x8xf32> to vector<8x8xf32>
    %206 = vector.extract_strided_slice %199 {offsets = [3, 0, 0], sizes = [1, 8, 8], strides = [1, 1, 1]} : vector<4x8x8xf32> to vector<1x8x8xf32>
    %207 = vector.shape_cast %206 : vector<1x8x8xf32> to vector<8x8xf32>
    %208 = tpu.concatenate %201, %203, %205, %207 in 1 : vector<8x8xf32>, vector<8x8xf32>, vector<8x8xf32>, vector<8x8xf32> -> vector<8x32xf32>
    %c0_65 = arith.constant 0 : index
    %c0_66 = arith.constant 0 : index
    %209 = vector.load %arg13[%c0_65, %c0_66] : memref<32x32xf32, #tpu.memory_space<vmem>>, vector<32x32xf32>
    %cst_67 = arith.constant dense<0.000000e+00> : vector<8x32xf32>
    %210 = tpu.matmul %208, %209, %cst_67 {dimension_numbers = #tpu.dot_dimension_numbers<[1], [0], [0], [1], [0, 0, 1, 1], [], []>} : vector<8x32xf32>, vector<32x32xf32>, vector<8x32xf32> -> vector<8x32xf32>
    %c0_68 = arith.constant 0 : index
    %c0_69 = arith.constant 0 : index
    %211 = vector.load %arg14[%c0_68, %c0_69] : memref<1x32xf32, #tpu.memory_space<vmem>>, vector<1x32xf32>
    %212 = vector.broadcast %211 : vector<1x32xf32> to vector<8x32xf32>
    %213 = arith.addf %210, %212 : vector<8x32xf32>
    %214 = arith.addf %103, %213 : vector<8x32xf32>
    %215 = vector.extract_strided_slice %4 {offsets = [1, 0], sizes = [1, 32], strides = [1, 1]} : vector<3x32xf32> to vector<1x32xf32>
    %216 = vector.extract_strided_slice %5 {offsets = [1, 0], sizes = [1, 32], strides = [1, 1]} : vector<3x32xf32> to vector<1x32xf32>
    %cst_70 = arith.constant dense<0.000000e+00> : vector<8xf32>
    %217 = vector.multi_reduction <add>, %214, %cst_70 [1] : vector<8x32xf32> to vector<8xf32>
    %218 = vector.shape_cast %217 : vector<8xf32> to vector<8x1xf32>
    %cst_71 = arith.constant 3.200000e+01 : f32
    %219 = vector.broadcast %cst_71 : f32 to vector<8x1xf32>
    %220 = arith.divf %218, %219 : vector<8x1xf32>
    %221 = vector.broadcast %220 : vector<8x1xf32> to vector<8x32xf32>
    %222 = arith.subf %214, %221 : vector<8x32xf32>
    %223 = arith.mulf %222, %222 : vector<8x32xf32>
    %cst_72 = arith.constant dense<0.000000e+00> : vector<8xf32>
    %224 = vector.multi_reduction <add>, %223, %cst_72 [1] : vector<8x32xf32> to vector<8xf32>
    %225 = vector.shape_cast %224 : vector<8xf32> to vector<8x1xf32>
    %cst_73 = arith.constant 3.200000e+01 : f32
    %226 = vector.broadcast %cst_73 : f32 to vector<8x1xf32>
    %227 = arith.divf %225, %226 : vector<8x1xf32>
    %228 = vector.broadcast %220 : vector<8x1xf32> to vector<8x32xf32>
    %229 = arith.subf %214, %228 : vector<8x32xf32>
    %cst_74 = arith.constant 9.99999997E-7 : f32
    %230 = vector.broadcast %cst_74 : f32 to vector<8x1xf32>
    %231 = arith.addf %227, %230 : vector<8x1xf32>
    %232 = math.rsqrt %231 : vector<8x1xf32>
    %233 = vector.broadcast %232 : vector<8x1xf32> to vector<8x32xf32>
    %234 = arith.mulf %229, %233 : vector<8x32xf32>
    %235 = vector.broadcast %215 : vector<1x32xf32> to vector<8x32xf32>
    %236 = arith.mulf %234, %235 : vector<8x32xf32>
    %237 = vector.broadcast %216 : vector<1x32xf32> to vector<8x32xf32>
    %238 = arith.addf %236, %237 : vector<8x32xf32>
    %c0_75 = arith.constant 0 : index
    %c0_76 = arith.constant 0 : index
    %239 = vector.load %arg18[%c0_75, %c0_76] : memref<32x64xf32, #tpu.memory_space<vmem>>, vector<32x64xf32>
    %cst_77 = arith.constant dense<0.000000e+00> : vector<8x64xf32>
    %240 = tpu.matmul %238, %239, %cst_77 {dimension_numbers = #tpu.dot_dimension_numbers<[1], [0], [0], [1], [0, 0, 1, 1], [], []>} : vector<8x32xf32>, vector<32x64xf32>, vector<8x64xf32> -> vector<8x64xf32>
    %c0_78 = arith.constant 0 : index
    %c0_79 = arith.constant 0 : index
    %241 = vector.load %arg19[%c0_78, %c0_79] : memref<1x64xf32, #tpu.memory_space<vmem>>, vector<1x64xf32>
    %242 = vector.broadcast %241 : vector<1x64xf32> to vector<8x64xf32>
    %243 = arith.addf %240, %242 : vector<8x64xf32>
    %cst_80 = arith.constant 0.000000e+00 : f32
    %244 = vector.broadcast %cst_80 : f32 to vector<8x64xf32>
    %245 = arith.maximumf %243, %244 : vector<8x64xf32>
    %c0_81 = arith.constant 0 : index
    %c0_82 = arith.constant 0 : index
    %246 = vector.load %arg20[%c0_81, %c0_82] : memref<64x32xf32, #tpu.memory_space<vmem>>, vector<64x32xf32>
    %cst_83 = arith.constant dense<0.000000e+00> : vector<8x32xf32>
    %247 = tpu.matmul %245, %246, %cst_83 {dimension_numbers = #tpu.dot_dimension_numbers<[1], [0], [0], [1], [0, 0, 1, 1], [], []>} : vector<8x64xf32>, vector<64x32xf32>, vector<8x32xf32> -> vector<8x32xf32>
    %c0_84 = arith.constant 0 : index
    %c0_85 = arith.constant 0 : index
    %248 = vector.load %arg21[%c0_84, %c0_85] : memref<1x32xf32, #tpu.memory_space<vmem>>, vector<1x32xf32>
    %249 = vector.broadcast %248 : vector<1x32xf32> to vector<8x32xf32>
    %250 = arith.addf %247, %249 : vector<8x32xf32>
    %251 = arith.addf %238, %250 : vector<8x32xf32>
    %252 = vector.extract_strided_slice %4 {offsets = [2, 0], sizes = [1, 32], strides = [1, 1]} : vector<3x32xf32> to vector<1x32xf32>
    %253 = vector.extract_strided_slice %5 {offsets = [2, 0], sizes = [1, 32], strides = [1, 1]} : vector<3x32xf32> to vector<1x32xf32>
    %cst_86 = arith.constant dense<0.000000e+00> : vector<8xf32>
    %254 = vector.multi_reduction <add>, %251, %cst_86 [1] : vector<8x32xf32> to vector<8xf32>
    %255 = vector.shape_cast %254 : vector<8xf32> to vector<8x1xf32>
    %cst_87 = arith.constant 3.200000e+01 : f32
    %256 = vector.broadcast %cst_87 : f32 to vector<8x1xf32>
    %257 = arith.divf %255, %256 : vector<8x1xf32>
    %258 = vector.broadcast %257 : vector<8x1xf32> to vector<8x32xf32>
    %259 = arith.subf %251, %258 : vector<8x32xf32>
    %260 = arith.mulf %259, %259 : vector<8x32xf32>
    %cst_88 = arith.constant dense<0.000000e+00> : vector<8xf32>
    %261 = vector.multi_reduction <add>, %260, %cst_88 [1] : vector<8x32xf32> to vector<8xf32>
    %262 = vector.shape_cast %261 : vector<8xf32> to vector<8x1xf32>
    %cst_89 = arith.constant 3.200000e+01 : f32
    %263 = vector.broadcast %cst_89 : f32 to vector<8x1xf32>
    %264 = arith.divf %262, %263 : vector<8x1xf32>
    %265 = vector.broadcast %257 : vector<8x1xf32> to vector<8x32xf32>
    %266 = arith.subf %251, %265 : vector<8x32xf32>
    %cst_90 = arith.constant 9.99999997E-7 : f32
    %267 = vector.broadcast %cst_90 : f32 to vector<8x1xf32>
    %268 = arith.addf %264, %267 : vector<8x1xf32>
    %269 = math.rsqrt %268 : vector<8x1xf32>
    %270 = vector.broadcast %269 : vector<8x1xf32> to vector<8x32xf32>
    %271 = arith.mulf %266, %270 : vector<8x32xf32>
    %272 = vector.broadcast %252 : vector<1x32xf32> to vector<8x32xf32>
    %273 = arith.mulf %271, %272 : vector<8x32xf32>
    %274 = vector.broadcast %253 : vector<1x32xf32> to vector<8x32xf32>
    %275 = arith.addf %273, %274 : vector<8x32xf32>
    %c0_91 = arith.constant 0 : index
    %c0_92 = arith.constant 0 : index
    %c0_93 = arith.constant 0 : index
    %276 = vector.load %arg24[%c0_91, %c0_92, %c0_93] : memref<1x8x32xf32, #tpu.memory_space<vmem>>, vector<1x8x32xf32>
    %277 = vector.shape_cast %276 : vector<1x8x32xf32> to vector<8x32xf32>
    %278 = vector.shape_cast %275 : vector<8x32xf32> to vector<1x8x32xf32>
    tpu.vector_store %arg24[%c0_91, %c0_92, %c0_93], %278 {strides = array<i32>} : memref<1x8x32xf32, #tpu.memory_space<vmem>>, vector<1x8x32xf32>,
    return
  }
  func.func @transform_0(%arg0: i32) -> (i32, i32, i32) {
    %c0_i32 = arith.constant 0 : i32
    %c0_i32_0 = arith.constant 0 : i32
    %c0_i32_1 = arith.constant 0 : i32
    return %arg0, %c0_i32, %c0_i32_0 : i32, i32, i32
  }
  func.func @transform_1(%arg0: i32) -> (i32, i32, i32) {
    %c0_i32 = arith.constant 0 : i32
    %c0_i32_0 = arith.constant 0 : i32
    %c0_i32_1 = arith.constant 0 : i32
    return %arg0, %c0_i32, %c0_i32_0 : i32, i32, i32
  }
  func.func @transform_2(%arg0: i32) -> (i32, i32, i32) {
    %c0_i32 = arith.constant 0 : i32
    %c0_i32_0 = arith.constant 0 : i32
    %c0_i32_1 = arith.constant 0 : i32
    return %arg0, %c0_i32, %c0_i32_0 : i32, i32, i32
  }
  func.func @transform_3(%arg0: i32) -> (i32, i32, i32, i32) {
    %c0_i32 = arith.constant 0 : i32
    %c0_i32_0 = arith.constant 0 : i32
    %c0_i32_1 = arith.constant 0 : i32
    %c0_i32_2 = arith.constant 0 : i32
    return %c0_i32, %arg0, %c0_i32_0, %c0_i32_1 : i32, i32, i32, i32
  }
  func.func @transform_4(%arg0: i32) -> (i32, i32) {
    %c0_i32 = arith.constant 0 : i32
    %c0_i32_0 = arith.constant 0 : i32
    %c0_i32_1 = arith.constant 0 : i32
    return %c0_i32, %c0_i32_0 : i32, i32
  }
  func.func @transform_5(%arg0: i32) -> (i32, i32) {
    %c0_i32 = arith.constant 0 : i32
    %c0_i32_0 = arith.constant 0 : i32
    %c0_i32_1 = arith.constant 0 : i32
    return %c0_i32, %c0_i32_0 : i32, i32
  }
  func.func @transform_6(%arg0: i32) -> (i32, i32) {
    %c0_i32 = arith.constant 0 : i32
    %c0_i32_0 = arith.constant 0 : i32
    %c0_i32_1 = arith.constant 0 : i32
    return %c0_i32, %c0_i32_0 : i32, i32
  }
  func.func @transform_7(%arg0: i32) -> (i32, i32) {
    %c0_i32 = arith.constant 0 : i32
    %c0_i32_0 = arith.constant 0 : i32
    %c0_i32_1 = arith.constant 0 : i32
    return %c0_i32, %c0_i32_0 : i32, i32
  }
  func.func @transform_8(%arg0: i32) -> (i32, i32) {
    %c0_i32 = arith.constant 0 : i32
    %c0_i32_0 = arith.constant 0 : i32
    %c0_i32_1 = arith.constant 0 : i32
    return %c0_i32, %c0_i32_0 : i32, i32
  }
  func.func @transform_9(%arg0: i32) -> (i32, i32) {
    %c0_i32 = arith.constant 0 : i32
    %c0_i32_0 = arith.constant 0 : i32
    %c0_i32_1 = arith.constant 0 : i32
    return %c0_i32, %c0_i32_0 : i32, i32
  }
  func.func @transform_10(%arg0: i32) -> (i32, i32) {
    %c0_i32 = arith.constant 0 : i32
    %c0_i32_0 = arith.constant 0 : i32
    %c0_i32_1 = arith.constant 0 : i32
    return %c0_i32, %c0_i32_0 : i32, i32
  }
  func.func @transform_11(%arg0: i32) -> (i32, i32) {
    %c0_i32 = arith.constant 0 : i32
    %c0_i32_0 = arith.constant 0 : i32
    %c0_i32_1 = arith.constant 0 : i32
    return %c0_i32, %c0_i32_0 : i32, i32
  }
  func.func @transform_12(%arg0: i32) -> (i32, i32) {
    %c0_i32 = arith.constant 0 : i32
    %c0_i32_0 = arith.constant 0 : i32
    %c0_i32_1 = arith.constant 0 : i32
    return %c0_i32, %c0_i32_0 : i32, i32
  }
  func.func @transform_13(%arg0: i32) -> (i32, i32) {
    %c0_i32 = arith.constant 0 : i32
    %c0_i32_0 = arith.constant 0 : i32
    %c0_i32_1 = arith.constant 0 : i32
    return %c0_i32, %c0_i32_0 : i32, i32
  }
  func.func @transform_14(%arg0: i32) -> (i32, i32) {
    %c0_i32 = arith.constant 0 : i32
    %c0_i32_0 = arith.constant 0 : i32
    %c0_i32_1 = arith.constant 0 : i32
    return %c0_i32, %c0_i32_0 : i32, i32
  }
  func.func @transform_15(%arg0: i32) -> (i32, i32) {
    %c0_i32 = arith.constant 0 : i32
    %c0_i32_0 = arith.constant 0 : i32
    %c0_i32_1 = arith.constant 0 : i32
    return %c0_i32, %c0_i32_0 : i32, i32
  }
  func.func @transform_16(%arg0: i32) -> (i32, i32) {
    %c0_i32 = arith.constant 0 : i32
    %c0_i32_0 = arith.constant 0 : i32
    %c0_i32_1 = arith.constant 0 : i32
    return %c0_i32, %c0_i32_0 : i32, i32
  }
  func.func @transform_17(%arg0: i32) -> (i32, i32) {
    %c0_i32 = arith.constant 0 : i32
    %c0_i32_0 = arith.constant 0 : i32
    %c0_i32_1 = arith.constant 0 : i32
    return %c0_i32, %c0_i32_0 : i32, i32
  }
  func.func @transform_18(%arg0: i32) -> (i32, i32) {
    %c0_i32 = arith.constant 0 : i32
    %c0_i32_0 = arith.constant 0 : i32
    %c0_i32_1 = arith.constant 0 : i32
    return %c0_i32, %c0_i32_0 : i32, i32
  }
  func.func @transform_19(%arg0: i32) -> (i32, i32) {
    %c0_i32 = arith.constant 0 : i32
    %c0_i32_0 = arith.constant 0 : i32
    %c0_i32_1 = arith.constant 0 : i32
    return %c0_i32, %c0_i32_0 : i32, i32
  }
  func.func @transform_20(%arg0: i32) -> (i32, i32) {
    %c0_i32 = arith.constant 0 : i32
    %c0_i32_0 = arith.constant 0 : i32
    %c0_i32_1 = arith.constant 0 : i32
    return %c0_i32, %c0_i32_0 : i32, i32
  }
  func.func @transform_21(%arg0: i32) -> (i32, i32) {
    %c0_i32 = arith.constant 0 : i32
    %c0_i32_0 = arith.constant 0 : i32
    %c0_i32_1 = arith.constant 0 : i32
    return %c0_i32, %c0_i32_0 : i32, i32
  }
  func.func @transform_22(%arg0: i32) -> (i32, i32) {
    %c0_i32 = arith.constant 0 : i32
    %c0_i32_0 = arith.constant 0 : i32
    %c0_i32_1 = arith.constant 0 : i32
    return %c0_i32, %c0_i32_0 : i32, i32
  }
  func.func @transform_23(%arg0: i32) -> (i32, i32, i32) {
    %c0_i32 = arith.constant 0 : i32
    %c0_i32_0 = arith.constant 0 : i32
    %c0_i32_1 = arith.constant 0 : i32
    return %arg0, %c0_i32, %c0_i32_0 : i32, i32, i32
  }
}

</mosaic_0001>

<llo_original>
// kernel: sa_multitrar_forward.1
$region0: #{sa_multitrar_forward.1}
  #allocation0 [shape = 'u32[]', space=smem, size = 0x4, offset = 0x4, fixed_abs, tag = 'smem constant byte address 0x4 - core index']
  #allocation1 [shape = 'u32[144,128]{1,0:T(1,128)}', space=vmem, size = 0x12000, scoped, tag = 'internal scratch']
  %s0 = inlined_call_operand.hbm [shape: f32[2,8,32], index: 0, kind: input, shape index: {}]
  %s1 = inlined_call_operand.vmem [shape: f32[2,16,32], index: 1, kind: input, shape index: {}]
  %s2 = inlined_call_operand.vmem [shape: f32[2,1,8], index: 2, kind: input, shape index: {}]
  %s3 = inlined_call_operand.vmem [shape: f32[2,2,8,16], index: 3, kind: input, shape index: {}]
  %s4 = inlined_call_operand.vmem [shape: f32[32,96], index: 4, kind: input, shape index: {}]
  %s5 = inlined_call_operand.vmem [shape: f32[1,96], index: 5, kind: input, shape index: {}]
  %s6 = inlined_call_operand.vmem [shape: f32[32,32], index: 6, kind: input, shape index: {}]
  %s7 = inlined_call_operand.vmem [shape: f32[1,32], index: 7, kind: input, shape index: {}]
  %s8 = inlined_call_operand.vmem [shape: f32[32,32], index: 8, kind: input, shape index: {}]
  %s9 = inlined_call_operand.vmem [shape: f32[1,32], index: 9, kind: input, shape index: {}]
  %s10 = inlined_call_operand.vmem [shape: f32[32,64], index: 10, kind: input, shape index: {}]
  %s11 = inlined_call_operand.vmem [shape: f32[1,64], index: 11, kind: input, shape index: {}]
  %s12 = inlined_call_operand.vmem [shape: f32[32,32], index: 12, kind: input, shape index: {}]
  %s13 = inlined_call_operand.vmem [shape: f32[1,32], index: 13, kind: input, shape index: {}]
  %s14 = inlined_call_operand.vmem [shape: f32[32,16], index: 14, kind: input, shape index: {}]
  %s15 = inlined_call_operand.vmem [shape: f32[16,2], index: 15, kind: input, shape index: {}]
  %s16 = inlined_call_operand.vmem [shape: f32[1,2], index: 16, kind: input, shape index: {}]
  %s17 = inlined_call_operand.vmem [shape: f32[32,64], index: 17, kind: input, shape index: {}]
  %s18 = inlined_call_operand.vmem [shape: f32[1,64], index: 18, kind: input, shape index: {}]
  %s19 = inlined_call_operand.vmem [shape: f32[64,32], index: 19, kind: input, shape index: {}]
  %s20 = inlined_call_operand.vmem [shape: f32[1,32], index: 20, kind: input, shape index: {}]
  %s21 = inlined_call_operand.vmem [shape: f32[3,32], index: 21, kind: input, shape index: {}]
  %s22 = inlined_call_operand.vmem [shape: f32[3,32], index: 22, kind: input, shape index: {}]
  %s23 = inlined_call_operand.hbm [shape: f32[2,8,32], index: 23, kind: output, shape index: {}]
  %s24 = sld [smem:[#allocation0]]
  $region167: #{sa_multitrar_forward.1} parent=0
    _
  %s26 = ssub.s32 1, %s24
  %s27 = scalar_select 0, %s26, %s24
  $region1: #{sa_multitrar_forward.1} parent=0
    #allocation2 [shape = 'u8[8192]{0}', space=vmem, size = 0x2000, scoped, tag = 'input window, operand 0']
    #allocation3 [shape = 's32[2]{0}', space=sflag, size = 0x8, scoped, tag = 'scoped memory for sa_multitrar_forward.1']
    #allocation4 [shape = 's32[2]{0}', space=sflag, size = 0x8, scoped, tag = 'scoped memory for sa_multitrar_forward.1']
    #allocation5 [shape = 'u8[16384]{0}', space=vmem, size = 0x4000, scoped, tag = 'input window, operand 3']
    #allocation6 [shape = 'u8[8192]{0}', space=vmem, size = 0x2000, scoped, tag = 'output window, operand 0']
    %28 = vsyncpa [#allocation3], 0
    %s29 = scalar_lea.sflag [#allocation3], 1
    %30 = vsyncpa %s29, 0
    %31 = vsyncpa [#allocation4], 0
    %s32 = scalar_lea.sflag [#allocation4], 1
    %33 = vsyncpa %s32, 0
    loop: start=0, step=1, limit=4
    $region2: #{sa_multitrar_forward.1} parent=1 // loop_pre_header
      _
    $region3: #{sa_multitrar_forward.1} parent=1 // loop_header
      %s35 = sphi 0, %s39
      %p36 = scmp.ge.s32.totalorder %s35, 4
      %s45 = sphi 0, %s47
      %s48 = sphi 0, %s45
      %s49 = sphi 0, %s48
      %s65 = sphi 0, %s49
      %s71 = sphi 0, %s73
      %s74 = sphi 0, %s71
      %s75 = sphi 0, %s74
      %s91 = sphi 0, %s75
      %s97 = sphi 0, %s99
      %s100 = sphi 0, %s97
      %s101 = sphi 0, %s100
      %s117 = sphi 0, %s101
      %s123 = sphi 0, %s125
      %s126 = sphi 0, %s123
      %s127 = sphi 0, %s126
      %s143 = sphi 0, %s127
      %s147 = sphi 0, %s147
      %s149 = sphi 0, %s147
      %s150 = sphi 0, %s149
      %s164 = sphi 0, %s150
      %s168 = sphi 0, %s168
      %s170 = sphi 0, %s168
      %s171 = sphi 0, %s170
      %s185 = sphi 0, %s171
      %s189 = sphi 0, %s189
      %s191 = sphi 0, %s189
      %s192 = sphi 0, %s191
      %s206 = sphi 0, %s192
      %s210 = sphi 0, %s210
      %s212 = sphi 0, %s210
      %s213 = sphi 0, %s212
      %s227 = sphi 0, %s213
      %s231 = sphi 0, %s231
      %s233 = sphi 0, %s231
      %s234 = sphi 0, %s233
      %s248 = sphi 0, %s234
      %s252 = sphi 0, %s252
      %s254 = sphi 0, %s252
      %s255 = sphi 0, %s254
      %s269 = sphi 0, %s255
      %s273 = sphi 0, %s273
      %s275 = sphi 0, %s273
      %s276 = sphi 0, %s275
      %s290 = sphi 0, %s276
      %s294 = sphi 0, %s294
      %s296 = sphi 0, %s294
      %s297 = sphi 0, %s296
      %s311 = sphi 0, %s297
      %s315 = sphi 0, %s315
      %s317 = sphi 0, %s315
      %s318 = sphi 0, %s317
      %s332 = sphi 0, %s318
      %s336 = sphi 0, %s336
      %s338 = sphi 0, %s336
      %s339 = sphi 0, %s338
      %s353 = sphi 0, %s339
      %s357 = sphi 0, %s357
      %s359 = sphi 0, %s357
      %s360 = sphi 0, %s359
      %s374 = sphi 0, %s360
      %s378 = sphi 0, %s378
      %s380 = sphi 0, %s378
      %s381 = sphi 0, %s380
      %s395 = sphi 0, %s381
      %s399 = sphi 0, %s399
      %s401 = sphi 0, %s399
      %s402 = sphi 0, %s401
      %s416 = sphi 0, %s402
      %s420 = sphi 0, %s420
      %s422 = sphi 0, %s420
      %s423 = sphi 0, %s422
      %s437 = sphi 0, %s423
      %s441 = sphi 0, %s441
      %s443 = sphi 0, %s441
      %s444 = sphi 0, %s443
      %s458 = sphi 0, %s444
      %s462 = sphi 0, %s462
      %s464 = sphi 0, %s462
      %s465 = sphi 0, %s464
      %s479 = sphi 0, %s465
      %s483 = sphi 0, %s483
      %s485 = sphi 0, %s483
      %s486 = sphi 0, %s485
      %s500 = sphi 0, %s486
      %s504 = sphi 0, %s504
      %s506 = sphi 0, %s504
      %s507 = sphi 0, %s506
      %s521 = sphi 0, %s507
      %s525 = sphi 0, %s525
      %s527 = sphi 0, %s525
      %s528 = sphi 0, %s527
      %s542 = sphi 0, %s528
      %s548 = sphi 0, %s550
      %s551 = sphi 0, %s548
      %s552 = sphi 0, %s551
      %s568 = sphi 0, %s552
    $region4: #{sa_multitrar_forward.1} parent=1 // loop_header_branch
      %38 = sbr.rel (%p36) target = $region8
    $region5: #{sa_multitrar_forward.1} parent=1 // loop_body
      %s40 = ssub.s32 %s35, 1
      %s41 = ssub.s32 %s35, 2
      %s42 = sadd.s32 %s35, 1
      %s43 = ssub.s32 %s35, %s42
      %p44 = scmp.eq.s32.totalorder %s43, 0
      %s46 = sadd.s32 %s45, 1
      %s47 = scalar_select %p44, %s45, %s46
      %p50 = pneg %p44
      %p51 = scmp.eq.s32.totalorder %s35, 1
      %p52 = por %p50, %p51
      %p53 = scmp.ne.s32.totalorder %s45, %s48
      %p54 = scmp.eq.s32.totalorder %s35, 0
      %p55 = por %p53, %p54
      %p56 = scmp.ne.s32.totalorder %s45, %s48
      %p57 = scmp.eq.s32.totalorder %s40, 1
      %p58 = por %p56, %p57
      %p59 = scmp.ne.s32.totalorder %s48, %s49
      %p60 = scmp.eq.s32.totalorder %s40, 0
      %p61 = por %p59, %p60
      %p62 = scmp.ne.s32.totalorder %s48, %s49
      %p63 = scmp.eq.s32.totalorder %s41, 1
      %p64 = por %p62, %p63
      %p66 = scmp.ne.s32.totalorder %s49, %s65
      %p67 = scmp.eq.s32.totalorder %s41, 0
      %p68 = por %p66, %p67
      %s69 = ssub.s32 %s35, %s42
      %p70 = scmp.eq.s32.totalorder %s69, 0
      %s72 = sadd.s32 %s71, 1
      %s73 = scalar_select %p70, %s71, %s72
      %p76 = pneg %p70
      %p77 = scmp.eq.s32.totalorder %s35, 1
      %p78 = por %p76, %p77
      %p79 = scmp.ne.s32.totalorder %s71, %s74
      %p80 = scmp.eq.s32.totalorder %s35, 0
      %p81 = por %p79, %p80
      %p82 = scmp.ne.s32.totalorder %s71, %s74
      %p83 = scmp.eq.s32.totalorder %s40, 1
      %p84 = por %p82, %p83
      %p85 = scmp.ne.s32.totalorder %s74, %s75
      %p86 = scmp.eq.s32.totalorder %s40, 0
      %p87 = por %p85, %p86
      %p88 = scmp.ne.s32.totalorder %s74, %s75
      %p89 = scmp.eq.s32.totalorder %s41, 1
      %p90 = por %p88, %p89
      %p92 = scmp.ne.s32.totalorder %s75, %s91
      %p93 = scmp.eq.s32.totalorder %s41, 0
      %p94 = por %p92, %p93
      %s95 = ssub.s32 %s35, %s42
      %p96 = scmp.eq.s32.totalorder %s95, 0
      %s98 = sadd.s32 %s97, 1
      %s99 = scalar_select %p96, %s97, %s98
      %p102 = pneg %p96
      %p103 = scmp.eq.s32.totalorder %s35, 1
      %p104 = por %p102, %p103
      %p105 = scmp.ne.s32.totalorder %s97, %s100
      %p106 = scmp.eq.s32.totalorder %s35, 0
      %p107 = por %p105, %p106
      %p108 = scmp.ne.s32.totalorder %s97, %s100
      %p109 = scmp.eq.s32.totalorder %s40, 1
      %p110 = por %p108, %p109
      %p111 = scmp.ne.s32.totalorder %s100, %s101
      %p112 = scmp.eq.s32.totalorder %s40, 0
      %p113 = por %p111, %p112
      %p114 = scmp.ne.s32.totalorder %s100, %s101
      %p115 = scmp.eq.s32.totalorder %s41, 1
      %p116 = por %p114, %p115
      %p118 = scmp.ne.s32.totalorder %s101, %s117
      %p119 = scmp.eq.s32.totalorder %s41, 0
      %p120 = por %p118, %p119
      %s121 = ssub.s32 %s35, %s42
      %p122 = scmp.eq.s32.totalorder %s121, 0
      %s124 = sadd.s32 %s123, 1
      %s125 = scalar_select %p122, %s123, %s124
      %p128 = pneg %p122
      %p129 = scmp.eq.s32.totalorder %s35, 1
      %p130 = por %p128, %p129
      %p131 = scmp.ne.s32.totalorder %s123, %s126
      %p132 = scmp.eq.s32.totalorder %s35, 0
      %p133 = por %p131, %p132
      %p134 = scmp.ne.s32.totalorder %s123, %s126
      %p135 = scmp.eq.s32.totalorder %s40, 1
      %p136 = por %p134, %p135
      %p137 = scmp.ne.s32.totalorder %s126, %s127
      %p138 = scmp.eq.s32.totalorder %s40, 0
      %p139 = por %p137, %p138
      %p140 = scmp.ne.s32.totalorder %s126, %s127
      %p141 = scmp.eq.s32.totalorder %s41, 1
      %p142 = por %p140, %p141
      %p144 = scmp.ne.s32.totalorder %s127, %s143
      %p145 = scmp.eq.s32.totalorder %s41, 0
      %p146 = por %p144, %p145
      %s148 = sadd.s32 %s147, 1
      %p151 = scmp.eq.s32.totalorder %s35, 1
      %p152 = scmp.ne.s32.totalorder %s147, %s149
      %p153 = scmp.eq.s32.totalorder %s35, 0
      %p154 = por %p152, %p153
      %p155 = scmp.ne.s32.totalorder %s147, %s149
      %p156 = scmp.eq.s32.totalorder %s40, 1
      %p157 = por %p155, %p156
      %p158 = scmp.ne.s32.totalorder %s149, %s150
      %p159 = scmp.eq.s32.totalorder %s40, 0
      %p160 = por %p158, %p159
      %p161 = scmp.ne.s32.totalorder %s149, %s150
      %p162 = scmp.eq.s32.totalorder %s41, 1
      %p163 = por %p161, %p162
      %p165 = scmp.ne.s32.totalorder %s150, %s164
      %p166 = scmp.eq.s32.totalorder %s41, 0
      %p167 = por %p165, %p166
      %s169 = sadd.s32 %s168, 1
      %p172 = scmp.eq.s32.totalorder %s35, 1
      %p173 = scmp.ne.s32.totalorder %s168, %s170
      %p174 = scmp.eq.s32.totalorder %s35, 0
      %p175 = por %p173, %p174
      %p176 = scmp.ne.s32.totalorder %s168, %s170
      %p177 = scmp.eq.s32.totalorder %s40, 1
      %p178 = por %p176, %p177
      %p179 = scmp.ne.s32.totalorder %s170, %s171
      %p180 = scmp.eq.s32.totalorder %s40, 0
      %p181 = por %p179, %p180
      %p182 = scmp.ne.s32.totalorder %s170, %s171
      %p183 = scmp.eq.s32.totalorder %s41, 1
      %p184 = por %p182, %p183
      %p186 = scmp.ne.s32.totalorder %s171, %s185
      %p187 = scmp.eq.s32.totalorder %s41, 0
      %p188 = por %p186, %p187
      %s190 = sadd.s32 %s189, 1
      %p193 = scmp.eq.s32.totalorder %s35, 1
      %p194 = scmp.ne.s32.totalorder %s189, %s191
      %p195 = scmp.eq.s32.totalorder %s35, 0
      %p196 = por %p194, %p195
      %p197 = scmp.ne.s32.totalorder %s189, %s191
      %p198 = scmp.eq.s32.totalorder %s40, 1
      %p199 = por %p197, %p198
      %p200 = scmp.ne.s32.totalorder %s191, %s192
      %p201 = scmp.eq.s32.totalorder %s40, 0
      %p202 = por %p200, %p201
      %p203 = scmp.ne.s32.totalorder %s191, %s192
      %p204 = scmp.eq.s32.totalorder %s41, 1
      %p205 = por %p203, %p204
      %p207 = scmp.ne.s32.totalorder %s192, %s206
      %p208 = scmp.eq.s32.totalorder %s41, 0
      %p209 = por %p207, %p208
      %s211 = sadd.s32 %s210, 1
      %p214 = scmp.eq.s32.totalorder %s35, 1
      %p215 = scmp.ne.s32.totalorder %s210, %s212
      %p216 = scmp.eq.s32.totalorder %s35, 0
      %p217 = por %p215, %p216
      %p218 = scmp.ne.s32.totalorder %s210, %s212
      %p219 = scmp.eq.s32.totalorder %s40, 1
      %p220 = por %p218, %p219
      %p221 = scmp.ne.s32.totalorder %s212, %s213
      %p222 = scmp.eq.s32.totalorder %s40, 0
      %p223 = por %p221, %p222
      %p224 = scmp.ne.s32.totalorder %s212, %s213
      %p225 = scmp.eq.s32.totalorder %s41, 1
      %p226 = por %p224, %p225
      %p228 = scmp.ne.s32.totalorder %s213, %s227
      %p229 = scmp.eq.s32.totalorder %s41, 0
      %p230 = por %p228, %p229
      %s232 = sadd.s32 %s231, 1
      %p235 = scmp.eq.s32.totalorder %s35, 1
      %p236 = scmp.ne.s32.totalorder %s231, %s233
      %p237 = scmp.eq.s32.totalorder %s35, 0
      %p238 = por %p236, %p237
      %p239 = scmp.ne.s32.totalorder %s231, %s233
      %p240 = scmp.eq.s32.totalorder %s40, 1
      %p241 = por %p239, %p240
      %p242 = scmp.ne.s32.totalorder %s233, %s234
      %p243 = scmp.eq.s32.totalorder %s40, 0
      %p244 = por %p242, %p243
      %p245 = scmp.ne.s32.totalorder %s233, %s234
      %p246 = scmp.eq.s32.totalorder %s41, 1
      %p247 = por %p245, %p246
      %p249 = scmp.ne.s32.totalorder %s234, %s248
      %p250 = scmp.eq.s32.totalorder %s41, 0
      %p251 = por %p249, %p250
      %s253 = sadd.s32 %s252, 1
      %p256 = scmp.eq.s32.totalorder %s35, 1
      %p257 = scmp.ne.s32.totalorder %s252, %s254
      %p258 = scmp.eq.s32.totalorder %s35, 0
      %p259 = por %p257, %p258
      %p260 = scmp.ne.s32.totalorder %s252, %s254
      %p261 = scmp.eq.s32.totalorder %s40, 1
      %p262 = por %p260, %p261
      %p263 = scmp.ne.s32.totalorder %s254, %s255
      %p264 = scmp.eq.s32.totalorder %s40, 0
      %p265 = por %p263, %p264
      %p266 = scmp.ne.s32.totalorder %s254, %s255
      %p267 = scmp.eq.s32.totalorder %s41, 1
      %p268 = por %p266, %p267
      %p270 = scmp.ne.s32.totalorder %s255, %s269
      %p271 = scmp.eq.s32.totalorder %s41, 0
      %p272 = por %p270, %p271
      %s274 = sadd.s32 %s273, 1
      %p277 = scmp.eq.s32.totalorder %s35, 1
      %p278 = scmp.ne.s32.totalorder %s273, %s275
      %p279 = scmp.eq.s32.totalorder %s35, 0
      %p280 = por %p278, %p279
      %p281 = scmp.ne.s32.totalorder %s273, %s275
      %p282 = scmp.eq.s32.totalorder %s40, 1
      %p283 = por %p281, %p282
      %p284 = scmp.ne.s32.totalorder %s275, %s276
      %p285 = scmp.eq.s32.totalorder %s40, 0
      %p286 = por %p284, %p285
      %p287 = scmp.ne.s32.totalorder %s275, %s276
      %p288 = scmp.eq.s32.totalorder %s41, 1
      %p289 = por %p287, %p288
      %p291 = scmp.ne.s32.totalorder %s276, %s290
      %p292 = scmp.eq.s32.totalorder %s41, 0
      %p293 = por %p291, %p292
      %s295 = sadd.s32 %s294, 1
      %p298 = scmp.eq.s32.totalorder %s35, 1
      %p299 = scmp.ne.s32.totalorder %s294, %s296
      %p300 = scmp.eq.s32.totalorder %s35, 0
      %p301 = por %p299, %p300
      %p302 = scmp.ne.s32.totalorder %s294, %s296
      %p303 = scmp.eq.s32.totalorder %s40, 1
      %p304 = por %p302, %p303
      %p305 = scmp.ne.s32.totalorder %s296, %s297
      %p306 = scmp.eq.s32.totalorder %s40, 0
      %p307 = por %p305, %p306
      %p308 = scmp.ne.s32.totalorder %s296, %s297
      %p309 = scmp.eq.s32.totalorder %s41, 1
      %p310 = por %p308, %p309
      %p312 = scmp.ne.s32.totalorder %s297, %s311
      %p313 = scmp.eq.s32.totalorder %s41, 0
      %p314 = por %p312, %p313
      %s316 = sadd.s32 %s315, 1
      %p319 = scmp.eq.s32.totalorder %s35, 1
      %p320 = scmp.ne.s32.totalorder %s315, %s317
      %p321 = scmp.eq.s32.totalorder %s35, 0
      %p322 = por %p320, %p321
      %p323 = scmp.ne.s32.totalorder %s315, %s317
      %p324 = scmp.eq.s32.totalorder %s40, 1
      %p325 = por %p323, %p324
      %p326 = scmp.ne.s32.totalorder %s317, %s318
      %p327 = scmp.eq.s32.totalorder %s40, 0
      %p328 = por %p326, %p327
      %p329 = scmp.ne.s32.totalorder %s317, %s318
      %p330 = scmp.eq.s32.totalorder %s41, 1
      %p331 = por %p329, %p330
      %p333 = scmp.ne.s32.totalorder %s318, %s332
      %p334 = scmp.eq.s32.totalorder %s41, 0
      %p335 = por %p333, %p334
      %s337 = sadd.s32 %s336, 1
      %p340 = scmp.eq.s32.totalorder %s35, 1
      %p341 = scmp.ne.s32.totalorder %s336, %s338
      %p342 = scmp.eq.s32.totalorder %s35, 0
      %p343 = por %p341, %p342
      %p344 = scmp.ne.s32.totalorder %s336, %s338
      %p345 = scmp.eq.s32.totalorder %s40, 1
      %p346 = por %p344, %p345
      %p347 = scmp.ne.s32.totalorder %s338, %s339
      %p348 = scmp.eq.s32.totalorder %s40, 0
      %p349 = por %p347, %p348
      %p350 = scmp.ne.s32.totalorder %s338, %s339
      %p351 = scmp.eq.s32.totalorder %s41, 1
      %p352 = por %p350, %p351
      %p354 = scmp.ne.s32.totalorder %s339, %s353
      %p355 = scmp.eq.s32.totalorder %s41, 0
      %p356 = por %p354, %p355
      %s358 = sadd.s32 %s357, 1
      %p361 = scmp.eq.s32.totalorder %s35, 1
      %p362 = scmp.ne.s32.totalorder %s357, %s359
      %p363 = scmp.eq.s32.totalorder %s35, 0
      %p364 = por %p362, %p363
      %p365 = scmp.ne.s32.totalorder %s357, %s359
      %p366 = scmp.eq.s32.totalorder %s40, 1
      %p367 = por %p365, %p366
      %p368 = scmp.ne.s32.totalorder %s359, %s360
      %p369 = scmp.eq.s32.totalorder %s40, 0
      %p370 = por %p368, %p369
      %p371 = scmp.ne.s32.totalorder %s359, %s360
      %p372 = scmp.eq.s32.totalorder %s41, 1
      %p373 = por %p371, %p372
      %p375 = scmp.ne.s32.totalorder %s360, %s374
      %p376 = scmp.eq.s32.totalorder %s41, 0
      %p377 = por %p375, %p376
      %s379 = sadd.s32 %s378, 1
      %p382 = scmp.eq.s32.totalorder %s35, 1
      %p383 = scmp.ne.s32.totalorder %s378, %s380
      %p384 = scmp.eq.s32.totalorder %s35, 0
      %p385 = por %p383, %p384
      %p386 = scmp.ne.s32.totalorder %s378, %s380
      %p387 = scmp.eq.s32.totalorder %s40, 1
      %p388 = por %p386, %p387
      %p389 = scmp.ne.s32.totalorder %s380, %s381
      %p390 = scmp.eq.s32.totalorder %s40, 0
      %p391 = por %p389, %p390
      %p392 = scmp.ne.s32.totalorder %s380, %s381
      %p393 = scmp.eq.s32.totalorder %s41, 1
      %p394 = por %p392, %p393
      %p396 = scmp.ne.s32.totalorder %s381, %s395
      %p397 = scmp.eq.s32.totalorder %s41, 0
      %p398 = por %p396, %p397
      %s400 = sadd.s32 %s399, 1
      %p403 = scmp.eq.s32.totalorder %s35, 1
      %p404 = scmp.ne.s32.totalorder %s399, %s401
      %p405 = scmp.eq.s32.totalorder %s35, 0
      %p406 = por %p404, %p405
      %p407 = scmp.ne.s32.totalorder %s399, %s401
      %p408 = scmp.eq.s32.totalorder %s40, 1
      %p409 = por %p407, %p408
      %p410 = scmp.ne.s32.totalorder %s401, %s402
      %p411 = scmp.eq.s32.totalorder %s40, 0
      %p412 = por %p410, %p411
      %p413 = scmp.ne.s32.totalorder %s401, %s402
      %p414 = scmp.eq.s32.totalorder %s41, 1
      %p415 = por %p413, %p414
      %p417 = scmp.ne.s32.totalorder %s402, %s416
      %p418 = scmp.eq.s32.totalorder %s41, 0
      %p419 = por %p417, %p418
      %s421 = sadd.s32 %s420, 1
      %p424 = scmp.eq.s32.totalorder %s35, 1
      %p425 = scmp.ne.s32.totalorder %s420, %s422
      %p426 = scmp.eq.s32.totalorder %s35, 0
      %p427 = por %p425, %p426
      %p428 = scmp.ne.s32.totalorder %s420, %s422
      %p429 = scmp.eq.s32.totalorder %s40, 1
      %p430 = por %p428, %p429
      %p431 = scmp.ne.s32.totalorder %s422, %s423
      %p432 = scmp.eq.s32.totalorder %s40, 0
      %p433 = por %p431, %p432
      %p434 = scmp.ne.s32.totalorder %s422, %s423
      %p435 = scmp.eq.s32.totalorder %s41, 1
      %p436 = por %p434, %p435
      %p438 = scmp.ne.s32.totalorder %s423, %s437
      %p439 = scmp.eq.s32.totalorder %s41, 0
      %p440 = por %p438, %p439
      %s442 = sadd.s32 %s441, 1
      %p445 = scmp.eq.s32.totalorder %s35, 1
      %p446 = scmp.ne.s32.totalorder %s441, %s443
      %p447 = scmp.eq.s32.totalorder %s35, 0
      %p448 = por %p446, %p447
      %p449 = scmp.ne.s32.totalorder %s441, %s443
      %p450 = scmp.eq.s32.totalorder %s40, 1
      %p451 = por %p449, %p450
      %p452 = scmp.ne.s32.totalorder %s443, %s444
      %p453 = scmp.eq.s32.totalorder %s40, 0
      %p454 = por %p452, %p453
      %p455 = scmp.ne.s32.totalorder %s443, %s444
      %p456 = scmp.eq.s32.totalorder %s41, 1
      %p457 = por %p455, %p456
      %p459 = scmp.ne.s32.totalorder %s444, %s458
      %p460 = scmp.eq.s32.totalorder %s41, 0
      %p461 = por %p459, %p460
      %s463 = sadd.s32 %s462, 1
      %p466 = scmp.eq.s32.totalorder %s35, 1
      %p467 = scmp.ne.s32.totalorder %s462, %s464
      %p468 = scmp.eq.s32.totalorder %s35, 0
      %p469 = por %p467, %p468
      %p470 = scmp.ne.s32.totalorder %s462, %s464
      %p471 = scmp.eq.s32.totalorder %s40, 1
      %p472 = por %p470, %p471
      %p473 = scmp.ne.s32.totalorder %s464, %s465
      %p474 = scmp.eq.s32.totalorder %s40, 0
      %p475 = por %p473, %p474
      %p476 = scmp.ne.s32.totalorder %s464, %s465
      %p477 = scmp.eq.s32.totalorder %s41, 1
      %p478 = por %p476, %p477
      %p480 = scmp.ne.s32.totalorder %s465, %s479
      %p481 = scmp.eq.s32.totalorder %s41, 0
      %p482 = por %p480, %p481
      %s484 = sadd.s32 %s483, 1
      %p487 = scmp.eq.s32.totalorder %s35, 1
      %p488 = scmp.ne.s32.totalorder %s483, %s485
      %p489 = scmp.eq.s32.totalorder %s35, 0
      %p490 = por %p488, %p489
      %p491 = scmp.ne.s32.totalorder %s483, %s485
      %p492 = scmp.eq.s32.totalorder %s40, 1
      %p493 = por %p491, %p492
      %p494 = scmp.ne.s32.totalorder %s485, %s486
      %p495 = scmp.eq.s32.totalorder %s40, 0
      %p496 = por %p494, %p495
      %p497 = scmp.ne.s32.totalorder %s485, %s486
      %p498 = scmp.eq.s32.totalorder %s41, 1
      %p499 = por %p497, %p498
      %p501 = scmp.ne.s32.totalorder %s486, %s500
      %p502 = scmp.eq.s32.totalorder %s41, 0
      %p503 = por %p501, %p502
      %s505 = sadd.s32 %s504, 1
      %p508 = scmp.eq.s32.totalorder %s35, 1
      %p509 = scmp.ne.s32.totalorder %s504, %s506
      %p510 = scmp.eq.s32.totalorder %s35, 0
      %p511 = por %p509, %p510
      %p512 = scmp.ne.s32.totalorder %s504, %s506
      %p513 = scmp.eq.s32.totalorder %s40, 1
      %p514 = por %p512, %p513
      %p515 = scmp.ne.s32.totalorder %s506, %s507
      %p516 = scmp.eq.s32.totalorder %s40, 0
      %p517 = por %p515, %p516
      %p518 = scmp.ne.s32.totalorder %s506, %s507
      %p519 = scmp.eq.s32.totalorder %s41, 1
      %p520 = por %p518, %p519
      %p522 = scmp.ne.s32.totalorder %s507, %s521
      %p523 = scmp.eq.s32.totalorder %s41, 0
      %p524 = por %p522, %p523
      %s526 = sadd.s32 %s525, 1
      %p529 = scmp.eq.s32.totalorder %s35, 1
      %p530 = scmp.ne.s32.totalorder %s525, %s527
      %p531 = scmp.eq.s32.totalorder %s35, 0
      %p532 = por %p530, %p531
      %p533 = scmp.ne.s32.totalorder %s525, %s527
      %p534 = scmp.eq.s32.totalorder %s40, 1
      %p535 = por %p533, %p534
      %p536 = scmp.ne.s32.totalorder %s527, %s528
      %p537 = scmp.eq.s32.totalorder %s40, 0
      %p538 = por %p536, %p537
      %p539 = scmp.ne.s32.totalorder %s527, %s528
      %p540 = scmp.eq.s32.totalorder %s41, 1
      %p541 = por %p539, %p540
      %p543 = scmp.ne.s32.totalorder %s528, %s542
      %p544 = scmp.eq.s32.totalorder %s41, 0
      %p545 = por %p543, %p544
      %s546 = ssub.s32 %s35, %s42
      %p547 = scmp.eq.s32.totalorder %s546, 0
      %s549 = sadd.s32 %s548, 1
      %s550 = scalar_select %p547, %s548, %s549
      %p553 = pneg %p547
      %p554 = scmp.eq.s32.totalorder %s35, 1
      %p555 = por %p553, %p554
      %p556 = scmp.ne.s32.totalorder %s548, %s551
      %p557 = scmp.eq.s32.totalorder %s35, 0
      %p558 = por %p556, %p557
      %p559 = scmp.ne.s32.totalorder %s548, %s551
      %p560 = scmp.eq.s32.totalorder %s40, 1
      %p561 = por %p559, %p560
      %p562 = scmp.ne.s32.totalorder %s551, %s552
      %p563 = scmp.eq.s32.totalorder %s40, 0
      %p564 = por %p562, %p563
      %p565 = scmp.ne.s32.totalorder %s551, %s552
      %p566 = scmp.eq.s32.totalorder %s41, 1
      %p567 = por %p565, %p566
      %p569 = scmp.ne.s32.totalorder %s552, %s568
      %p570 = scmp.eq.s32.totalorder %s41, 0
      %p571 = por %p569, %p570
      %p572 = scmp.le.s32.totalorder 1, %s35
      %p573 = scmp.lt.s32.totalorder %s35, 3
      %p574 = pnand %p572, %p573
      %p575 = pneg %p574
      // Predicated region
      $region9: #{sa_multitrar_forward.1} parent=5 // pred_check
        _
      $region10: #{sa_multitrar_forward.1} parent=5 // pred_check_branch
        %577 = sbr.rel (%p574) target = $region12
      $region11: #{sa_multitrar_forward.1} parent=5 // pred_region
        %s578 = ssub.s32 %s35, 1
        // Predicated region
        $region13: #{sa_multitrar_forward.1} parent=11 // pred_check
          %p579 = pneg %p160
        $region14: #{sa_multitrar_forward.1} parent=11 // pred_check_branch
          %581 = sbr.rel (%p579) target = $region16
        $region15: #{sa_multitrar_forward.1} parent=11 // pred_region
          _
        $region16: #{sa_multitrar_forward.1} parent=11 // pred_fallthru
          _
        // Predicated region
        $region17: #{sa_multitrar_forward.1} parent=11 // pred_check
          %p582 = pneg %p181
        $region18: #{sa_multitrar_forward.1} parent=11 // pred_check_branch
          %584 = sbr.rel (%p582) target = $region20
        $region19: #{sa_multitrar_forward.1} parent=11 // pred_region
          _
        $region20: #{sa_multitrar_forward.1} parent=11 // pred_fallthru
          _
        // Predicated region
        $region21: #{sa_multitrar_forward.1} parent=11 // pred_check
          %p585 = pneg %p202
        $region22: #{sa_multitrar_forward.1} parent=11 // pred_check_branch
          %587 = sbr.rel (%p585) target = $region24
        $region23: #{sa_multitrar_forward.1} parent=11 // pred_region
          _
        $region24: #{sa_multitrar_forward.1} parent=11 // pred_fallthru
          _
        // Predicated region
        $region25: #{sa_multitrar_forward.1} parent=11 // pred_check
          %p588 = pneg %p223
        $region26: #{sa_multitrar_forward.1} parent=11 // pred_check_branch
          %590 = sbr.rel (%p588) target = $region28
        $region27: #{sa_multitrar_forward.1} parent=11 // pred_region
          _
        $region28: #{sa_multitrar_forward.1} parent=11 // pred_fallthru
          _
        // Predicated region
        $region29: #{sa_multitrar_forward.1} parent=11 // pred_check
          %p591 = pneg %p244
        $region30: #{sa_multitrar_forward.1} parent=11 // pred_check_branch
          %593 = sbr.rel (%p591) target = $region32
        $region31: #{sa_multitrar_forward.1} parent=11 // pred_region
          _
        $region32: #{sa_multitrar_forward.1} parent=11 // pred_fallthru
          _
        // Predicated region
        $region33: #{sa_multitrar_forward.1} parent=11 // pred_check
          %p594 = pneg %p265
        $region34: #{sa_multitrar_forward.1} parent=11 // pred_check_branch
          %596 = sbr.rel (%p594) target = $region36
        $region35: #{sa_multitrar_forward.1} parent=11 // pred_region
          _
        $region36: #{sa_multitrar_forward.1} parent=11 // pred_fallthru
          _
        // Predicated region
        $region37: #{sa_multitrar_forward.1} parent=11 // pred_check
          %p597 = pneg %p286
        $region38: #{sa_multitrar_forward.1} parent=11 // pred_check_branch
          %599 = sbr.rel (%p597) target = $region40
        $region39: #{sa_multitrar_forward.1} parent=11 // pred_region
          _
        $region40: #{sa_multitrar_forward.1} parent=11 // pred_fallthru
          _
        // Predicated region
        $region41: #{sa_multitrar_forward.1} parent=11 // pred_check
          %p600 = pneg %p307
        $region42: #{sa_multitrar_forward.1} parent=11 // pred_check_branch
          %602 = sbr.rel (%p600) target = $region44
        $region43: #{sa_multitrar_forward.1} parent=11 // pred_region
          _
        $region44: #{sa_multitrar_forward.1} parent=11 // pred_fallthru
          _
        // Predicated region
        $region45: #{sa_multitrar_forward.1} parent=11 // pred_check
          %p603 = pneg %p328
        $region46: #{sa_multitrar_forward.1} parent=11 // pred_check_branch
          %605 = sbr.rel (%p603) target = $region48
        $region47: #{sa_multitrar_forward.1} parent=11 // pred_region
          _
        $region48: #{sa_multitrar_forward.1} parent=11 // pred_fallthru
          _
        // Predicated region
        $region49: #{sa_multitrar_forward.1} parent=11 // pred_check
          %p606 = pneg %p349
        $region50: #{sa_multitrar_forward.1} parent=11 // pred_check_branch
          %608 = sbr.rel (%p606) target = $region52
        $region51: #{sa_multitrar_forward.1} parent=11 // pred_region
          _
        $region52: #{sa_multitrar_forward.1} parent=11 // pred_fallthru
          _
        // Predicated region
        $region53: #{sa_multitrar_forward.1} parent=11 // pred_check
          %p609 = pneg %p370
        $region54: #{sa_multitrar_forward.1} parent=11 // pred_check_branch
          %611 = sbr.rel (%p609) target = $region56
        $region55: #{sa_multitrar_forward.1} parent=11 // pred_region
          _
        $region56: #{sa_multitrar_forward.1} parent=11 // pred_fallthru
          _
        // Predicated region
        $region57: #{sa_multitrar_forward.1} parent=11 // pred_check
          %p612 = pneg %p391
        $region58: #{sa_multitrar_forward.1} parent=11 // pred_check_branch
          %614 = sbr.rel (%p612) target = $region60
        $region59: #{sa_multitrar_forward.1} parent=11 // pred_region
          _
        $region60: #{sa_multitrar_forward.1} parent=11 // pred_fallthru
          _
        // Predicated region
        $region61: #{sa_multitrar_forward.1} parent=11 // pred_check
          %p615 = pneg %p412
        $region62: #{sa_multitrar_forward.1} parent=11 // pred_check_branch
          %617 = sbr.rel (%p615) target = $region64
        $region63: #{sa_multitrar_forward.1} parent=11 // pred_region
          _
        $region64: #{sa_multitrar_forward.1} parent=11 // pred_fallthru
          _
        // Predicated region
        $region65: #{sa_multitrar_forward.1} parent=11 // pred_check
          %p618 = pneg %p433
        $region66: #{sa_multitrar_forward.1} parent=11 // pred_check_branch
          %620 = sbr.rel (%p618) target = $region68
        $region67: #{sa_multitrar_forward.1} parent=11 // pred_region
          _
        $region68: #{sa_multitrar_forward.1} parent=11 // pred_fallthru
          _
        // Predicated region
        $region69: #{sa_multitrar_forward.1} parent=11 // pred_check
          %p621 = pneg %p454
        $region70: #{sa_multitrar_forward.1} parent=11 // pred_check_branch
          %623 = sbr.rel (%p621) target = $region72
        $region71: #{sa_multitrar_forward.1} parent=11 // pred_region
          _
        $region72: #{sa_multitrar_forward.1} parent=11 // pred_fallthru
          _
        // Predicated region
        $region73: #{sa_multitrar_forward.1} parent=11 // pred_check
          %p624 = pneg %p475
        $region74: #{sa_multitrar_forward.1} parent=11 // pred_check_branch
          %626 = sbr.rel (%p624) target = $region76
        $region75: #{sa_multitrar_forward.1} parent=11 // pred_region
          _
        $region76: #{sa_multitrar_forward.1} parent=11 // pred_fallthru
          _
        // Predicated region
        $region77: #{sa_multitrar_forward.1} parent=11 // pred_check
          %p627 = pneg %p496
        $region78: #{sa_multitrar_forward.1} parent=11 // pred_check_branch
          %629 = sbr.rel (%p627) target = $region80
        $region79: #{sa_multitrar_forward.1} parent=11 // pred_region
          _
        $region80: #{sa_multitrar_forward.1} parent=11 // pred_fallthru
          _
        // Predicated region
        $region81: #{sa_multitrar_forward.1} parent=11 // pred_check
          %p630 = pneg %p517
        $region82: #{sa_multitrar_forward.1} parent=11 // pred_check_branch
          %632 = sbr.rel (%p630) target = $region84
        $region83: #{sa_multitrar_forward.1} parent=11 // pred_region
          _
        $region84: #{sa_multitrar_forward.1} parent=11 // pred_fallthru
          _
        // Predicated region
        $region85: #{sa_multitrar_forward.1} parent=11 // pred_check
          %p633 = pneg %p538
        $region86: #{sa_multitrar_forward.1} parent=11 // pred_check_branch
          %635 = sbr.rel (%p633) target = $region88
        $region87: #{sa_multitrar_forward.1} parent=11 // pred_region
          _
        $region88: #{sa_multitrar_forward.1} parent=11 // pred_fallthru
          _
      $region12: #{sa_multitrar_forward.1} parent=5 // pred_fallthru
        _
      %p636 = scmp.lt.s32.totalorder %s35, 2
      // Predicated region
      $region89: #{sa_multitrar_forward.1} parent=5 // pred_check
        %p637 = pneg %p636
      $region90: #{sa_multitrar_forward.1} parent=5 // pred_check_branch
        %639 = sbr.rel (%p637) target = $region92
      $region91: #{sa_multitrar_forward.1} parent=5 // pred_region
        // Predicated region
        $region93: #{sa_multitrar_forward.1} parent=91 // pred_check
          %p640 = pneg %p55
        $region94: #{sa_multitrar_forward.1} parent=91 // pred_check_branch
          %642 = sbr.rel (%p640) target = $region96
        $region95: #{sa_multitrar_forward.1} parent=91 // pred_region
          %s643 = sand.u32 %s45, 1
          %s644 = scalar_lea.sflag [#allocation3], %s643
          %s645 = sand.u32 %s45, 1
          %s646 = smul.addr %s645, 8
          %s647 = scalar_lea.vmem [#allocation2], %s646
          %s649 = ssub.s32 128, 128
          %650 = vsyncadd %s644, %s649
          %s651 = smul.addr %s35, 128
          %s652 = scalar_lea.hbm %s0, %s651
          %s654 = sshll.u32 %s647, 4
          %s655 = int_to_ptr.vmem [resolvable:$true] %s654
          %657 = dma.hbm_to_vmem [thread:$0]  %s652, 128, %s655, %s644
        $region96: #{sa_multitrar_forward.1} parent=91 // pred_fallthru
          _
        // Predicated region
        $region97: #{sa_multitrar_forward.1} parent=91 // pred_check
          %p658 = pneg %p81
        $region98: #{sa_multitrar_forward.1} parent=91 // pred_check_branch
          %660 = sbr.rel (%p658) target = $region100
        $region99: #{sa_multitrar_forward.1} parent=91 // pred_region
          %p661 = scmp.lt.s32.totalorder %s35, 1
          %s662 = scalar_select %p661, %s35, 1
          %s663 = smul.addr %s662, 2
          %s664 = smul.addr %s663, 8
          %s665 = scalar_lea.vmem %s1, %s664
        $region100: #{sa_multitrar_forward.1} parent=91 // pred_fallthru
          _
        // Predicated region
        $region101: #{sa_multitrar_forward.1} parent=91 // pred_check
          %p666 = pneg %p107
        $region102: #{sa_multitrar_forward.1} parent=91 // pred_check_branch
          %668 = sbr.rel (%p666) target = $region104
        $region103: #{sa_multitrar_forward.1} parent=91 // pred_region
          %p669 = scmp.lt.s32.totalorder %s35, 1
          %s670 = scalar_select %p669, %s35, 1
          %s671 = scalar_lea.vmem %s2, %s670
        $region104: #{sa_multitrar_forward.1} parent=91 // pred_fallthru
          _
        // Predicated region
        $region105: #{sa_multitrar_forward.1} parent=91 // pred_check
          %p672 = pneg %p133
        $region106: #{sa_multitrar_forward.1} parent=91 // pred_check_branch
          %674 = sbr.rel (%p672) target = $region108
        $region107: #{sa_multitrar_forward.1} parent=91 // pred_region
          %s675 = sand.u32 %s123, 1
          %s676 = sand.u32 %s123, 1
          %s677 = smul.addr %s676, 16
          %s678 = scalar_lea.vmem [#allocation5], %s677
          %s679 = smul.addr %s35, 8
          %s680 = scalar_lea.vmem %s3, %s679
          // Predicated region
          $region109: #{sa_multitrar_forward.1} parent=107 // pred_check
            _
          $region110: #{sa_multitrar_forward.1} parent=107 // pred_check_branch
            %682 = sbr.rel (0) target = $region112
          $region111: #{sa_multitrar_forward.1} parent=107 // pred_region
            // Predicated region
            $region113: #{sa_multitrar_forward.1} parent=111 // pred_check
              _
            $region114: #{sa_multitrar_forward.1} parent=111 // pred_check_branch
              %684 = sbr.rel (0) target = $region116
            $region115: #{sa_multitrar_forward.1} parent=111 // pred_region
              // Predicated region
              $region128: #{sa_multitrar_forward.1} parent=115 // pred_check
                _
              $region129: #{sa_multitrar_forward.1} parent=115 // pred_check_branch
                %702 = sbr.rel (0) target = $region131
              $region130: #{sa_multitrar_forward.1} parent=115 // pred_region
                loop: start=0, step=1, limit=1
                $region132: #{sa_multitrar_forward.1} parent=130 // loop_pre_header
                  _
                $region133: #{sa_multitrar_forward.1} parent=130 // loop_header
                  %s704 = sphi 0, %s708
                  %p705 = scmp.ge.s32.totalorder %s704, 1
                  %s709 = sphi %s680, %s680
                  %s710 = sphi %s678, %s678
                $region134: #{sa_multitrar_forward.1} parent=130 // loop_header_branch
                  %707 = sbr.rel (%p705) target = $region138
                $region135: #{sa_multitrar_forward.1} parent=130 // loop_body
                  %v711 = vld [vmem:[%s709] sm:$0xff]
                  %712 = vst [vmem:[%s710] sm:$0xff] %v711
                  %v713 = vld [vmem:[%s709 + $0x10] sm:$0xff]
                  %714 = vst [vmem:[%s710 + $0x8] sm:$0xff] %v713
                $region136: #{sa_multitrar_forward.1} parent=130 // loop_footer
                  %s708 = sadd.s32 1, %s704
                $region137: #{sa_multitrar_forward.1} parent=130 // loop_footer_branch
                  %703 = sbr.rel target = $region133
                $region138: #{sa_multitrar_forward.1} parent=130 // loop_exit
                  _
              $region131: #{sa_multitrar_forward.1} parent=115 // pred_fallthru
                _
              // Predicated region
              $region139: #{sa_multitrar_forward.1} parent=115 // pred_check
                _
              $region140: #{sa_multitrar_forward.1} parent=115 // pred_check_branch
                %716 = sbr.rel target = $region142
              $region141: #{sa_multitrar_forward.1} parent=115 // pred_region
                _
              $region142: #{sa_multitrar_forward.1} parent=115 // pred_fallthru
                _
            $region116: #{sa_multitrar_forward.1} parent=111 // pred_fallthru
              _
            // Predicated region
            $region117: #{sa_multitrar_forward.1} parent=111 // pred_check
              _
            $region118: #{sa_multitrar_forward.1} parent=111 // pred_check_branch
              %686 = sbr.rel target = $region120
            $region119: #{sa_multitrar_forward.1} parent=111 // pred_region
              %s688 = ssub.s32 256, 1
              loop: start=0, step=1, limit=1
              $region121: #{sa_multitrar_forward.1} parent=119 // loop_pre_header
                _
              $region122: #{sa_multitrar_forward.1} parent=119 // loop_header
                %s690 = sphi 0, %s694
                %p691 = scmp.ge.s32.totalorder %s690, 1
                %s695 = sphi %s680, %s680
                %s696 = sphi %s678, %s678
              $region123: #{sa_multitrar_forward.1} parent=119 // loop_header_branch
                %693 = sbr.rel (%p691) target = $region127
              $region124: #{sa_multitrar_forward.1} parent=119 // loop_body
                %v697 = vld [vmem:[%s695] sm:%s688]
                %698 = vst [vmem:[%s696] sm:%s688] %v697
                %v699 = vld [vmem:[%s695 + $0x10] sm:%s688]
                %700 = vst [vmem:[%s696 + $0x8] sm:%s688] %v699
              $region125: #{sa_multitrar_forward.1} parent=119 // loop_footer
                %s694 = sadd.s32 1, %s690
              $region126: #{sa_multitrar_forward.1} parent=119 // loop_footer_branch
                %689 = sbr.rel target = $region122
              $region127: #{sa_multitrar_forward.1} parent=119 // loop_exit
                _
            $region120: #{sa_multitrar_forward.1} parent=111 // pred_fallthru
              _
          $region112: #{sa_multitrar_forward.1} parent=107 // pred_fallthru
            _
          %717 = vnop
        $region108: #{sa_multitrar_forward.1} parent=91 // pred_fallthru
          _
      $region92: #{sa_multitrar_forward.1} parent=5 // pred_fallthru
        _
      %p718 = scmp.le.s32.totalorder 1, %s35
      %p719 = scmp.lt.s32.totalorder %s35, 3
      %p720 = pnand %p718, %p719
      %p721 = pneg %p720
      // Predicated region
      $region143: #{sa_multitrar_forward.1} parent=5 // pred_check
        _
      $region144: #{sa_multitrar_forward.1} parent=5 // pred_check_branch
        %723 = sbr.rel (%p720) target = $region146
      $region145: #{sa_multitrar_forward.1} parent=5 // pred_region
        %s724 = ssub.s32 %s35, 1
        %s725 = sand.u32 %s48, 1
        %s726 = scalar_lea.sflag [#allocation3], %s725
        %s727 = sand.u32 %s48, 1
        %s728 = smul.addr %s727, 8
        %s729 = scalar_lea.vmem [#allocation2], %s728
        // Predicated region
        $region147: #{sa_multitrar_forward.1} parent=145 // pred_check
          %p730 = pneg %p61
        $region148: #{sa_multitrar_forward.1} parent=145 // pred_check_branch
          %732 = sbr.rel (%p730) target = $region150
        $region149: #{sa_multitrar_forward.1} parent=145 // pred_region
          %733 = dma.done %s726, 128
        $region150: #{sa_multitrar_forward.1} parent=145 // pred_fallthru
          _
        %s734 = sand.u32 %s126, 1
        %s735 = sand.u32 %s126, 1
        %s736 = smul.addr %s735, 16
        %s737 = scalar_lea.vmem [#allocation5], %s736
        // Predicated region
        $region151: #{sa_multitrar_forward.1} parent=145 // pred_check
          %p738 = pneg %p139
        $region152: #{sa_multitrar_forward.1} parent=145 // pred_check_branch
          %740 = sbr.rel (%p738) target = $region154
        $region153: #{sa_multitrar_forward.1} parent=145 // pred_region
          _
        $region154: #{sa_multitrar_forward.1} parent=145 // pred_fallthru
          _
        %s741 = sand.u32 %s48, 1
        %s742 = scalar_lea.sflag [#allocation3], %s741
        %s743 = sand.u32 %s48, 1
        %s744 = smul.addr %s743, 8
        %s745 = scalar_lea.vmem [#allocation2], %s744
        %p746 = pneg %p61
        %p747 = pneg %p58
        %p748 = scmp.lt.s32.totalorder %s40, 1
        %s749 = scalar_select %p748, %s40, 1
        %s750 = smul.addr %s749, 2
        %s751 = smul.addr %s750, 8
        %s752 = scalar_lea.vmem %s1, %s751
        %p753 = pneg %p87
        %p754 = pneg %p84
        %p755 = scmp.lt.s32.totalorder %s40, 1
        %s756 = scalar_select %p755, %s40, 1
        %s757 = scalar_lea.vmem %s2, %s756
        %p758 = pneg %p113
        %p759 = pneg %p110
        %s760 = sand.u32 %s126, 1
        %s761 = sand.u32 %s126, 1
        %s762 = smul.addr %s761, 16
        %s763 = scalar_lea.vmem [#allocation5], %s762
        %p764 = pneg %p139
        %p765 = pneg %p136
        %p766 = pneg %p160
        %p767 = pneg %p157
        %p768 = pneg %p181
        %p769 = pneg %p178
        %p770 = pneg %p202
        %p771 = pneg %p199
        %p772 = pneg %p223
        %p773 = pneg %p220
        %p774 = pneg %p244
        %p775 = pneg %p241
        %p776 = pneg %p265
        %p777 = pneg %p262
        %p778 = pneg %p286
        %p779 = pneg %p283
        %p780 = pneg %p307
        %p781 = pneg %p304
        %p782 = pneg %p328
        %p783 = pneg %p325
        %p784 = pneg %p349
        %p785 = pneg %p346
        %p786 = pneg %p370
        %p787 = pneg %p367
        %p788 = pneg %p391
        %p789 = pneg %p388
        %p790 = pneg %p412
        %p791 = pneg %p409
        %p792 = pneg %p433
        %p793 = pneg %p430
        %p794 = pneg %p454
        %p795 = pneg %p451
        %p796 = pneg %p475
        %p797 = pneg %p472
        %p798 = pneg %p496
        %p799 = pneg %p493
        %p800 = pneg %p517
        %p801 = pneg %p514
        %p802 = pneg %p538
        %p803 = pneg %p535
        %p804 = pneg %p564
        %p805 = pneg %p561
        %s806 = sand.u32 %s551, 1
        %s807 = scalar_lea.sflag [#allocation4], %s806
        %s808 = sand.u32 %s551, 1
        %s809 = smul.addr %s808, 8
        %s810 = scalar_lea.vmem [#allocation6], %s809
        %p811 = scmp.lt.s32.totalorder %s40, 1
        %s812 = scalar_select %p811, %s40, 1
        %s813 = smul.addr %s812, 2
        %s814 = smul.addr %s813, 8
        %s815 = scalar_lea.vmem %s1, %s814
        %p816 = scmp.lt.s32.totalorder %s40, 1
        %s817 = scalar_select %p816, %s40, 1
        %s818 = scalar_lea.vmem %s2, %s817
        %v819 = vld [vmem:[%s729] sm:$0xff]
        %v820 = vld [vmem:[%s815] sm:$0xff]
        %v821 = vld [vmem:[%s815 + $0x8] sm:$0xff]
        %v822 = vld [vmem:[%s21] sm:$0x7]
        %v823 = vld [vmem:[%s22] sm:$0x7]
        %v824 = vld [vmem:[%s818] sm:$0x1]
        %v825 = vmul.f32 %v824, -1e+09
        %v826 = vld [vmem:[%s737] sm:$0xff]
        %v827 = vld [vmem:[%s737 + $0x8] sm:$0xff]
        %v828 = vmul.f32 %v826, -1e+09
        %v829 = vmul.f32 %v827, -1e+09
        %v830 = vld [vmem:[%s4] sm:$0xff]
        %v831 = vld [vmem:[%s4 + $0x8] sm:$0xff]
        %v832 = vld [vmem:[%s4 + $0x10] sm:$0xff]
        %v833 = vld [vmem:[%s4 + $0x18] sm:$0xff]
        %v834 = vld [vmem:[%s5] sm:$0x1]
        %v836 = vlaneseq
        %v837 = vshrl.u32 %v836, 7
        %v838 = vsub.s32 0, %v837
        %v839 = vrot.slane %v834, %v838
        %vm841 = vcmask 261120
        %v843 = vsel %vm841, %v819, 0
        %845 = vmatprep.subr.mxu0 0.0
        %846 = vmatpush1.msra.mxu0 0.0
        %847 = vmatprep.subr.mxu0 0.0
        %848 = vmatpush1.msra.mxu0 0.0
        %849 = vmatprep.subr.mxu0 0.0
        %850 = vmatpush1.msra.mxu0 0.0
        %851 = vmatprep.subr.mxu0 0.0
        %852 = vmatpush1.msra.mxu0 0.0
        %853 = vmatprep.subr.mxu0 0.0
        %854 = vmatpush1.msra.mxu0 0.0
        %855 = vmatprep.subr.mxu0 0.0
        %856 = vmatpush1.msra.mxu0 0.0
        %857 = vmatprep.subr.mxu0 0.0
        %858 = vmatpush1.msra.mxu0 0.0
        %859 = vmatprep.subr.mxu0 0.0
        %860 = vmatpush1.msra.mxu0 0.0
        %861 = vmatprep.subr.mxu0 0.0
        %862 = vmatpush1.msra.mxu0 0.0
        %863 = vmatprep.subr.mxu0 0.0
        %864 = vmatpush1.msra.mxu0 0.0
        %865 = vmatprep.subr.mxu0 0.0
        %866 = vmatpush1.msra.mxu0 0.0
        %867 = vmatprep.subr.mxu0 0.0
        %868 = vmatpush1.msra.mxu0 0.0
        %869 = vmatprep.subr.mxu0 0.0
        %870 = vmatpush1.msra.mxu0 %v833
        %871 = vmatprep.subr.mxu0 0.0
        %872 = vmatpush1.msra.mxu0 %v832
        %873 = vmatprep.subr.mxu0 0.0
        %874 = vmatpush1.msra.mxu0 %v831
        %875 = vmatprep.subr.mxu0 0.0
        %876 = vmatpush1.msra.mxu0 %v830
        %877 = vmatprep.subr.mxu0 0.0
        %878 = vmatpush2.msra.mxu0 0.0
        %879 = vmatprep.subr.mxu0 0.0
        %880 = vmatpush2.msra.mxu0 0.0
        %881 = vmatprep.subr.mxu0 0.0
        %882 = vmatpush2.msra.mxu0 0.0
        %883 = vmatprep.subr.mxu0 0.0
        %884 = vmatpush2.msra.mxu0 0.0
        %885 = vmatprep.subr.mxu0 0.0
        %886 = vmatpush2.msra.mxu0 0.0
        %887 = vmatprep.subr.mxu0 0.0
        %888 = vmatpush2.msra.mxu0 0.0
        %889 = vmatprep.subr.mxu0 0.0
        %890 = vmatpush2.msra.mxu0 0.0
        %891 = vmatprep.subr.mxu0 0.0
        %892 = vmatpush2.msra.mxu0 0.0
        %893 = vmatprep.subr.mxu0 0.0
        %894 = vmatpush2.msra.mxu0 0.0
        %895 = vmatprep.subr.mxu0 0.0
        %896 = vmatpush2.msra.mxu0 0.0
        %897 = vmatprep.subr.mxu0 0.0
        %898 = vmatpush2.msra.mxu0 0.0
        %899 = vmatprep.subr.mxu0 0.0
        %900 = vmatpush2.msra.mxu0 0.0
        %901 = vmatprep.subr.mxu0 0.0
        %902 = vmatpush2.msra.mxu0 0.0
        %903 = vmatprep.subr.mxu0 0.0
        %904 = vmatpush2.msra.mxu0 0.0
        %905 = vmatprep.subr.mxu0 0.0
        %906 = vmatpush2.msra.mxu0 0.0
        %907 = vmatprep.subr.mxu0 0.0
        %908 = vmatpush2.msra.mxu0 0.0
        %909 = vmatprep.mubr.f32.mxu0 0.0
        %910 = vmatmul.mubr.f32.gmra.mxu0 %v843
        %v911 = vpop.f32.mrf.mxu0
        %v912 = vadd.f32 %v839, %v911
        %v913 = vpop.f32.mrf.mxu0
        %914 = vdwg.mxu0
        %916 = vrot.lane.b32.xlu0 %v912, 120
        %v917 = vpop.permute.xlu0 %916
        %918 = vrot.lane.b32.xlu0 %v912, 112
        %v919 = vpop.permute.xlu0 %918
        %920 = vrot.lane.b32.xlu0 %v912, 104
        %v921 = vpop.permute.xlu0 %920
        %922 = vrot.lane.b32.xlu0 %v912, 96
        %v923 = vpop.permute.xlu0 %922
        %vm924 = vcmask 64512
        %v925 = vsel %vm924, %v912, 0
        %v927 = vsel %vm924, %v923, 0
        %929 = vmatprep.subr.mxu0 0.0
        %930 = vmatpush1.xpose.msra.mxu0 0.0
        %931 = vmatprep.subr.mxu0 0.0
        %932 = vmatpush1.xpose.msra.mxu0 0.0
        %933 = vmatprep.subr.mxu0 0.0
        %934 = vmatpush1.xpose.msra.mxu0 0.0
        %935 = vmatprep.subr.mxu0 0.0
        %936 = vmatpush1.xpose.msra.mxu0 0.0
        %937 = vmatprep.subr.mxu0 0.0
        %938 = vmatpush1.xpose.msra.mxu0 0.0
        %939 = vmatprep.subr.mxu0 0.0
        %940 = vmatpush1.xpose.msra.mxu0 0.0
        %941 = vmatprep.subr.mxu0 0.0
        %942 = vmatpush1.xpose.msra.mxu0 0.0
        %943 = vmatprep.subr.mxu0 0.0
        %944 = vmatpush1.xpose.msra.mxu0 0.0
        %945 = vmatprep.subr.mxu0 0.0
        %946 = vmatpush1.xpose.msra.mxu0 0.0
        %947 = vmatprep.subr.mxu0 0.0
        %948 = vmatpush1.xpose.msra.mxu0 0.0
        %949 = vmatprep.subr.mxu0 0.0
        %950 = vmatpush1.xpose.msra.mxu0 0.0
        %951 = vmatprep.subr.mxu0 0.0
        %952 = vmatpush1.xpose.msra.mxu0 0.0
        %953 = vmatprep.subr.mxu0 0.0
        %954 = vmatpush1.xpose.msra.mxu0 0.0
        %955 = vmatprep.subr.mxu0 0.0
        %956 = vmatpush1.xpose.msra.mxu0 0.0
        %957 = vmatprep.subr.mxu0 0.0
        %958 = vmatpush1.xpose.msra.mxu0 0.0
        %959 = vmatprep.subr.mxu0 0.0
        %960 = vmatpush1.xpose.msra.mxu0 %v927
        %961 = vmatprep.subr.mxu0 0.0
        %962 = vmatpush2.xpose.msra.mxu0 0.0
        %963 = vmatprep.subr.mxu0 0.0
        %964 = vmatpush2.xpose.msra.mxu0 0.0
        %965 = vmatprep.subr.mxu0 0.0
        %966 = vmatpush2.xpose.msra.mxu0 0.0
        %967 = vmatprep.subr.mxu0 0.0
        %968 = vmatpush2.xpose.msra.mxu0 0.0
        %969 = vmatprep.subr.mxu0 0.0
        %970 = vmatpush2.xpose.msra.mxu0 0.0
        %971 = vmatprep.subr.mxu0 0.0
        %972 = vmatpush2.xpose.msra.mxu0 0.0
        %973 = vmatprep.subr.mxu0 0.0
        %974 = vmatpush2.xpose.msra.mxu0 0.0
        %975 = vmatprep.subr.mxu0 0.0
        %976 = vmatpush2.xpose.msra.mxu0 0.0
        %977 = vmatprep.subr.mxu0 0.0
        %978 = vmatpush2.xpose.msra.mxu0 0.0
        %979 = vmatprep.subr.mxu0 0.0
        %980 = vmatpush2.xpose.msra.mxu0 0.0
        %981 = vmatprep.subr.mxu0 0.0
        %982 = vmatpush2.xpose.msra.mxu0 0.0
        %983 = vmatprep.subr.mxu0 0.0
        %984 = vmatpush2.xpose.msra.mxu0 0.0
        %985 = vmatprep.subr.mxu0 0.0
        %986 = vmatpush2.xpose.msra.mxu0 0.0
        %987 = vmatprep.subr.mxu0 0.0
        %988 = vmatpush2.xpose.msra.mxu0 0.0
        %989 = vmatprep.subr.mxu0 0.0
        %990 = vmatpush2.xpose.msra.mxu0 0.0
        %991 = vmatprep.subr.mxu0 0.0
        %992 = vmatpush2.xpose.msra.mxu0 0.0
        %993 = vmatprep.mubr.f32.mxu0 0.0
        %994 = vmatmul.mubr.f32.gmra.mxu0 %v925
        %v995 = vpop.f32.mrf.mxu0
        %v996 = vadd.f32 0.0, %v995
        %v997 = vpop.f32.mrf.mxu0
        %998 = vdwg.mxu0
        %999 = vrot.lane.b32.xlu0 %v917, 96
        %v1000 = vpop.permute.xlu0 %999
        %v1001 = vsel %vm924, %v917, 0
        %v1003 = vsel %vm924, %v1000, 0
        %1005 = vmatprep.subr.mxu0 0.0
        %1006 = vmatpush1.xpose.msra.mxu0 0.0
        %1007 = vmatprep.subr.mxu0 0.0
        %1008 = vmatpush1.xpose.msra.mxu0 0.0
        %1009 = vmatprep.subr.mxu0 0.0
        %1010 = vmatpush1.xpose.msra.mxu0 0.0
        %1011 = vmatprep.subr.mxu0 0.0
        %1012 = vmatpush1.xpose.msra.mxu0 0.0
        %1013 = vmatprep.subr.mxu0 0.0
        %1014 = vmatpush1.xpose.msra.mxu0 0.0
        %1015 = vmatprep.subr.mxu0 0.0
        %1016 = vmatpush1.xpose.msra.mxu0 0.0
        %1017 = vmatprep.subr.mxu0 0.0
        %1018 = vmatpush1.xpose.msra.mxu0 0.0
        %1019 = vmatprep.subr.mxu0 0.0
        %1020 = vmatpush1.xpose.msra.mxu0 0.0
        %1021 = vmatprep.subr.mxu0 0.0
        %1022 = vmatpush1.xpose.msra.mxu0 0.0
        %1023 = vmatprep.subr.mxu0 0.0
        %1024 = vmatpush1.xpose.msra.mxu0 0.0
        %1025 = vmatprep.subr.mxu0 0.0
        %1026 = vmatpush1.xpose.msra.mxu0 0.0
        %1027 = vmatprep.subr.mxu0 0.0
        %1028 = vmatpush1.xpose.msra.mxu0 0.0
        %1029 = vmatprep.subr.mxu0 0.0
        %1030 = vmatpush1.xpose.msra.mxu0 0.0
        %1031 = vmatprep.subr.mxu0 0.0
        %1032 = vmatpush1.xpose.msra.mxu0 0.0
        %1033 = vmatprep.subr.mxu0 0.0
        %1034 = vmatpush1.xpose.msra.mxu0 0.0
        %1035 = vmatprep.subr.mxu0 0.0
        %1036 = vmatpush1.xpose.msra.mxu0 %v1003
        %1037 = vmatprep.subr.mxu0 0.0
        %1038 = vmatpush2.xpose.msra.mxu0 0.0
        %1039 = vmatprep.subr.mxu0 0.0
        %1040 = vmatpush2.xpose.msra.mxu0 0.0
        %1041 = vmatprep.subr.mxu0 0.0
        %1042 = vmatpush2.xpose.msra.mxu0 0.0
        %1043 = vmatprep.subr.mxu0 0.0
        %1044 = vmatpush2.xpose.msra.mxu0 0.0
        %1045 = vmatprep.subr.mxu0 0.0
        %1046 = vmatpush2.xpose.msra.mxu0 0.0
        %1047 = vmatprep.subr.mxu0 0.0
        %1048 = vmatpush2.xpose.msra.mxu0 0.0
        %1049 = vmatprep.subr.mxu0 0.0
        %1050 = vmatpush2.xpose.msra.mxu0 0.0
        %1051 = vmatprep.subr.mxu0 0.0
        %1052 = vmatpush2.xpose.msra.mxu0 0.0
        %1053 = vmatprep.subr.mxu0 0.0
        %1054 = vmatpush2.xpose.msra.mxu0 0.0
        %1055 = vmatprep.subr.mxu0 0.0
        %1056 = vmatpush2.xpose.msra.mxu0 0.0
        %1057 = vmatprep.subr.mxu0 0.0
        %1058 = vmatpush2.xpose.msra.mxu0 0.0
        %1059 = vmatprep.subr.mxu0 0.0
        %1060 = vmatpush2.xpose.msra.mxu0 0.0
        %1061 = vmatprep.subr.mxu0 0.0
        %1062 = vmatpush2.xpose.msra.mxu0 0.0
        %1063 = vmatprep.subr.mxu0 0.0
        %1064 = vmatpush2.xpose.msra.mxu0 0.0
        %1065 = vmatprep.subr.mxu0 0.0
        %1066 = vmatpush2.xpose.msra.mxu0 0.0
        %1067 = vmatprep.subr.mxu0 0.0
        %1068 = vmatpush2.xpose.msra.mxu0 0.0
        %1069 = vmatprep.mubr.f32.mxu0 0.0
        %1070 = vmatmul.mubr.f32.gmra.mxu0 %v1001
        %v1071 = vpop.f32.mrf.mxu0
        %v1072 = vadd.f32 0.0, %v1071
        %v1073 = vpop.f32.mrf.mxu0
        %1074 = vdwg.mxu0
        %1075 = vrot.lane.b32.xlu0 %v919, 96
        %v1076 = vpop.permute.xlu0 %1075
        %v1077 = vsel %vm924, %v919, 0
        %v1079 = vsel %vm924, %v1076, 0
        %1081 = vmatprep.subr.mxu0 0.0
        %1082 = vmatpush1.xpose.msra.mxu0 0.0
        %1083 = vmatprep.subr.mxu0 0.0
        %1084 = vmatpush1.xpose.msra.mxu0 0.0
        %1085 = vmatprep.subr.mxu0 0.0
        %1086 = vmatpush1.xpose.msra.mxu0 0.0
        %1087 = vmatprep.subr.mxu0 0.0
        %1088 = vmatpush1.xpose.msra.mxu0 0.0
        %1089 = vmatprep.subr.mxu0 0.0
        %1090 = vmatpush1.xpose.msra.mxu0 0.0
        %1091 = vmatprep.subr.mxu0 0.0
        %1092 = vmatpush1.xpose.msra.mxu0 0.0
        %1093 = vmatprep.subr.mxu0 0.0
        %1094 = vmatpush1.xpose.msra.mxu0 0.0
        %1095 = vmatprep.subr.mxu0 0.0
        %1096 = vmatpush1.xpose.msra.mxu0 0.0
        %1097 = vmatprep.subr.mxu0 0.0
        %1098 = vmatpush1.xpose.msra.mxu0 0.0
        %1099 = vmatprep.subr.mxu0 0.0
        %1100 = vmatpush1.xpose.msra.mxu0 0.0
        %1101 = vmatprep.subr.mxu0 0.0
        %1102 = vmatpush1.xpose.msra.mxu0 0.0
        %1103 = vmatprep.subr.mxu0 0.0
        %1104 = vmatpush1.xpose.msra.mxu0 0.0
        %1105 = vmatprep.subr.mxu0 0.0
        %1106 = vmatpush1.xpose.msra.mxu0 0.0
        %1107 = vmatprep.subr.mxu0 0.0
        %1108 = vmatpush1.xpose.msra.mxu0 0.0
        %1109 = vmatprep.subr.mxu0 0.0
        %1110 = vmatpush1.xpose.msra.mxu0 0.0
        %1111 = vmatprep.subr.mxu0 0.0
        %1112 = vmatpush1.xpose.msra.mxu0 %v1079
        %1113 = vmatprep.subr.mxu0 0.0
        %1114 = vmatpush2.xpose.msra.mxu0 0.0
        %1115 = vmatprep.subr.mxu0 0.0
        %1116 = vmatpush2.xpose.msra.mxu0 0.0
        %1117 = vmatprep.subr.mxu0 0.0
        %1118 = vmatpush2.xpose.msra.mxu0 0.0
        %1119 = vmatprep.subr.mxu0 0.0
        %1120 = vmatpush2.xpose.msra.mxu0 0.0
        %1121 = vmatprep.subr.mxu0 0.0
        %1122 = vmatpush2.xpose.msra.mxu0 0.0
        %1123 = vmatprep.subr.mxu0 0.0
        %1124 = vmatpush2.xpose.msra.mxu0 0.0
        %1125 = vmatprep.subr.mxu0 0.0
        %1126 = vmatpush2.xpose.msra.mxu0 0.0
        %1127 = vmatprep.subr.mxu0 0.0
        %1128 = vmatpush2.xpose.msra.mxu0 0.0
        %1129 = vmatprep.subr.mxu0 0.0
        %1130 = vmatpush2.xpose.msra.mxu0 0.0
        %1131 = vmatprep.subr.mxu0 0.0
        %1132 = vmatpush2.xpose.msra.mxu0 0.0
        %1133 = vmatprep.subr.mxu0 0.0
        %1134 = vmatpush2.xpose.msra.mxu0 0.0
        %1135 = vmatprep.subr.mxu0 0.0
        %1136 = vmatpush2.xpose.msra.mxu0 0.0
        %1137 = vmatprep.subr.mxu0 0.0
        %1138 = vmatpush2.xpose.msra.mxu0 0.0
        %1139 = vmatprep.subr.mxu0 0.0
        %1140 = vmatpush2.xpose.msra.mxu0 0.0
        %1141 = vmatprep.subr.mxu0 0.0
        %1142 = vmatpush2.xpose.msra.mxu0 0.0
        %1143 = vmatprep.subr.mxu0 0.0
        %1144 = vmatpush2.xpose.msra.mxu0 0.0
        %1145 = vmatprep.mubr.f32.mxu0 0.0
        %1146 = vmatmul.mubr.f32.gmra.mxu0 %v1077
        %v1147 = vpop.f32.mrf.mxu0
        %v1148 = vadd.f32 0.0, %v1147
        %v1149 = vpop.f32.mrf.mxu0
        %1150 = vdwg.mxu0
        %1151 = vrot.lane.b32.xlu0 %v921, 96
        %v1152 = vpop.permute.xlu0 %1151
        %v1153 = vsel %vm924, %v921, 0
        %v1155 = vsel %vm924, %v1152, 0
        %1157 = vmatprep.subr.mxu0 0.0
        %1158 = vmatpush1.xpose.msra.mxu0 0.0
        %1159 = vmatprep.subr.mxu0 0.0
        %1160 = vmatpush1.xpose.msra.mxu0 0.0
        %1161 = vmatprep.subr.mxu0 0.0
        %1162 = vmatpush1.xpose.msra.mxu0 0.0
        %1163 = vmatprep.subr.mxu0 0.0
        %1164 = vmatpush1.xpose.msra.mxu0 0.0
        %1165 = vmatprep.subr.mxu0 0.0
        %1166 = vmatpush1.xpose.msra.mxu0 0.0
        %1167 = vmatprep.subr.mxu0 0.0
        %1168 = vmatpush1.xpose.msra.mxu0 0.0
        %1169 = vmatprep.subr.mxu0 0.0
        %1170 = vmatpush1.xpose.msra.mxu0 0.0
        %1171 = vmatprep.subr.mxu0 0.0
        %1172 = vmatpush1.xpose.msra.mxu0 0.0
        %1173 = vmatprep.subr.mxu0 0.0
        %1174 = vmatpush1.xpose.msra.mxu0 0.0
        %1175 = vmatprep.subr.mxu0 0.0
        %1176 = vmatpush1.xpose.msra.mxu0 0.0
        %1177 = vmatprep.subr.mxu0 0.0
        %1178 = vmatpush1.xpose.msra.mxu0 0.0
        %1179 = vmatprep.subr.mxu0 0.0
        %1180 = vmatpush1.xpose.msra.mxu0 0.0
        %1181 = vmatprep.subr.mxu0 0.0
        %1182 = vmatpush1.xpose.msra.mxu0 0.0
        %1183 = vmatprep.subr.mxu0 0.0
        %1184 = vmatpush1.xpose.msra.mxu0 0.0
        %1185 = vmatprep.subr.mxu0 0.0
        %1186 = vmatpush1.xpose.msra.mxu0 0.0
        %1187 = vmatprep.subr.mxu0 0.0
        %1188 = vmatpush1.xpose.msra.mxu0 %v1155
        %1189 = vmatprep.subr.mxu0 0.0
        %1190 = vmatpush2.xpose.msra.mxu0 0.0
        %1191 = vmatprep.subr.mxu0 0.0
        %1192 = vmatpush2.xpose.msra.mxu0 0.0
        %1193 = vmatprep.subr.mxu0 0.0
        %1194 = vmatpush2.xpose.msra.mxu0 0.0
        %1195 = vmatprep.subr.mxu0 0.0
        %1196 = vmatpush2.xpose.msra.mxu0 0.0
        %1197 = vmatprep.subr.mxu0 0.0
        %1198 = vmatpush2.xpose.msra.mxu0 0.0
        %1199 = vmatprep.subr.mxu0 0.0
        %1200 = vmatpush2.xpose.msra.mxu0 0.0
        %1201 = vmatprep.subr.mxu0 0.0
        %1202 = vmatpush2.xpose.msra.mxu0 0.0
        %1203 = vmatprep.subr.mxu0 0.0
        %1204 = vmatpush2.xpose.msra.mxu0 0.0
        %1205 = vmatprep.subr.mxu0 0.0
        %1206 = vmatpush2.xpose.msra.mxu0 0.0
        %1207 = vmatprep.subr.mxu0 0.0
        %1208 = vmatpush2.xpose.msra.mxu0 0.0
        %1209 = vmatprep.subr.mxu0 0.0
        %1210 = vmatpush2.xpose.msra.mxu0 0.0
        %1211 = vmatprep.subr.mxu0 0.0
        %1212 = vmatpush2.xpose.msra.mxu0 0.0
        %1213 = vmatprep.subr.mxu0 0.0
        %1214 = vmatpush2.xpose.msra.mxu0 0.0
        %1215 = vmatprep.subr.mxu0 0.0
        %1216 = vmatpush2.xpose.msra.mxu0 0.0
        %1217 = vmatprep.subr.mxu0 0.0
        %1218 = vmatpush2.xpose.msra.mxu0 0.0
        %1219 = vmatprep.subr.mxu0 0.0
        %1220 = vmatpush2.xpose.msra.mxu0 0.0
        %1221 = vmatprep.mubr.f32.mxu0 0.0
        %1222 = vmatmul.mubr.f32.gmra.mxu0 %v1153
        %v1223 = vpop.f32.mrf.mxu0
        %v1224 = vadd.f32 0.0, %v1223
        %v1225 = vpop.f32.mrf.mxu0
        %1226 = vdwg.mxu0
        %v1227 = vmul.f32 %v996, 0.35355338
        %v1228 = vmul.f32 %v1072, 0.35355338
        %v1229 = vmul.f32 %v1148, 0.35355338
        %v1230 = vmul.f32 %v1224, 0.35355338
        %v1232 = vlaneseq
        %v1233 = vshrl.u32 %v1232, 7
        %v1234 = vsub.s32 0, %v1233
        %v1235 = vrot.slane %v825, %v1234
        %v1237 = vadd.f32 %v1227, %v1235
        %v1238 = vadd.f32 %v1228, %v1235
        %v1239 = vadd.f32 %v1229, %v1235
        %v1240 = vadd.f32 %v1230, %v1235
        %v1241 = vsel %vm924, %v1237, -inf
        %1242 = vmax.xlane.f32.xlu0 %v1241
        %v1243 = vpop.xlane.xlu0 %1242
        %v1244 = vsel %vm924, %v1238, -inf
        %1245 = vmax.xlane.f32.xlu0 %v1244
        %v1246 = vpop.xlane.xlu0 %1245
        %v1247 = vsel %vm924, %v1239, -inf
        %1248 = vmax.xlane.f32.xlu0 %v1247
        %v1249 = vpop.xlane.xlu0 %1248
        %v1250 = vsel %vm924, %v1240, -inf
        %1251 = vmax.xlane.f32.xlu0 %v1250
        %v1252 = vpop.xlane.xlu0 %1251
        %v1253 = vsub.f32 %v1237, %v1243
        %v1254 = vsub.f32 %v1238, %v1246
        %v1255 = vsub.f32 %v1239, %v1249
        %v1256 = vsub.f32 %v1240, %v1252
        %v1257 = vmul.f32 %v1253, 1.442695
        %v1258 = vpow.pop %v1257
        %v1259 = vmul.f32 %v1254, 1.442695
        %v1260 = vpow.pop %v1259
        %v1261 = vmul.f32 %v1255, 1.442695
        %v1262 = vpow.pop %v1261
        %v1263 = vmul.f32 %v1256, 1.442695
        %v1264 = vpow.pop %v1263
        %v1265 = vsel %vm924, %v1258, 0.0
        %1266 = vadd.xlane.f32.xlu0 %v1265
        %v1267 = vpop.xlane.xlu0 %1266
        %v1268 = vsel %vm924, %v1260, 0.0
        %1269 = vadd.xlane.f32.xlu0 %v1268
        %v1270 = vpop.xlane.xlu0 %1269
        %v1271 = vsel %vm924, %v1262, 0.0
        %1272 = vadd.xlane.f32.xlu0 %v1271
        %v1273 = vpop.xlane.xlu0 %1272
        %v1274 = vsel %vm924, %v1264, 0.0
        %1275 = vadd.xlane.f32.xlu0 %v1274
        %v1276 = vpop.xlane.xlu0 %1275
        %v1277 = vrcp.pop %v1267
        %v1278 = vrcp.pop %v1270
        %v1279 = vrcp.pop %v1273
        %v1280 = vrcp.pop %v1276
        %v1281 = vmul.f32 %v1258, %v1277
        %v1282 = vmul.f32 %v1260, %v1278
        %v1283 = vmul.f32 %v1262, %v1279
        %v1284 = vmul.f32 %v1264, %v1280
        %1285 = vrot.lane.b32.xlu0 %v912, 64
        %v1286 = vpop.permute.xlu0 %1285
        %v1289 = vsel %vm924, %v1281, 0
        %1291 = vmatprep.subr.mxu0 0.0
        %1292 = vmatpush1.msra.mxu0 0.0
        %1293 = vmatprep.subr.mxu0 0.0
        %1294 = vmatpush1.msra.mxu0 0.0
        %1295 = vmatprep.subr.mxu0 0.0
        %1296 = vmatpush1.msra.mxu0 0.0
        %1297 = vmatprep.subr.mxu0 0.0
        %1298 = vmatpush1.msra.mxu0 0.0
        %1299 = vmatprep.subr.mxu0 0.0
        %1300 = vmatpush1.msra.mxu0 0.0
        %1301 = vmatprep.subr.mxu0 0.0
        %1302 = vmatpush1.msra.mxu0 0.0
        %1303 = vmatprep.subr.mxu0 0.0
        %1304 = vmatpush1.msra.mxu0 0.0
        %1305 = vmatprep.subr.mxu0 0.0
        %1306 = vmatpush1.msra.mxu0 0.0
        %1307 = vmatprep.subr.mxu0 0.0
        %1308 = vmatpush1.msra.mxu0 0.0
        %1309 = vmatprep.subr.mxu0 0.0
        %1310 = vmatpush1.msra.mxu0 0.0
        %1311 = vmatprep.subr.mxu0 0.0
        %1312 = vmatpush1.msra.mxu0 0.0
        %1313 = vmatprep.subr.mxu0 0.0
        %1314 = vmatpush1.msra.mxu0 0.0
        %1315 = vmatprep.subr.mxu0 0.0
        %1316 = vmatpush1.msra.mxu0 0.0
        %1317 = vmatprep.subr.mxu0 0.0
        %1318 = vmatpush1.msra.mxu0 0.0
        %1319 = vmatprep.subr.mxu0 0.0
        %1320 = vmatpush1.msra.mxu0 0.0
        %1321 = vmatprep.subr.mxu0 0.0
        %1322 = vmatpush1.msra.mxu0 %v1286
        %1323 = vmatprep.subr.mxu0 0.0
        %1324 = vmatpush2.msra.mxu0 0.0
        %1325 = vmatprep.subr.mxu0 0.0
        %1326 = vmatpush2.msra.mxu0 0.0
        %1327 = vmatprep.subr.mxu0 0.0
        %1328 = vmatpush2.msra.mxu0 0.0
        %1329 = vmatprep.subr.mxu0 0.0
        %1330 = vmatpush2.msra.mxu0 0.0
        %1331 = vmatprep.subr.mxu0 0.0
        %1332 = vmatpush2.msra.mxu0 0.0
        %1333 = vmatprep.subr.mxu0 0.0
        %1334 = vmatpush2.msra.mxu0 0.0
        %1335 = vmatprep.subr.mxu0 0.0
        %1336 = vmatpush2.msra.mxu0 0.0
        %1337 = vmatprep.subr.mxu0 0.0
        %1338 = vmatpush2.msra.mxu0 0.0
        %1339 = vmatprep.subr.mxu0 0.0
        %1340 = vmatpush2.msra.mxu0 0.0
        %1341 = vmatprep.subr.mxu0 0.0
        %1342 = vmatpush2.msra.mxu0 0.0
        %1343 = vmatprep.subr.mxu0 0.0
        %1344 = vmatpush2.msra.mxu0 0.0
        %1345 = vmatprep.subr.mxu0 0.0
        %1346 = vmatpush2.msra.mxu0 0.0
        %1347 = vmatprep.subr.mxu0 0.0
        %1348 = vmatpush2.msra.mxu0 0.0
        %1349 = vmatprep.subr.mxu0 0.0
        %1350 = vmatpush2.msra.mxu0 0.0
        %1351 = vmatprep.subr.mxu0 0.0
        %1352 = vmatpush2.msra.mxu0 0.0
        %1353 = vmatprep.subr.mxu0 0.0
        %1354 = vmatpush2.msra.mxu0 0.0
        %1355 = vmatprep.mubr.f32.mxu0 0.0
        %1356 = vmatmul.mubr.f32.gmra.mxu0 %v1289
        %v1357 = vpop.f32.mrf.mxu0
        %v1358 = vadd.f32 0.0, %v1357
        %v1359 = vpop.f32.mrf.mxu0
        %1360 = vdwg.mxu0
        %1361 = vrot.lane.b32.xlu0 %v917, 64
        %v1362 = vpop.permute.xlu0 %1361
        %v1365 = vsel %vm924, %v1282, 0
        %1367 = vmatprep.subr.mxu0 0.0
        %1368 = vmatpush1.msra.mxu0 0.0
        %1369 = vmatprep.subr.mxu0 0.0
        %1370 = vmatpush1.msra.mxu0 0.0
        %1371 = vmatprep.subr.mxu0 0.0
        %1372 = vmatpush1.msra.mxu0 0.0
        %1373 = vmatprep.subr.mxu0 0.0
        %1374 = vmatpush1.msra.mxu0 0.0
        %1375 = vmatprep.subr.mxu0 0.0
        %1376 = vmatpush1.msra.mxu0 0.0
        %1377 = vmatprep.subr.mxu0 0.0
        %1378 = vmatpush1.msra.mxu0 0.0
        %1379 = vmatprep.subr.mxu0 0.0
        %1380 = vmatpush1.msra.mxu0 0.0
        %1381 = vmatprep.subr.mxu0 0.0
        %1382 = vmatpush1.msra.mxu0 0.0
        %1383 = vmatprep.subr.mxu0 0.0
        %1384 = vmatpush1.msra.mxu0 0.0
        %1385 = vmatprep.subr.mxu0 0.0
        %1386 = vmatpush1.msra.mxu0 0.0
        %1387 = vmatprep.subr.mxu0 0.0
        %1388 = vmatpush1.msra.mxu0 0.0
        %1389 = vmatprep.subr.mxu0 0.0
        %1390 = vmatpush1.msra.mxu0 0.0
        %1391 = vmatprep.subr.mxu0 0.0
        %1392 = vmatpush1.msra.mxu0 0.0
        %1393 = vmatprep.subr.mxu0 0.0
        %1394 = vmatpush1.msra.mxu0 0.0
        %1395 = vmatprep.subr.mxu0 0.0
        %1396 = vmatpush1.msra.mxu0 0.0
        %1397 = vmatprep.subr.mxu0 0.0
        %1398 = vmatpush1.msra.mxu0 %v1362
        %1399 = vmatprep.subr.mxu0 0.0
        %1400 = vmatpush2.msra.mxu0 0.0
        %1401 = vmatprep.subr.mxu0 0.0
        %1402 = vmatpush2.msra.mxu0 0.0
        %1403 = vmatprep.subr.mxu0 0.0
        %1404 = vmatpush2.msra.mxu0 0.0
        %1405 = vmatprep.subr.mxu0 0.0
        %1406 = vmatpush2.msra.mxu0 0.0
        %1407 = vmatprep.subr.mxu0 0.0
        %1408 = vmatpush2.msra.mxu0 0.0
        %1409 = vmatprep.subr.mxu0 0.0
        %1410 = vmatpush2.msra.mxu0 0.0
        %1411 = vmatprep.subr.mxu0 0.0
        %1412 = vmatpush2.msra.mxu0 0.0
        %1413 = vmatprep.subr.mxu0 0.0
        %1414 = vmatpush2.msra.mxu0 0.0
        %1415 = vmatprep.subr.mxu0 0.0
        %1416 = vmatpush2.msra.mxu0 0.0
        %1417 = vmatprep.subr.mxu0 0.0
        %1418 = vmatpush2.msra.mxu0 0.0
        %1419 = vmatprep.subr.mxu0 0.0
        %1420 = vmatpush2.msra.mxu0 0.0
        %1421 = vmatprep.subr.mxu0 0.0
        %1422 = vmatpush2.msra.mxu0 0.0
        %1423 = vmatprep.subr.mxu0 0.0
        %1424 = vmatpush2.msra.mxu0 0.0
        %1425 = vmatprep.subr.mxu0 0.0
        %1426 = vmatpush2.msra.mxu0 0.0
        %1427 = vmatprep.subr.mxu0 0.0
        %1428 = vmatpush2.msra.mxu0 0.0
        %1429 = vmatprep.subr.mxu0 0.0
        %1430 = vmatpush2.msra.mxu0 0.0
        %1431 = vmatprep.mubr.f32.mxu0 0.0
        %1432 = vmatmul.mubr.f32.gmra.mxu0 %v1365
        %v1433 = vpop.f32.mrf.mxu0
        %v1434 = vadd.f32 0.0, %v1433
        %v1435 = vpop.f32.mrf.mxu0
        %1436 = vdwg.mxu0
        %1437 = vrot.lane.b32.xlu0 %v919, 64
        %v1438 = vpop.permute.xlu0 %1437
        %v1441 = vsel %vm924, %v1283, 0
        %1443 = vmatprep.subr.mxu0 0.0
        %1444 = vmatpush1.msra.mxu0 0.0
        %1445 = vmatprep.subr.mxu0 0.0
        %1446 = vmatpush1.msra.mxu0 0.0
        %1447 = vmatprep.subr.mxu0 0.0
        %1448 = vmatpush1.msra.mxu0 0.0
        %1449 = vmatprep.subr.mxu0 0.0
        %1450 = vmatpush1.msra.mxu0 0.0
        %1451 = vmatprep.subr.mxu0 0.0
        %1452 = vmatpush1.msra.mxu0 0.0
        %1453 = vmatprep.subr.mxu0 0.0
        %1454 = vmatpush1.msra.mxu0 0.0
        %1455 = vmatprep.subr.mxu0 0.0
        %1456 = vmatpush1.msra.mxu0 0.0
        %1457 = vmatprep.subr.mxu0 0.0
        %1458 = vmatpush1.msra.mxu0 0.0
        %1459 = vmatprep.subr.mxu0 0.0
        %1460 = vmatpush1.msra.mxu0 0.0
        %1461 = vmatprep.subr.mxu0 0.0
        %1462 = vmatpush1.msra.mxu0 0.0
        %1463 = vmatprep.subr.mxu0 0.0
        %1464 = vmatpush1.msra.mxu0 0.0
        %1465 = vmatprep.subr.mxu0 0.0
        %1466 = vmatpush1.msra.mxu0 0.0
        %1467 = vmatprep.subr.mxu0 0.0
        %1468 = vmatpush1.msra.mxu0 0.0
        %1469 = vmatprep.subr.mxu0 0.0
        %1470 = vmatpush1.msra.mxu0 0.0
        %1471 = vmatprep.subr.mxu0 0.0
        %1472 = vmatpush1.msra.mxu0 0.0
        %1473 = vmatprep.subr.mxu0 0.0
        %1474 = vmatpush1.msra.mxu0 %v1438
        %1475 = vmatprep.subr.mxu0 0.0
        %1476 = vmatpush2.msra.mxu0 0.0
        %1477 = vmatprep.subr.mxu0 0.0
        %1478 = vmatpush2.msra.mxu0 0.0
        %1479 = vmatprep.subr.mxu0 0.0
        %1480 = vmatpush2.msra.mxu0 0.0
        %1481 = vmatprep.subr.mxu0 0.0
        %1482 = vmatpush2.msra.mxu0 0.0
        %1483 = vmatprep.subr.mxu0 0.0
        %1484 = vmatpush2.msra.mxu0 0.0
        %1485 = vmatprep.subr.mxu0 0.0
        %1486 = vmatpush2.msra.mxu0 0.0
        %1487 = vmatprep.subr.mxu0 0.0
        %1488 = vmatpush2.msra.mxu0 0.0
        %1489 = vmatprep.subr.mxu0 0.0
        %1490 = vmatpush2.msra.mxu0 0.0
        %1491 = vmatprep.subr.mxu0 0.0
        %1492 = vmatpush2.msra.mxu0 0.0
        %1493 = vmatprep.subr.mxu0 0.0
        %1494 = vmatpush2.msra.mxu0 0.0
        %1495 = vmatprep.subr.mxu0 0.0
        %1496 = vmatpush2.msra.mxu0 0.0
        %1497 = vmatprep.subr.mxu0 0.0
        %1498 = vmatpush2.msra.mxu0 0.0
        %1499 = vmatprep.subr.mxu0 0.0
        %1500 = vmatpush2.msra.mxu0 0.0
        %1501 = vmatprep.subr.mxu0 0.0
        %1502 = vmatpush2.msra.mxu0 0.0
        %1503 = vmatprep.subr.mxu0 0.0
        %1504 = vmatpush2.msra.mxu0 0.0
        %1505 = vmatprep.subr.mxu0 0.0
        %1506 = vmatpush2.msra.mxu0 0.0
        %1507 = vmatprep.mubr.f32.mxu0 0.0
        %1508 = vmatmul.mubr.f32.gmra.mxu0 %v1441
        %v1509 = vpop.f32.mrf.mxu0
        %v1510 = vadd.f32 0.0, %v1509
        %v1511 = vpop.f32.mrf.mxu0
        %1512 = vdwg.mxu0
        %1513 = vrot.lane.b32.xlu0 %v921, 64
        %v1514 = vpop.permute.xlu0 %1513
        %v1517 = vsel %vm924, %v1284, 0
        %1519 = vmatprep.subr.mxu0 0.0
        %1520 = vmatpush1.msra.mxu0 0.0
        %1521 = vmatprep.subr.mxu0 0.0
        %1522 = vmatpush1.msra.mxu0 0.0
        %1523 = vmatprep.subr.mxu0 0.0
        %1524 = vmatpush1.msra.mxu0 0.0
        %1525 = vmatprep.subr.mxu0 0.0
        %1526 = vmatpush1.msra.mxu0 0.0
        %1527 = vmatprep.subr.mxu0 0.0
        %1528 = vmatpush1.msra.mxu0 0.0
        %1529 = vmatprep.subr.mxu0 0.0
        %1530 = vmatpush1.msra.mxu0 0.0
        %1531 = vmatprep.subr.mxu0 0.0
        %1532 = vmatpush1.msra.mxu0 0.0
        %1533 = vmatprep.subr.mxu0 0.0
        %1534 = vmatpush1.msra.mxu0 0.0
        %1535 = vmatprep.subr.mxu0 0.0
        %1536 = vmatpush1.msra.mxu0 0.0
        %1537 = vmatprep.subr.mxu0 0.0
        %1538 = vmatpush1.msra.mxu0 0.0
        %1539 = vmatprep.subr.mxu0 0.0
        %1540 = vmatpush1.msra.mxu0 0.0
        %1541 = vmatprep.subr.mxu0 0.0
        %1542 = vmatpush1.msra.mxu0 0.0
        %1543 = vmatprep.subr.mxu0 0.0
        %1544 = vmatpush1.msra.mxu0 0.0
        %1545 = vmatprep.subr.mxu0 0.0
        %1546 = vmatpush1.msra.mxu0 0.0
        %1547 = vmatprep.subr.mxu0 0.0
        %1548 = vmatpush1.msra.mxu0 0.0
        %1549 = vmatprep.subr.mxu0 0.0
        %1550 = vmatpush1.msra.mxu0 %v1514
        %1551 = vmatprep.subr.mxu0 0.0
        %1552 = vmatpush2.msra.mxu0 0.0
        %1553 = vmatprep.subr.mxu0 0.0
        %1554 = vmatpush2.msra.mxu0 0.0
        %1555 = vmatprep.subr.mxu0 0.0
        %1556 = vmatpush2.msra.mxu0 0.0
        %1557 = vmatprep.subr.mxu0 0.0
        %1558 = vmatpush2.msra.mxu0 0.0
        %1559 = vmatprep.subr.mxu0 0.0
        %1560 = vmatpush2.msra.mxu0 0.0
        %1561 = vmatprep.subr.mxu0 0.0
        %1562 = vmatpush2.msra.mxu0 0.0
        %1563 = vmatprep.subr.mxu0 0.0
        %1564 = vmatpush2.msra.mxu0 0.0
        %1565 = vmatprep.subr.mxu0 0.0
        %1566 = vmatpush2.msra.mxu0 0.0
        %1567 = vmatprep.subr.mxu0 0.0
        %1568 = vmatpush2.msra.mxu0 0.0
        %1569 = vmatprep.subr.mxu0 0.0
        %1570 = vmatpush2.msra.mxu0 0.0
        %1571 = vmatprep.subr.mxu0 0.0
        %1572 = vmatpush2.msra.mxu0 0.0
        %1573 = vmatprep.subr.mxu0 0.0
        %1574 = vmatpush2.msra.mxu0 0.0
        %1575 = vmatprep.subr.mxu0 0.0
        %1576 = vmatpush2.msra.mxu0 0.0
        %1577 = vmatprep.subr.mxu0 0.0
        %1578 = vmatpush2.msra.mxu0 0.0
        %1579 = vmatprep.subr.mxu0 0.0
        %1580 = vmatpush2.msra.mxu0 0.0
        %1581 = vmatprep.subr.mxu0 0.0
        %1582 = vmatpush2.msra.mxu0 0.0
        %1583 = vmatprep.mubr.f32.mxu0 0.0
        %1584 = vmatmul.mubr.f32.gmra.mxu0 %v1517
        %v1585 = vpop.f32.mrf.mxu0
        %v1586 = vadd.f32 0.0, %v1585
        %v1587 = vpop.f32.mrf.mxu0
        %1588 = vdwg.mxu0
        %1590 = vrot.lane.b32.xlu0 %v1434, 8
        %v1591 = vpop.permute.xlu0 %1590
        %1594 = vrot.lane.b32.xlu0 %v1510, 16
        %v1595 = vpop.permute.xlu0 %1594
        %1598 = vrot.lane.b32.xlu0 %v1586, 24
        %v1599 = vpop.permute.xlu0 %1598
        %v1601 = vsel %vm924, %v1358, %v1591
        %vm1602 = vcmask 130048
        %v1603 = vsel %vm1602, %v1601, %v1595
        %vm1604 = vcmask 195584
        %v1605 = vsel %vm1604, %v1603, %v1599
        %v1606 = vld [vmem:[%s6] sm:$0xff]
        %v1607 = vld [vmem:[%s6 + $0x8] sm:$0xff]
        %v1608 = vld [vmem:[%s6 + $0x10] sm:$0xff]
        %v1609 = vld [vmem:[%s6 + $0x18] sm:$0xff]
        %v1610 = vld [vmem:[%s7] sm:$0x1]
        %v1612 = vlaneseq
        %v1613 = vshrl.u32 %v1612, 7
        %v1614 = vsub.s32 0, %v1613
        %v1615 = vrot.slane %v1610, %v1614
        %v1618 = vsel %vm841, %v1605, 0
        %1620 = vmatprep.subr.mxu0 0.0
        %1621 = vmatpush1.msra.mxu0 0.0
        %1622 = vmatprep.subr.mxu0 0.0
        %1623 = vmatpush1.msra.mxu0 0.0
        %1624 = vmatprep.subr.mxu0 0.0
        %1625 = vmatpush1.msra.mxu0 0.0
        %1626 = vmatprep.subr.mxu0 0.0
        %1627 = vmatpush1.msra.mxu0 0.0
        %1628 = vmatprep.subr.mxu0 0.0
        %1629 = vmatpush1.msra.mxu0 0.0
        %1630 = vmatprep.subr.mxu0 0.0
        %1631 = vmatpush1.msra.mxu0 0.0
        %1632 = vmatprep.subr.mxu0 0.0
        %1633 = vmatpush1.msra.mxu0 0.0
        %1634 = vmatprep.subr.mxu0 0.0
        %1635 = vmatpush1.msra.mxu0 0.0
        %1636 = vmatprep.subr.mxu0 0.0
        %1637 = vmatpush1.msra.mxu0 0.0
        %1638 = vmatprep.subr.mxu0 0.0
        %1639 = vmatpush1.msra.mxu0 0.0
        %1640 = vmatprep.subr.mxu0 0.0
        %1641 = vmatpush1.msra.mxu0 0.0
        %1642 = vmatprep.subr.mxu0 0.0
        %1643 = vmatpush1.msra.mxu0 0.0
        %1644 = vmatprep.subr.mxu0 0.0
        %1645 = vmatpush1.msra.mxu0 %v1609
        %1646 = vmatprep.subr.mxu0 0.0
        %1647 = vmatpush1.msra.mxu0 %v1608
        %1648 = vmatprep.subr.mxu0 0.0
        %1649 = vmatpush1.msra.mxu0 %v1607
        %1650 = vmatprep.subr.mxu0 0.0
        %1651 = vmatpush1.msra.mxu0 %v1606
        %1652 = vmatprep.subr.mxu0 0.0
        %1653 = vmatpush2.msra.mxu0 0.0
        %1654 = vmatprep.subr.mxu0 0.0
        %1655 = vmatpush2.msra.mxu0 0.0
        %1656 = vmatprep.subr.mxu0 0.0
        %1657 = vmatpush2.msra.mxu0 0.0
        %1658 = vmatprep.subr.mxu0 0.0
        %1659 = vmatpush2.msra.mxu0 0.0
        %1660 = vmatprep.subr.mxu0 0.0
        %1661 = vmatpush2.msra.mxu0 0.0
        %1662 = vmatprep.subr.mxu0 0.0
        %1663 = vmatpush2.msra.mxu0 0.0
        %1664 = vmatprep.subr.mxu0 0.0
        %1665 = vmatpush2.msra.mxu0 0.0
        %1666 = vmatprep.subr.mxu0 0.0
        %1667 = vmatpush2.msra.mxu0 0.0
        %1668 = vmatprep.subr.mxu0 0.0
        %1669 = vmatpush2.msra.mxu0 0.0
        %1670 = vmatprep.subr.mxu0 0.0
        %1671 = vmatpush2.msra.mxu0 0.0
        %1672 = vmatprep.subr.mxu0 0.0
        %1673 = vmatpush2.msra.mxu0 0.0
        %1674 = vmatprep.subr.mxu0 0.0
        %1675 = vmatpush2.msra.mxu0 0.0
        %1676 = vmatprep.subr.mxu0 0.0
        %1677 = vmatpush2.msra.mxu0 0.0
        %1678 = vmatprep.subr.mxu0 0.0
        %1679 = vmatpush2.msra.mxu0 0.0
        %1680 = vmatprep.subr.mxu0 0.0
        %1681 = vmatpush2.msra.mxu0 0.0
        %1682 = vmatprep.subr.mxu0 0.0
        %1683 = vmatpush2.msra.mxu0 0.0
        %1684 = vmatprep.mubr.f32.mxu0 0.0
        %1685 = vmatmul.mubr.f32.gmra.mxu0 %v1618
        %v1686 = vpop.f32.mrf.mxu0
        %v1687 = vadd.f32 %v1615, %v1686
        %v1688 = vpop.f32.mrf.mxu0
        %1689 = vdwg.mxu0
        %v1690 = vadd.f32 %v819, %v1687
        %v1691 = vsel %vm841, %v1690, 0.0
        %1692 = vadd.xlane.f32.xlu0 %v1691
        %v1693 = vpop.xlane.xlu0 %1692
        %v1694 = vrcp.pop 32.0
        %v1695 = vmul.f32 %v1693, %v1694
        %v1696 = vsub.f32 %v1690, %v1695
        %v1697 = vmul.f32 %v1696, %v1696
        %v1698 = vsel %vm841, %v1697, 0.0
        %1699 = vadd.xlane.f32.xlu0 %v1698
        %v1700 = vpop.xlane.xlu0 %1699
        %v1701 = vmul.f32 %v1700, %v1694
        %v1702 = vadd.f32 %v1701, 1e-06
        %v1703 = vrsqrt.pop %v1702
        %v1704 = vmul.f32 %v1696, %v1703
        %v1705 = vlaneseq
        %v1706 = vshrl.u32 %v1705, 7
        %v1707 = vsub.s32 0, %v1706
        %v1708 = vrot.slane %v822, %v1707
        %v1709 = vmul.f32 %v1704, %v1708
        %v1710 = vlaneseq
        %v1711 = vshrl.u32 %v1710, 7
        %v1712 = vsub.s32 0, %v1711
        %v1713 = vrot.slane %v823, %v1712
        %v1714 = vadd.f32 %v1709, %v1713
        %v1715 = vsel %vm841, %v820, 0.0
        %v1716 = vsel %vm841, %v821, 0.0
        %v1717 = vadd.f32 %v1715, %v1716
        %v1718 = vrot.slane %v1717, 4
        %v1719 = vadd.f32 %v1717, %v1718
        %v1720 = vrot.slane %v1719, 2
        %v1721 = vadd.f32 %v1719, %v1720
        %v1722 = vrot.slane %v1721, 1
        %v1723 = vadd.f32 %v1721, %v1722
        %v1724 = vrcp.pop 16.0
        %v1725 = vmul.f32 %v1723, %v1724
        %v1726 = vld [vmem:[%s14] sm:$0xff]
        %v1727 = vld [vmem:[%s14 + $0x8] sm:$0xff]
        %v1728 = vld [vmem:[%s14 + $0x10] sm:$0xff]
        %v1729 = vld [vmem:[%s14 + $0x18] sm:$0xff]
        %v1731 = vsel %vm841, %v1725, 0
        %1733 = vmatprep.subr.mxu0 0.0
        %1734 = vmatpush1.msra.mxu0 0.0
        %1735 = vmatprep.subr.mxu0 0.0
        %1736 = vmatpush1.msra.mxu0 0.0
        %1737 = vmatprep.subr.mxu0 0.0
        %1738 = vmatpush1.msra.mxu0 0.0
        %1739 = vmatprep.subr.mxu0 0.0
        %1740 = vmatpush1.msra.mxu0 0.0
        %1741 = vmatprep.subr.mxu0 0.0
        %1742 = vmatpush1.msra.mxu0 0.0
        %1743 = vmatprep.subr.mxu0 0.0
        %1744 = vmatpush1.msra.mxu0 0.0
        %1745 = vmatprep.subr.mxu0 0.0
        %1746 = vmatpush1.msra.mxu0 0.0
        %1747 = vmatprep.subr.mxu0 0.0
        %1748 = vmatpush1.msra.mxu0 0.0
        %1749 = vmatprep.subr.mxu0 0.0
        %1750 = vmatpush1.msra.mxu0 0.0
        %1751 = vmatprep.subr.mxu0 0.0
        %1752 = vmatpush1.msra.mxu0 0.0
        %1753 = vmatprep.subr.mxu0 0.0
        %1754 = vmatpush1.msra.mxu0 0.0
        %1755 = vmatprep.subr.mxu0 0.0
        %1756 = vmatpush1.msra.mxu0 0.0
        %1757 = vmatprep.subr.mxu0 0.0
        %1758 = vmatpush1.msra.mxu0 %v1729
        %1759 = vmatprep.subr.mxu0 0.0
        %1760 = vmatpush1.msra.mxu0 %v1728
        %1761 = vmatprep.subr.mxu0 0.0
        %1762 = vmatpush1.msra.mxu0 %v1727
        %1763 = vmatprep.subr.mxu0 0.0
        %1764 = vmatpush1.msra.mxu0 %v1726
        %1765 = vmatprep.subr.mxu0 0.0
        %1766 = vmatpush2.msra.mxu0 0.0
        %1767 = vmatprep.subr.mxu0 0.0
        %1768 = vmatpush2.msra.mxu0 0.0
        %1769 = vmatprep.subr.mxu0 0.0
        %1770 = vmatpush2.msra.mxu0 0.0
        %1771 = vmatprep.subr.mxu0 0.0
        %1772 = vmatpush2.msra.mxu0 0.0
        %1773 = vmatprep.subr.mxu0 0.0
        %1774 = vmatpush2.msra.mxu0 0.0
        %1775 = vmatprep.subr.mxu0 0.0
        %1776 = vmatpush2.msra.mxu0 0.0
        %1777 = vmatprep.subr.mxu0 0.0
        %1778 = vmatpush2.msra.mxu0 0.0
        %1779 = vmatprep.subr.mxu0 0.0
        %1780 = vmatpush2.msra.mxu0 0.0
        %1781 = vmatprep.subr.mxu0 0.0
        %1782 = vmatpush2.msra.mxu0 0.0
        %1783 = vmatprep.subr.mxu0 0.0
        %1784 = vmatpush2.msra.mxu0 0.0
        %1785 = vmatprep.subr.mxu0 0.0
        %1786 = vmatpush2.msra.mxu0 0.0
        %1787 = vmatprep.subr.mxu0 0.0
        %1788 = vmatpush2.msra.mxu0 0.0
        %1789 = vmatprep.subr.mxu0 0.0
        %1790 = vmatpush2.msra.mxu0 0.0
        %1791 = vmatprep.subr.mxu0 0.0
        %1792 = vmatpush2.msra.mxu0 0.0
        %1793 = vmatprep.subr.mxu0 0.0
        %1794 = vmatpush2.msra.mxu0 0.0
        %1795 = vmatprep.subr.mxu0 0.0
        %1796 = vmatpush2.msra.mxu0 0.0
        %1797 = vmatprep.mubr.f32.mxu0 0.0
        %1798 = vmatmul.mubr.f32.gmra.mxu0 %v1731
        %v1799 = vpop.f32.mrf.mxu0
        %v1800 = vadd.f32 0.0, %v1799
        %v1801 = vpop.f32.mrf.mxu0
        %1802 = vdwg.mxu0
        %v1803 = vmax.f32 %v1800, 0.0
        %v1804 = vld [vmem:[%s15] sm:$0xff]
        %v1805 = vld [vmem:[%s15 + $0x8] sm:$0xff]
        %v1806 = vld [vmem:[%s16] sm:$0x1]
        %v1808 = vsel %vm1602, %v1803, 0
        %1810 = vmatprep.subr.mxu0 0.0
        %1811 = vmatpush1.msra.mxu0 0.0
        %1812 = vmatprep.subr.mxu0 0.0
        %1813 = vmatpush1.msra.mxu0 0.0
        %1814 = vmatprep.subr.mxu0 0.0
        %1815 = vmatpush1.msra.mxu0 0.0
        %1816 = vmatprep.subr.mxu0 0.0
        %1817 = vmatpush1.msra.mxu0 0.0
        %1818 = vmatprep.subr.mxu0 0.0
        %1819 = vmatpush1.msra.mxu0 0.0
        %1820 = vmatprep.subr.mxu0 0.0
        %1821 = vmatpush1.msra.mxu0 0.0
        %1822 = vmatprep.subr.mxu0 0.0
        %1823 = vmatpush1.msra.mxu0 0.0
        %1824 = vmatprep.subr.mxu0 0.0
        %1825 = vmatpush1.msra.mxu0 0.0
        %1826 = vmatprep.subr.mxu0 0.0
        %1827 = vmatpush1.msra.mxu0 0.0
        %1828 = vmatprep.subr.mxu0 0.0
        %1829 = vmatpush1.msra.mxu0 0.0
        %1830 = vmatprep.subr.mxu0 0.0
        %1831 = vmatpush1.msra.mxu0 0.0
        %1832 = vmatprep.subr.mxu0 0.0
        %1833 = vmatpush1.msra.mxu0 0.0
        %1834 = vmatprep.subr.mxu0 0.0
        %1835 = vmatpush1.msra.mxu0 0.0
        %1836 = vmatprep.subr.mxu0 0.0
        %1837 = vmatpush1.msra.mxu0 0.0
        %1838 = vmatprep.subr.mxu0 0.0
        %1839 = vmatpush1.msra.mxu0 %v1805
        %1840 = vmatprep.subr.mxu0 0.0
        %1841 = vmatpush1.msra.mxu0 %v1804
        %1842 = vmatprep.subr.mxu0 0.0
        %1843 = vmatpush2.msra.mxu0 0.0
        %1844 = vmatprep.subr.mxu0 0.0
        %1845 = vmatpush2.msra.mxu0 0.0
        %1846 = vmatprep.subr.mxu0 0.0
        %1847 = vmatpush2.msra.mxu0 0.0
        %1848 = vmatprep.subr.mxu0 0.0
        %1849 = vmatpush2.msra.mxu0 0.0
        %1850 = vmatprep.subr.mxu0 0.0
        %1851 = vmatpush2.msra.mxu0 0.0
        %1852 = vmatprep.subr.mxu0 0.0
        %1853 = vmatpush2.msra.mxu0 0.0
        %1854 = vmatprep.subr.mxu0 0.0
        %1855 = vmatpush2.msra.mxu0 0.0
        %1856 = vmatprep.subr.mxu0 0.0
        %1857 = vmatpush2.msra.mxu0 0.0
        %1858 = vmatprep.subr.mxu0 0.0
        %1859 = vmatpush2.msra.mxu0 0.0
        %1860 = vmatprep.subr.mxu0 0.0
        %1861 = vmatpush2.msra.mxu0 0.0
        %1862 = vmatprep.subr.mxu0 0.0
        %1863 = vmatpush2.msra.mxu0 0.0
        %1864 = vmatprep.subr.mxu0 0.0
        %1865 = vmatpush2.msra.mxu0 0.0
        %1866 = vmatprep.subr.mxu0 0.0
        %1867 = vmatpush2.msra.mxu0 0.0
        %1868 = vmatprep.subr.mxu0 0.0
        %1869 = vmatpush2.msra.mxu0 0.0
        %1870 = vmatprep.subr.mxu0 0.0
        %1871 = vmatpush2.msra.mxu0 0.0
        %1872 = vmatprep.subr.mxu0 0.0
        %1873 = vmatpush2.msra.mxu0 0.0
        %1874 = vmatprep.mubr.f32.mxu0 0.0
        %1875 = vmatmul.mubr.f32.gmra.mxu0 %v1808
        %v1876 = vpop.f32.mrf.mxu0
        %v1877 = vadd.f32 %v1806, %v1876
        %v1878 = vpop.f32.mrf.mxu0
        %1879 = vdwg.mxu0
        %vm1880 = vcmask 8192
        %v1881 = vsel %vm1880, %v1877, -inf
        %1882 = vmax.xlane.f32.xlu0 %v1881
        %v1883 = vpop.xlane.xlu0 %1882
        %v1884 = vsub.f32 %v1877, %v1883
        %v1885 = vmul.f32 %v1884, 1.442695
        %v1886 = vpow.pop %v1885
        %v1887 = vsel %vm1880, %v1886, 0.0
        %1888 = vadd.xlane.f32.xlu0 %v1887
        %v1889 = vpop.xlane.xlu0 %1888
        %v1890 = vrcp.pop %v1889
        %v1891 = vmul.f32 %v1886, %v1890
        %v1892 = vld [vmem:[%s10] sm:$0xff]
        %v1893 = vld [vmem:[%s10 + $0x8] sm:$0xff]
        %v1894 = vld [vmem:[%s10 + $0x10] sm:$0xff]
        %v1895 = vld [vmem:[%s10 + $0x18] sm:$0xff]
        %v1896 = vld [vmem:[%s11] sm:$0x1]
        %v1898 = vlaneseq
        %v1899 = vshrl.u32 %v1898, 7
        %v1900 = vsub.s32 0, %v1899
        %v1901 = vrot.slane %v1896, %v1900
        %v1904 = vsel %vm841, %v820, 0
        %v1907 = vsel %vm841, %v821, 0
        %1909 = vmatprep.subr.mxu0 0.0
        %1910 = vmatpush1.msra.mxu0 0.0
        %1911 = vmatprep.subr.mxu0 0.0
        %1912 = vmatpush1.msra.mxu0 0.0
        %1913 = vmatprep.subr.mxu0 0.0
        %1914 = vmatpush1.msra.mxu0 0.0
        %1915 = vmatprep.subr.mxu0 0.0
        %1916 = vmatpush1.msra.mxu0 0.0
        %1917 = vmatprep.subr.mxu0 0.0
        %1918 = vmatpush1.msra.mxu0 0.0
        %1919 = vmatprep.subr.mxu0 0.0
        %1920 = vmatpush1.msra.mxu0 0.0
        %1921 = vmatprep.subr.mxu0 0.0
        %1922 = vmatpush1.msra.mxu0 0.0
        %1923 = vmatprep.subr.mxu0 0.0
        %1924 = vmatpush1.msra.mxu0 0.0
        %1925 = vmatprep.subr.mxu0 0.0
        %1926 = vmatpush1.msra.mxu0 0.0
        %1927 = vmatprep.subr.mxu0 0.0
        %1928 = vmatpush1.msra.mxu0 0.0
        %1929 = vmatprep.subr.mxu0 0.0
        %1930 = vmatpush1.msra.mxu0 0.0
        %1931 = vmatprep.subr.mxu0 0.0
        %1932 = vmatpush1.msra.mxu0 0.0
        %1933 = vmatprep.subr.mxu0 0.0
        %1934 = vmatpush1.msra.mxu0 %v1895
        %1935 = vmatprep.subr.mxu0 0.0
        %1936 = vmatpush1.msra.mxu0 %v1894
        %1937 = vmatprep.subr.mxu0 0.0
        %1938 = vmatpush1.msra.mxu0 %v1893
        %1939 = vmatprep.subr.mxu0 0.0
        %1940 = vmatpush1.msra.mxu0 %v1892
        %1941 = vmatprep.subr.mxu0 0.0
        %1942 = vmatpush2.msra.mxu0 0.0
        %1943 = vmatprep.subr.mxu0 0.0
        %1944 = vmatpush2.msra.mxu0 0.0
        %1945 = vmatprep.subr.mxu0 0.0
        %1946 = vmatpush2.msra.mxu0 0.0
        %1947 = vmatprep.subr.mxu0 0.0
        %1948 = vmatpush2.msra.mxu0 0.0
        %1949 = vmatprep.subr.mxu0 0.0
        %1950 = vmatpush2.msra.mxu0 0.0
        %1951 = vmatprep.subr.mxu0 0.0
        %1952 = vmatpush2.msra.mxu0 0.0
        %1953 = vmatprep.subr.mxu0 0.0
        %1954 = vmatpush2.msra.mxu0 0.0
        %1955 = vmatprep.subr.mxu0 0.0
        %1956 = vmatpush2.msra.mxu0 0.0
        %1957 = vmatprep.subr.mxu0 0.0
        %1958 = vmatpush2.msra.mxu0 0.0
        %1959 = vmatprep.subr.mxu0 0.0
        %1960 = vmatpush2.msra.mxu0 0.0
        %1961 = vmatprep.subr.mxu0 0.0
        %1962 = vmatpush2.msra.mxu0 0.0
        %1963 = vmatprep.subr.mxu0 0.0
        %1964 = vmatpush2.msra.mxu0 0.0
        %1965 = vmatprep.subr.mxu0 0.0
        %1966 = vmatpush2.msra.mxu0 0.0
        %1967 = vmatprep.subr.mxu0 0.0
        %1968 = vmatpush2.msra.mxu0 0.0
        %1969 = vmatprep.subr.mxu0 0.0
        %1970 = vmatpush2.msra.mxu0 0.0
        %1971 = vmatprep.subr.mxu0 0.0
        %1972 = vmatpush2.msra.mxu0 0.0
        %1973 = vmatprep.mubr.f32.mxu0 0.0
        %1974 = vmatmul.mubr.f32.gmra.mxu0 %v1904
        %v1975 = vpop.f32.mrf.mxu0
        %v1976 = vadd.f32 %v1901, %v1975
        %v1977 = vpop.f32.mrf.mxu0
        %1978 = vmatprep.mubr.f32.mxu0 0.0
        %1979 = vmatmul.mubr.f32.gmra.mxu0 %v1907
        %v1980 = vpop.f32.mrf.mxu0
        %v1981 = vadd.f32 %v1901, %v1980
        %v1982 = vpop.f32.mrf.mxu0
        %1983 = vdwg.mxu0
        %1986 = vrot.lane.b32.xlu0 %v1976, 120
        %v1987 = vpop.permute.xlu0 %1986
        %1988 = vrot.lane.b32.xlu0 %v1981, 120
        %v1989 = vpop.permute.xlu0 %1988
        %1990 = vrot.lane.b32.xlu0 %v1976, 112
        %v1991 = vpop.permute.xlu0 %1990
        %1992 = vrot.lane.b32.xlu0 %v1981, 112
        %v1993 = vpop.permute.xlu0 %1992
        %1994 = vrot.lane.b32.xlu0 %v1976, 104
        %v1995 = vpop.permute.xlu0 %1994
        %1996 = vrot.lane.b32.xlu0 %v1981, 104
        %v1997 = vpop.permute.xlu0 %1996
        %v1998 = vld [vmem:[%s8] sm:$0xff]
        %v1999 = vld [vmem:[%s8 + $0x8] sm:$0xff]
        %v2000 = vld [vmem:[%s8 + $0x10] sm:$0xff]
        %v2001 = vld [vmem:[%s8 + $0x18] sm:$0xff]
        %v2002 = vld [vmem:[%s9] sm:$0x1]
        %v2004 = vlaneseq
        %v2005 = vshrl.u32 %v2004, 7
        %v2006 = vsub.s32 0, %v2005
        %v2007 = vrot.slane %v2002, %v2006
        %v2010 = vsel %vm841, %v1714, 0
        %2012 = vmatprep.subr.mxu0 0.0
        %2013 = vmatpush1.msra.mxu0 0.0
        %2014 = vmatprep.subr.mxu0 0.0
        %2015 = vmatpush1.msra.mxu0 0.0
        %2016 = vmatprep.subr.mxu0 0.0
        %2017 = vmatpush1.msra.mxu0 0.0
        %2018 = vmatprep.subr.mxu0 0.0
        %2019 = vmatpush1.msra.mxu0 0.0
        %2020 = vmatprep.subr.mxu0 0.0
        %2021 = vmatpush1.msra.mxu0 0.0
        %2022 = vmatprep.subr.mxu0 0.0
        %2023 = vmatpush1.msra.mxu0 0.0
        %2024 = vmatprep.subr.mxu0 0.0
        %2025 = vmatpush1.msra.mxu0 0.0
        %2026 = vmatprep.subr.mxu0 0.0
        %2027 = vmatpush1.msra.mxu0 0.0
        %2028 = vmatprep.subr.mxu0 0.0
        %2029 = vmatpush1.msra.mxu0 0.0
        %2030 = vmatprep.subr.mxu0 0.0
        %2031 = vmatpush1.msra.mxu0 0.0
        %2032 = vmatprep.subr.mxu0 0.0
        %2033 = vmatpush1.msra.mxu0 0.0
        %2034 = vmatprep.subr.mxu0 0.0
        %2035 = vmatpush1.msra.mxu0 0.0
        %2036 = vmatprep.subr.mxu0 0.0
        %2037 = vmatpush1.msra.mxu0 %v2001
        %2038 = vmatprep.subr.mxu0 0.0
        %2039 = vmatpush1.msra.mxu0 %v2000
        %2040 = vmatprep.subr.mxu0 0.0
        %2041 = vmatpush1.msra.mxu0 %v1999
        %2042 = vmatprep.subr.mxu0 0.0
        %2043 = vmatpush1.msra.mxu0 %v1998
        %2044 = vmatprep.subr.mxu0 0.0
        %2045 = vmatpush2.msra.mxu0 0.0
        %2046 = vmatprep.subr.mxu0 0.0
        %2047 = vmatpush2.msra.mxu0 0.0
        %2048 = vmatprep.subr.mxu0 0.0
        %2049 = vmatpush2.msra.mxu0 0.0
        %2050 = vmatprep.subr.mxu0 0.0
        %2051 = vmatpush2.msra.mxu0 0.0
        %2052 = vmatprep.subr.mxu0 0.0
        %2053 = vmatpush2.msra.mxu0 0.0
        %2054 = vmatprep.subr.mxu0 0.0
        %2055 = vmatpush2.msra.mxu0 0.0
        %2056 = vmatprep.subr.mxu0 0.0
        %2057 = vmatpush2.msra.mxu0 0.0
        %2058 = vmatprep.subr.mxu0 0.0
        %2059 = vmatpush2.msra.mxu0 0.0
        %2060 = vmatprep.subr.mxu0 0.0
        %2061 = vmatpush2.msra.mxu0 0.0
        %2062 = vmatprep.subr.mxu0 0.0
        %2063 = vmatpush2.msra.mxu0 0.0
        %2064 = vmatprep.subr.mxu0 0.0
        %2065 = vmatpush2.msra.mxu0 0.0
        %2066 = vmatprep.subr.mxu0 0.0
        %2067 = vmatpush2.msra.mxu0 0.0
        %2068 = vmatprep.subr.mxu0 0.0
        %2069 = vmatpush2.msra.mxu0 0.0
        %2070 = vmatprep.subr.mxu0 0.0
        %2071 = vmatpush2.msra.mxu0 0.0
        %2072 = vmatprep.subr.mxu0 0.0
        %2073 = vmatpush2.msra.mxu0 0.0
        %2074 = vmatprep.subr.mxu0 0.0
        %2075 = vmatpush2.msra.mxu0 0.0
        %2076 = vmatprep.mubr.f32.mxu0 0.0
        %2077 = vmatmul.mubr.f32.gmra.mxu0 %v2010
        %v2078 = vpop.f32.mrf.mxu0
        %v2079 = vadd.f32 %v2007, %v2078
        %v2080 = vpop.f32.mrf.mxu0
        %2081 = vdwg.mxu0
        %2083 = vrot.lane.b32.xlu0 %v2079, 120
        %v2084 = vpop.permute.xlu0 %2083
        %2085 = vrot.lane.b32.xlu0 %v2079, 112
        %v2086 = vpop.permute.xlu0 %2085
        %2087 = vrot.lane.b32.xlu0 %v2079, 104
        %v2088 = vpop.permute.xlu0 %2087
        %v2089 = vsel %vm924, %v2079, 0
        %v2091 = vsel %vm924, %v1976, 0
        %v2093 = vsel %vm924, %v1981, 0
        %2095 = vmatprep.subr.mxu0 0.0
        %2096 = vmatpush1.xpose.msra.mxu0 0.0
        %2097 = vmatprep.subr.mxu0 0.0
        %2098 = vmatpush1.xpose.msra.mxu0 0.0
        %2099 = vmatprep.subr.mxu0 0.0
        %2100 = vmatpush1.xpose.msra.mxu0 0.0
        %2101 = vmatprep.subr.mxu0 0.0
        %2102 = vmatpush1.xpose.msra.mxu0 0.0
        %2103 = vmatprep.subr.mxu0 0.0
        %2104 = vmatpush1.xpose.msra.mxu0 0.0
        %2105 = vmatprep.subr.mxu0 0.0
        %2106 = vmatpush1.xpose.msra.mxu0 0.0
        %2107 = vmatprep.subr.mxu0 0.0
        %2108 = vmatpush1.xpose.msra.mxu0 0.0
        %2109 = vmatprep.subr.mxu0 0.0
        %2110 = vmatpush1.xpose.msra.mxu0 0.0
        %2111 = vmatprep.subr.mxu0 0.0
        %2112 = vmatpush1.xpose.msra.mxu0 0.0
        %2113 = vmatprep.subr.mxu0 0.0
        %2114 = vmatpush1.xpose.msra.mxu0 0.0
        %2115 = vmatprep.subr.mxu0 0.0
        %2116 = vmatpush1.xpose.msra.mxu0 0.0
        %2117 = vmatprep.subr.mxu0 0.0
        %2118 = vmatpush1.xpose.msra.mxu0 0.0
        %2119 = vmatprep.subr.mxu0 0.0
        %2120 = vmatpush1.xpose.msra.mxu0 0.0
        %2121 = vmatprep.subr.mxu0 0.0
        %2122 = vmatpush1.xpose.msra.mxu0 0.0
        %2123 = vmatprep.subr.mxu0 0.0
        %2124 = vmatpush1.xpose.msra.mxu0 %v2093
        %2125 = vmatprep.subr.mxu0 0.0
        %2126 = vmatpush1.xpose.msra.mxu0 %v2091
        %2127 = vmatprep.subr.mxu0 0.0
        %2128 = vmatpush2.xpose.msra.mxu0 0.0
        %2129 = vmatprep.subr.mxu0 0.0
        %2130 = vmatpush2.xpose.msra.mxu0 0.0
        %2131 = vmatprep.subr.mxu0 0.0
        %2132 = vmatpush2.xpose.msra.mxu0 0.0
        %2133 = vmatprep.subr.mxu0 0.0
        %2134 = vmatpush2.xpose.msra.mxu0 0.0
        %2135 = vmatprep.subr.mxu0 0.0
        %2136 = vmatpush2.xpose.msra.mxu0 0.0
        %2137 = vmatprep.subr.mxu0 0.0
        %2138 = vmatpush2.xpose.msra.mxu0 0.0
        %2139 = vmatprep.subr.mxu0 0.0
        %2140 = vmatpush2.xpose.msra.mxu0 0.0
        %2141 = vmatprep.subr.mxu0 0.0
        %2142 = vmatpush2.xpose.msra.mxu0 0.0
        %2143 = vmatprep.subr.mxu0 0.0
        %2144 = vmatpush2.xpose.msra.mxu0 0.0
        %2145 = vmatprep.subr.mxu0 0.0
        %2146 = vmatpush2.xpose.msra.mxu0 0.0
        %2147 = vmatprep.subr.mxu0 0.0
        %2148 = vmatpush2.xpose.msra.mxu0 0.0
        %2149 = vmatprep.subr.mxu0 0.0
        %2150 = vmatpush2.xpose.msra.mxu0 0.0
        %2151 = vmatprep.subr.mxu0 0.0
        %2152 = vmatpush2.xpose.msra.mxu0 0.0
        %2153 = vmatprep.subr.mxu0 0.0
        %2154 = vmatpush2.xpose.msra.mxu0 0.0
        %2155 = vmatprep.subr.mxu0 0.0
        %2156 = vmatpush2.xpose.msra.mxu0 0.0
        %2157 = vmatprep.subr.mxu0 0.0
        %2158 = vmatpush2.xpose.msra.mxu0 0.0
        %2159 = vmatprep.mubr.f32.mxu0 0.0
        %2160 = vmatmul.mubr.f32.gmra.mxu0 %v2089
        %v2161 = vpop.f32.mrf.mxu0
        %v2162 = vadd.f32 0.0, %v2161
        %v2163 = vpop.f32.mrf.mxu0
        %2164 = vdwg.mxu0
        %v2165 = vsel %vm924, %v2084, 0
        %v2167 = vsel %vm924, %v1987, 0
        %v2169 = vsel %vm924, %v1989, 0
        %2171 = vmatprep.subr.mxu0 0.0
        %2172 = vmatpush1.xpose.msra.mxu0 0.0
        %2173 = vmatprep.subr.mxu0 0.0
        %2174 = vmatpush1.xpose.msra.mxu0 0.0
        %2175 = vmatprep.subr.mxu0 0.0
        %2176 = vmatpush1.xpose.msra.mxu0 0.0
        %2177 = vmatprep.subr.mxu0 0.0
        %2178 = vmatpush1.xpose.msra.mxu0 0.0
        %2179 = vmatprep.subr.mxu0 0.0
        %2180 = vmatpush1.xpose.msra.mxu0 0.0
        %2181 = vmatprep.subr.mxu0 0.0
        %2182 = vmatpush1.xpose.msra.mxu0 0.0
        %2183 = vmatprep.subr.mxu0 0.0
        %2184 = vmatpush1.xpose.msra.mxu0 0.0
        %2185 = vmatprep.subr.mxu0 0.0
        %2186 = vmatpush1.xpose.msra.mxu0 0.0
        %2187 = vmatprep.subr.mxu0 0.0
        %2188 = vmatpush1.xpose.msra.mxu0 0.0
        %2189 = vmatprep.subr.mxu0 0.0
        %2190 = vmatpush1.xpose.msra.mxu0 0.0
        %2191 = vmatprep.subr.mxu0 0.0
        %2192 = vmatpush1.xpose.msra.mxu0 0.0
        %2193 = vmatprep.subr.mxu0 0.0
        %2194 = vmatpush1.xpose.msra.mxu0 0.0
        %2195 = vmatprep.subr.mxu0 0.0
        %2196 = vmatpush1.xpose.msra.mxu0 0.0
        %2197 = vmatprep.subr.mxu0 0.0
        %2198 = vmatpush1.xpose.msra.mxu0 0.0
        %2199 = vmatprep.subr.mxu0 0.0
        %2200 = vmatpush1.xpose.msra.mxu0 %v2169
        %2201 = vmatprep.subr.mxu0 0.0
        %2202 = vmatpush1.xpose.msra.mxu0 %v2167
        %2203 = vmatprep.subr.mxu0 0.0
        %2204 = vmatpush2.xpose.msra.mxu0 0.0
        %2205 = vmatprep.subr.mxu0 0.0
        %2206 = vmatpush2.xpose.msra.mxu0 0.0
        %2207 = vmatprep.subr.mxu0 0.0
        %2208 = vmatpush2.xpose.msra.mxu0 0.0
        %2209 = vmatprep.subr.mxu0 0.0
        %2210 = vmatpush2.xpose.msra.mxu0 0.0
        %2211 = vmatprep.subr.mxu0 0.0
        %2212 = vmatpush2.xpose.msra.mxu0 0.0
        %2213 = vmatprep.subr.mxu0 0.0
        %2214 = vmatpush2.xpose.msra.mxu0 0.0
        %2215 = vmatprep.subr.mxu0 0.0
        %2216 = vmatpush2.xpose.msra.mxu0 0.0
        %2217 = vmatprep.subr.mxu0 0.0
        %2218 = vmatpush2.xpose.msra.mxu0 0.0
        %2219 = vmatprep.subr.mxu0 0.0
        %2220 = vmatpush2.xpose.msra.mxu0 0.0
        %2221 = vmatprep.subr.mxu0 0.0
        %2222 = vmatpush2.xpose.msra.mxu0 0.0
        %2223 = vmatprep.subr.mxu0 0.0
        %2224 = vmatpush2.xpose.msra.mxu0 0.0
        %2225 = vmatprep.subr.mxu0 0.0
        %2226 = vmatpush2.xpose.msra.mxu0 0.0
        %2227 = vmatprep.subr.mxu0 0.0
        %2228 = vmatpush2.xpose.msra.mxu0 0.0
        %2229 = vmatprep.subr.mxu0 0.0
        %2230 = vmatpush2.xpose.msra.mxu0 0.0
        %2231 = vmatprep.subr.mxu0 0.0
        %2232 = vmatpush2.xpose.msra.mxu0 0.0
        %2233 = vmatprep.subr.mxu0 0.0
        %2234 = vmatpush2.xpose.msra.mxu0 0.0
        %2235 = vmatprep.mubr.f32.mxu0 0.0
        %2236 = vmatmul.mubr.f32.gmra.mxu0 %v2165
        %v2237 = vpop.f32.mrf.mxu0
        %v2238 = vadd.f32 0.0, %v2237
        %v2239 = vpop.f32.mrf.mxu0
        %2240 = vdwg.mxu0
        %v2241 = vsel %vm924, %v2086, 0
        %v2243 = vsel %vm924, %v1991, 0
        %v2245 = vsel %vm924, %v1993, 0
        %2247 = vmatprep.subr.mxu0 0.0
        %2248 = vmatpush1.xpose.msra.mxu0 0.0
        %2249 = vmatprep.subr.mxu0 0.0
        %2250 = vmatpush1.xpose.msra.mxu0 0.0
        %2251 = vmatprep.subr.mxu0 0.0
        %2252 = vmatpush1.xpose.msra.mxu0 0.0
        %2253 = vmatprep.subr.mxu0 0.0
        %2254 = vmatpush1.xpose.msra.mxu0 0.0
        %2255 = vmatprep.subr.mxu0 0.0
        %2256 = vmatpush1.xpose.msra.mxu0 0.0
        %2257 = vmatprep.subr.mxu0 0.0
        %2258 = vmatpush1.xpose.msra.mxu0 0.0
        %2259 = vmatprep.subr.mxu0 0.0
        %2260 = vmatpush1.xpose.msra.mxu0 0.0
        %2261 = vmatprep.subr.mxu0 0.0
        %2262 = vmatpush1.xpose.msra.mxu0 0.0
        %2263 = vmatprep.subr.mxu0 0.0
        %2264 = vmatpush1.xpose.msra.mxu0 0.0
        %2265 = vmatprep.subr.mxu0 0.0
        %2266 = vmatpush1.xpose.msra.mxu0 0.0
        %2267 = vmatprep.subr.mxu0 0.0
        %2268 = vmatpush1.xpose.msra.mxu0 0.0
        %2269 = vmatprep.subr.mxu0 0.0
        %2270 = vmatpush1.xpose.msra.mxu0 0.0
        %2271 = vmatprep.subr.mxu0 0.0
        %2272 = vmatpush1.xpose.msra.mxu0 0.0
        %2273 = vmatprep.subr.mxu0 0.0
        %2274 = vmatpush1.xpose.msra.mxu0 0.0
        %2275 = vmatprep.subr.mxu0 0.0
        %2276 = vmatpush1.xpose.msra.mxu0 %v2245
        %2277 = vmatprep.subr.mxu0 0.0
        %2278 = vmatpush1.xpose.msra.mxu0 %v2243
        %2279 = vmatprep.subr.mxu0 0.0
        %2280 = vmatpush2.xpose.msra.mxu0 0.0
        %2281 = vmatprep.subr.mxu0 0.0
        %2282 = vmatpush2.xpose.msra.mxu0 0.0
        %2283 = vmatprep.subr.mxu0 0.0
        %2284 = vmatpush2.xpose.msra.mxu0 0.0
        %2285 = vmatprep.subr.mxu0 0.0
        %2286 = vmatpush2.xpose.msra.mxu0 0.0
        %2287 = vmatprep.subr.mxu0 0.0
        %2288 = vmatpush2.xpose.msra.mxu0 0.0
        %2289 = vmatprep.subr.mxu0 0.0
        %2290 = vmatpush2.xpose.msra.mxu0 0.0
        %2291 = vmatprep.subr.mxu0 0.0
        %2292 = vmatpush2.xpose.msra.mxu0 0.0
        %2293 = vmatprep.subr.mxu0 0.0
        %2294 = vmatpush2.xpose.msra.mxu0 0.0
        %2295 = vmatprep.subr.mxu0 0.0
        %2296 = vmatpush2.xpose.msra.mxu0 0.0
        %2297 = vmatprep.subr.mxu0 0.0
        %2298 = vmatpush2.xpose.msra.mxu0 0.0
        %2299 = vmatprep.subr.mxu0 0.0
        %2300 = vmatpush2.xpose.msra.mxu0 0.0
        %2301 = vmatprep.subr.mxu0 0.0
        %2302 = vmatpush2.xpose.msra.mxu0 0.0
        %2303 = vmatprep.subr.mxu0 0.0
        %2304 = vmatpush2.xpose.msra.mxu0 0.0
        %2305 = vmatprep.subr.mxu0 0.0
        %2306 = vmatpush2.xpose.msra.mxu0 0.0
        %2307 = vmatprep.subr.mxu0 0.0
        %2308 = vmatpush2.xpose.msra.mxu0 0.0
        %2309 = vmatprep.subr.mxu0 0.0
        %2310 = vmatpush2.xpose.msra.mxu0 0.0
        %2311 = vmatprep.mubr.f32.mxu0 0.0
        %2312 = vmatmul.mubr.f32.gmra.mxu0 %v2241
        %v2313 = vpop.f32.mrf.mxu0
        %v2314 = vadd.f32 0.0, %v2313
        %v2315 = vpop.f32.mrf.mxu0
        %2316 = vdwg.mxu0
        %v2317 = vsel %vm924, %v2088, 0
        %v2319 = vsel %vm924, %v1995, 0
        %v2321 = vsel %vm924, %v1997, 0
        %2323 = vmatprep.subr.mxu0 0.0
        %2324 = vmatpush1.xpose.msra.mxu0 0.0
        %2325 = vmatprep.subr.mxu0 0.0
        %2326 = vmatpush1.xpose.msra.mxu0 0.0
        %2327 = vmatprep.subr.mxu0 0.0
        %2328 = vmatpush1.xpose.msra.mxu0 0.0
        %2329 = vmatprep.subr.mxu0 0.0
        %2330 = vmatpush1.xpose.msra.mxu0 0.0
        %2331 = vmatprep.subr.mxu0 0.0
        %2332 = vmatpush1.xpose.msra.mxu0 0.0
        %2333 = vmatprep.subr.mxu0 0.0
        %2334 = vmatpush1.xpose.msra.mxu0 0.0
        %2335 = vmatprep.subr.mxu0 0.0
        %2336 = vmatpush1.xpose.msra.mxu0 0.0
        %2337 = vmatprep.subr.mxu0 0.0
        %2338 = vmatpush1.xpose.msra.mxu0 0.0
        %2339 = vmatprep.subr.mxu0 0.0
        %2340 = vmatpush1.xpose.msra.mxu0 0.0
        %2341 = vmatprep.subr.mxu0 0.0
        %2342 = vmatpush1.xpose.msra.mxu0 0.0
        %2343 = vmatprep.subr.mxu0 0.0
        %2344 = vmatpush1.xpose.msra.mxu0 0.0
        %2345 = vmatprep.subr.mxu0 0.0
        %2346 = vmatpush1.xpose.msra.mxu0 0.0
        %2347 = vmatprep.subr.mxu0 0.0
        %2348 = vmatpush1.xpose.msra.mxu0 0.0
        %2349 = vmatprep.subr.mxu0 0.0
        %2350 = vmatpush1.xpose.msra.mxu0 0.0
        %2351 = vmatprep.subr.mxu0 0.0
        %2352 = vmatpush1.xpose.msra.mxu0 %v2321
        %2353 = vmatprep.subr.mxu0 0.0
        %2354 = vmatpush1.xpose.msra.mxu0 %v2319
        %2355 = vmatprep.subr.mxu0 0.0
        %2356 = vmatpush2.xpose.msra.mxu0 0.0
        %2357 = vmatprep.subr.mxu0 0.0
        %2358 = vmatpush2.xpose.msra.mxu0 0.0
        %2359 = vmatprep.subr.mxu0 0.0
        %2360 = vmatpush2.xpose.msra.mxu0 0.0
        %2361 = vmatprep.subr.mxu0 0.0
        %2362 = vmatpush2.xpose.msra.mxu0 0.0
        %2363 = vmatprep.subr.mxu0 0.0
        %2364 = vmatpush2.xpose.msra.mxu0 0.0
        %2365 = vmatprep.subr.mxu0 0.0
        %2366 = vmatpush2.xpose.msra.mxu0 0.0
        %2367 = vmatprep.subr.mxu0 0.0
        %2368 = vmatpush2.xpose.msra.mxu0 0.0
        %2369 = vmatprep.subr.mxu0 0.0
        %2370 = vmatpush2.xpose.msra.mxu0 0.0
        %2371 = vmatprep.subr.mxu0 0.0
        %2372 = vmatpush2.xpose.msra.mxu0 0.0
        %2373 = vmatprep.subr.mxu0 0.0
        %2374 = vmatpush2.xpose.msra.mxu0 0.0
        %2375 = vmatprep.subr.mxu0 0.0
        %2376 = vmatpush2.xpose.msra.mxu0 0.0
        %2377 = vmatprep.subr.mxu0 0.0
        %2378 = vmatpush2.xpose.msra.mxu0 0.0
        %2379 = vmatprep.subr.mxu0 0.0
        %2380 = vmatpush2.xpose.msra.mxu0 0.0
        %2381 = vmatprep.subr.mxu0 0.0
        %2382 = vmatpush2.xpose.msra.mxu0 0.0
        %2383 = vmatprep.subr.mxu0 0.0
        %2384 = vmatpush2.xpose.msra.mxu0 0.0
        %2385 = vmatprep.subr.mxu0 0.0
        %2386 = vmatpush2.xpose.msra.mxu0 0.0
        %2387 = vmatprep.mubr.f32.mxu0 0.0
        %2388 = vmatmul.mubr.f32.gmra.mxu0 %v2317
        %v2389 = vpop.f32.mrf.mxu0
        %v2390 = vadd.f32 0.0, %v2389
        %v2391 = vpop.f32.mrf.mxu0
        %2392 = vdwg.mxu0
        %v2393 = vmul.f32 %v2162, 0.35355338
        %v2394 = vmul.f32 %v2238, 0.35355338
        %v2395 = vmul.f32 %v2314, 0.35355338
        %v2396 = vmul.f32 %v2390, 0.35355338
        %v2397 = vadd.f32 %v2393, %v828
        %v2398 = vadd.f32 %v2394, %v828
        %v2399 = vadd.f32 %v2395, %v828
        %v2400 = vadd.f32 %v2396, %v828
        %v2401 = vadd.f32 %v2393, %v829
        %v2402 = vadd.f32 %v2394, %v829
        %v2403 = vadd.f32 %v2395, %v829
        %v2404 = vadd.f32 %v2396, %v829
        %v2405 = vsel %vm1602, %v2397, -inf
        %2406 = vmax.xlane.f32.xlu0 %v2405
        %v2407 = vpop.xlane.xlu0 %2406
        %v2408 = vsel %vm1602, %v2398, -inf
        %2409 = vmax.xlane.f32.xlu0 %v2408
        %v2410 = vpop.xlane.xlu0 %2409
        %v2411 = vsel %vm1602, %v2399, -inf
        %2412 = vmax.xlane.f32.xlu0 %v2411
        %v2413 = vpop.xlane.xlu0 %2412
        %v2414 = vsel %vm1602, %v2400, -inf
        %2415 = vmax.xlane.f32.xlu0 %v2414
        %v2416 = vpop.xlane.xlu0 %2415
        %v2417 = vsel %vm1602, %v2401, -inf
        %2418 = vmax.xlane.f32.xlu0 %v2417
        %v2419 = vpop.xlane.xlu0 %2418
        %v2420 = vsel %vm1602, %v2402, -inf
        %2421 = vmax.xlane.f32.xlu0 %v2420
        %v2422 = vpop.xlane.xlu0 %2421
        %v2423 = vsel %vm1602, %v2403, -inf
        %2424 = vmax.xlane.f32.xlu0 %v2423
        %v2425 = vpop.xlane.xlu0 %2424
        %v2426 = vsel %vm1602, %v2404, -inf
        %2427 = vmax.xlane.f32.xlu0 %v2426
        %v2428 = vpop.xlane.xlu0 %2427
        %v2429 = vsub.f32 %v2397, %v2407
        %v2430 = vsub.f32 %v2398, %v2410
        %v2431 = vsub.f32 %v2399, %v2413
        %v2432 = vsub.f32 %v2400, %v2416
        %v2433 = vsub.f32 %v2401, %v2419
        %v2434 = vsub.f32 %v2402, %v2422
        %v2435 = vsub.f32 %v2403, %v2425
        %v2436 = vsub.f32 %v2404, %v2428
        %v2437 = vmul.f32 %v2429, 1.442695
        %v2438 = vpow.pop %v2437
        %v2439 = vmul.f32 %v2430, 1.442695
        %v2440 = vpow.pop %v2439
        %v2441 = vmul.f32 %v2431, 1.442695
        %v2442 = vpow.pop %v2441
        %v2443 = vmul.f32 %v2432, 1.442695
        %v2444 = vpow.pop %v2443
        %v2445 = vmul.f32 %v2433, 1.442695
        %v2446 = vpow.pop %v2445
        %v2447 = vmul.f32 %v2434, 1.442695
        %v2448 = vpow.pop %v2447
        %v2449 = vmul.f32 %v2435, 1.442695
        %v2450 = vpow.pop %v2449
        %v2451 = vmul.f32 %v2436, 1.442695
        %v2452 = vpow.pop %v2451
        %v2453 = vsel %vm1602, %v2438, 0.0
        %2454 = vadd.xlane.f32.xlu0 %v2453
        %v2455 = vpop.xlane.xlu0 %2454
        %v2456 = vsel %vm1602, %v2440, 0.0
        %2457 = vadd.xlane.f32.xlu0 %v2456
        %v2458 = vpop.xlane.xlu0 %2457
        %v2459 = vsel %vm1602, %v2442, 0.0
        %2460 = vadd.xlane.f32.xlu0 %v2459
        %v2461 = vpop.xlane.xlu0 %2460
        %v2462 = vsel %vm1602, %v2444, 0.0
        %2463 = vadd.xlane.f32.xlu0 %v2462
        %v2464 = vpop.xlane.xlu0 %2463
        %v2465 = vsel %vm1602, %v2446, 0.0
        %2466 = vadd.xlane.f32.xlu0 %v2465
        %v2467 = vpop.xlane.xlu0 %2466
        %v2468 = vsel %vm1602, %v2448, 0.0
        %2469 = vadd.xlane.f32.xlu0 %v2468
        %v2470 = vpop.xlane.xlu0 %2469
        %v2471 = vsel %vm1602, %v2450, 0.0
        %2472 = vadd.xlane.f32.xlu0 %v2471
        %v2473 = vpop.xlane.xlu0 %2472
        %v2474 = vsel %vm1602, %v2452, 0.0
        %2475 = vadd.xlane.f32.xlu0 %v2474
        %v2476 = vpop.xlane.xlu0 %2475
        %v2477 = vrcp.pop %v2455
        %v2478 = vrcp.pop %v2458
        %v2479 = vrcp.pop %v2461
        %v2480 = vrcp.pop %v2464
        %v2481 = vrcp.pop %v2467
        %v2482 = vrcp.pop %v2470
        %v2483 = vrcp.pop %v2473
        %v2484 = vrcp.pop %v2476
        %v2485 = vmul.f32 %v2438, %v2477
        %v2486 = vmul.f32 %v2440, %v2478
        %v2487 = vmul.f32 %v2442, %v2479
        %v2488 = vmul.f32 %v2444, %v2480
        %v2489 = vmul.f32 %v2446, %v2481
        %v2490 = vmul.f32 %v2448, %v2482
        %v2491 = vmul.f32 %v2450, %v2483
        %v2492 = vmul.f32 %v2452, %v2484
        %s2494 = vtos %v1891
        %v2495 = vstv %s2494
        %v2497 = vmul.f32 %v2495, %v2485
        %v2498 = vmul.f32 %v2495, %v2486
        %v2499 = vmul.f32 %v2495, %v2487
        %v2500 = vmul.f32 %v2495, %v2488
        %2501 = vrot.lane.b32.xlu0 %v1891, 127
        %v2502 = vpop.permute.xlu0 %2501
        %s2503 = vtos %v2502
        %v2504 = vstv %s2503
        %v2506 = vmul.f32 %v2504, %v2489
        %v2507 = vmul.f32 %v2504, %v2490
        %v2508 = vmul.f32 %v2504, %v2491
        %v2509 = vmul.f32 %v2504, %v2492
        %v2510 = vadd.f32 %v2497, %v2506
        %v2511 = vadd.f32 %v2498, %v2507
        %v2512 = vadd.f32 %v2499, %v2508
        %v2513 = vadd.f32 %v2500, %v2509
        %2514 = vrot.lane.b32.xlu0 %v1976, 96
        %v2515 = vpop.permute.xlu0 %2514
        %2516 = vrot.lane.b32.xlu0 %v1981, 96
        %v2517 = vpop.permute.xlu0 %2516
        %v2521 = vsel %vm1602, %v2510, 0
        %2523 = vmatprep.subr.mxu0 0.0
        %2524 = vmatpush1.msra.mxu0 0.0
        %2525 = vmatprep.subr.mxu0 0.0
        %2526 = vmatpush1.msra.mxu0 0.0
        %2527 = vmatprep.subr.mxu0 0.0
        %2528 = vmatpush1.msra.mxu0 0.0
        %2529 = vmatprep.subr.mxu0 0.0
        %2530 = vmatpush1.msra.mxu0 0.0
        %2531 = vmatprep.subr.mxu0 0.0
        %2532 = vmatpush1.msra.mxu0 0.0
        %2533 = vmatprep.subr.mxu0 0.0
        %2534 = vmatpush1.msra.mxu0 0.0
        %2535 = vmatprep.subr.mxu0 0.0
        %2536 = vmatpush1.msra.mxu0 0.0
        %2537 = vmatprep.subr.mxu0 0.0
        %2538 = vmatpush1.msra.mxu0 0.0
        %2539 = vmatprep.subr.mxu0 0.0
        %2540 = vmatpush1.msra.mxu0 0.0
        %2541 = vmatprep.subr.mxu0 0.0
        %2542 = vmatpush1.msra.mxu0 0.0
        %2543 = vmatprep.subr.mxu0 0.0
        %2544 = vmatpush1.msra.mxu0 0.0
        %2545 = vmatprep.subr.mxu0 0.0
        %2546 = vmatpush1.msra.mxu0 0.0
        %2547 = vmatprep.subr.mxu0 0.0
        %2548 = vmatpush1.msra.mxu0 0.0
        %2549 = vmatprep.subr.mxu0 0.0
        %2550 = vmatpush1.msra.mxu0 0.0
        %2551 = vmatprep.subr.mxu0 0.0
        %2552 = vmatpush1.msra.mxu0 %v2517
        %2553 = vmatprep.subr.mxu0 0.0
        %2554 = vmatpush1.msra.mxu0 %v2515
        %2555 = vmatprep.subr.mxu0 0.0
        %2556 = vmatpush2.msra.mxu0 0.0
        %2557 = vmatprep.subr.mxu0 0.0
        %2558 = vmatpush2.msra.mxu0 0.0
        %2559 = vmatprep.subr.mxu0 0.0
        %2560 = vmatpush2.msra.mxu0 0.0
        %2561 = vmatprep.subr.mxu0 0.0
        %2562 = vmatpush2.msra.mxu0 0.0
        %2563 = vmatprep.subr.mxu0 0.0
        %2564 = vmatpush2.msra.mxu0 0.0
        %2565 = vmatprep.subr.mxu0 0.0
        %2566 = vmatpush2.msra.mxu0 0.0
        %2567 = vmatprep.subr.mxu0 0.0
        %2568 = vmatpush2.msra.mxu0 0.0
        %2569 = vmatprep.subr.mxu0 0.0
        %2570 = vmatpush2.msra.mxu0 0.0
        %2571 = vmatprep.subr.mxu0 0.0
        %2572 = vmatpush2.msra.mxu0 0.0
        %2573 = vmatprep.subr.mxu0 0.0
        %2574 = vmatpush2.msra.mxu0 0.0
        %2575 = vmatprep.subr.mxu0 0.0
        %2576 = vmatpush2.msra.mxu0 0.0
        %2577 = vmatprep.subr.mxu0 0.0
        %2578 = vmatpush2.msra.mxu0 0.0
        %2579 = vmatprep.subr.mxu0 0.0
        %2580 = vmatpush2.msra.mxu0 0.0
        %2581 = vmatprep.subr.mxu0 0.0
        %2582 = vmatpush2.msra.mxu0 0.0
        %2583 = vmatprep.subr.mxu0 0.0
        %2584 = vmatpush2.msra.mxu0 0.0
        %2585 = vmatprep.subr.mxu0 0.0
        %2586 = vmatpush2.msra.mxu0 0.0
        %2587 = vmatprep.mubr.f32.mxu0 0.0
        %2588 = vmatmul.mubr.f32.gmra.mxu0 %v2521
        %v2589 = vpop.f32.mrf.mxu0
        %v2590 = vadd.f32 0.0, %v2589
        %v2591 = vpop.f32.mrf.mxu0
        %2592 = vdwg.mxu0
        %2593 = vrot.lane.b32.xlu0 %v1987, 96
        %v2594 = vpop.permute.xlu0 %2593
        %2595 = vrot.lane.b32.xlu0 %v1989, 96
        %v2596 = vpop.permute.xlu0 %2595
        %v2600 = vsel %vm1602, %v2511, 0
        %2602 = vmatprep.subr.mxu0 0.0
        %2603 = vmatpush1.msra.mxu0 0.0
        %2604 = vmatprep.subr.mxu0 0.0
        %2605 = vmatpush1.msra.mxu0 0.0
        %2606 = vmatprep.subr.mxu0 0.0
        %2607 = vmatpush1.msra.mxu0 0.0
        %2608 = vmatprep.subr.mxu0 0.0
        %2609 = vmatpush1.msra.mxu0 0.0
        %2610 = vmatprep.subr.mxu0 0.0
        %2611 = vmatpush1.msra.mxu0 0.0
        %2612 = vmatprep.subr.mxu0 0.0
        %2613 = vmatpush1.msra.mxu0 0.0
        %2614 = vmatprep.subr.mxu0 0.0
        %2615 = vmatpush1.msra.mxu0 0.0
        %2616 = vmatprep.subr.mxu0 0.0
        %2617 = vmatpush1.msra.mxu0 0.0
        %2618 = vmatprep.subr.mxu0 0.0
        %2619 = vmatpush1.msra.mxu0 0.0
        %2620 = vmatprep.subr.mxu0 0.0
        %2621 = vmatpush1.msra.mxu0 0.0
        %2622 = vmatprep.subr.mxu0 0.0
        %2623 = vmatpush1.msra.mxu0 0.0
        %2624 = vmatprep.subr.mxu0 0.0
        %2625 = vmatpush1.msra.mxu0 0.0
        %2626 = vmatprep.subr.mxu0 0.0
        %2627 = vmatpush1.msra.mxu0 0.0
        %2628 = vmatprep.subr.mxu0 0.0
        %2629 = vmatpush1.msra.mxu0 0.0
        %2630 = vmatprep.subr.mxu0 0.0
        %2631 = vmatpush1.msra.mxu0 %v2596
        %2632 = vmatprep.subr.mxu0 0.0
        %2633 = vmatpush1.msra.mxu0 %v2594
        %2634 = vmatprep.subr.mxu0 0.0
        %2635 = vmatpush2.msra.mxu0 0.0
        %2636 = vmatprep.subr.mxu0 0.0
        %2637 = vmatpush2.msra.mxu0 0.0
        %2638 = vmatprep.subr.mxu0 0.0
        %2639 = vmatpush2.msra.mxu0 0.0
        %2640 = vmatprep.subr.mxu0 0.0
        %2641 = vmatpush2.msra.mxu0 0.0
        %2642 = vmatprep.subr.mxu0 0.0
        %2643 = vmatpush2.msra.mxu0 0.0
        %2644 = vmatprep.subr.mxu0 0.0
        %2645 = vmatpush2.msra.mxu0 0.0
        %2646 = vmatprep.subr.mxu0 0.0
        %2647 = vmatpush2.msra.mxu0 0.0
        %2648 = vmatprep.subr.mxu0 0.0
        %2649 = vmatpush2.msra.mxu0 0.0
        %2650 = vmatprep.subr.mxu0 0.0
        %2651 = vmatpush2.msra.mxu0 0.0
        %2652 = vmatprep.subr.mxu0 0.0
        %2653 = vmatpush2.msra.mxu0 0.0
        %2654 = vmatprep.subr.mxu0 0.0
        %2655 = vmatpush2.msra.mxu0 0.0
        %2656 = vmatprep.subr.mxu0 0.0
        %2657 = vmatpush2.msra.mxu0 0.0
        %2658 = vmatprep.subr.mxu0 0.0
        %2659 = vmatpush2.msra.mxu0 0.0
        %2660 = vmatprep.subr.mxu0 0.0
        %2661 = vmatpush2.msra.mxu0 0.0
        %2662 = vmatprep.subr.mxu0 0.0
        %2663 = vmatpush2.msra.mxu0 0.0
        %2664 = vmatprep.subr.mxu0 0.0
        %2665 = vmatpush2.msra.mxu0 0.0
        %2666 = vmatprep.mubr.f32.mxu0 0.0
        %2667 = vmatmul.mubr.f32.gmra.mxu0 %v2600
        %v2668 = vpop.f32.mrf.mxu0
        %v2669 = vadd.f32 0.0, %v2668
        %v2670 = vpop.f32.mrf.mxu0
        %2671 = vdwg.mxu0
        %2672 = vrot.lane.b32.xlu0 %v1991, 96
        %v2673 = vpop.permute.xlu0 %2672
        %2674 = vrot.lane.b32.xlu0 %v1993, 96
        %v2675 = vpop.permute.xlu0 %2674
        %v2679 = vsel %vm1602, %v2512, 0
        %2681 = vmatprep.subr.mxu0 0.0
        %2682 = vmatpush1.msra.mxu0 0.0
        %2683 = vmatprep.subr.mxu0 0.0
        %2684 = vmatpush1.msra.mxu0 0.0
        %2685 = vmatprep.subr.mxu0 0.0
        %2686 = vmatpush1.msra.mxu0 0.0
        %2687 = vmatprep.subr.mxu0 0.0
        %2688 = vmatpush1.msra.mxu0 0.0
        %2689 = vmatprep.subr.mxu0 0.0
        %2690 = vmatpush1.msra.mxu0 0.0
        %2691 = vmatprep.subr.mxu0 0.0
        %2692 = vmatpush1.msra.mxu0 0.0
        %2693 = vmatprep.subr.mxu0 0.0
        %2694 = vmatpush1.msra.mxu0 0.0
        %2695 = vmatprep.subr.mxu0 0.0
        %2696 = vmatpush1.msra.mxu0 0.0
        %2697 = vmatprep.subr.mxu0 0.0
        %2698 = vmatpush1.msra.mxu0 0.0
        %2699 = vmatprep.subr.mxu0 0.0
        %2700 = vmatpush1.msra.mxu0 0.0
        %2701 = vmatprep.subr.mxu0 0.0
        %2702 = vmatpush1.msra.mxu0 0.0
        %2703 = vmatprep.subr.mxu0 0.0
        %2704 = vmatpush1.msra.mxu0 0.0
        %2705 = vmatprep.subr.mxu0 0.0
        %2706 = vmatpush1.msra.mxu0 0.0
        %2707 = vmatprep.subr.mxu0 0.0
        %2708 = vmatpush1.msra.mxu0 0.0
        %2709 = vmatprep.subr.mxu0 0.0
        %2710 = vmatpush1.msra.mxu0 %v2675
        %2711 = vmatprep.subr.mxu0 0.0
        %2712 = vmatpush1.msra.mxu0 %v2673
        %2713 = vmatprep.subr.mxu0 0.0
        %2714 = vmatpush2.msra.mxu0 0.0
        %2715 = vmatprep.subr.mxu0 0.0
        %2716 = vmatpush2.msra.mxu0 0.0
        %2717 = vmatprep.subr.mxu0 0.0
        %2718 = vmatpush2.msra.mxu0 0.0
        %2719 = vmatprep.subr.mxu0 0.0
        %2720 = vmatpush2.msra.mxu0 0.0
        %2721 = vmatprep.subr.mxu0 0.0
        %2722 = vmatpush2.msra.mxu0 0.0
        %2723 = vmatprep.subr.mxu0 0.0
        %2724 = vmatpush2.msra.mxu0 0.0
        %2725 = vmatprep.subr.mxu0 0.0
        %2726 = vmatpush2.msra.mxu0 0.0
        %2727 = vmatprep.subr.mxu0 0.0
        %2728 = vmatpush2.msra.mxu0 0.0
        %2729 = vmatprep.subr.mxu0 0.0
        %2730 = vmatpush2.msra.mxu0 0.0
        %2731 = vmatprep.subr.mxu0 0.0
        %2732 = vmatpush2.msra.mxu0 0.0
        %2733 = vmatprep.subr.mxu0 0.0
        %2734 = vmatpush2.msra.mxu0 0.0
        %2735 = vmatprep.subr.mxu0 0.0
        %2736 = vmatpush2.msra.mxu0 0.0
        %2737 = vmatprep.subr.mxu0 0.0
        %2738 = vmatpush2.msra.mxu0 0.0
        %2739 = vmatprep.subr.mxu0 0.0
        %2740 = vmatpush2.msra.mxu0 0.0
        %2741 = vmatprep.subr.mxu0 0.0
        %2742 = vmatpush2.msra.mxu0 0.0
        %2743 = vmatprep.subr.mxu0 0.0
        %2744 = vmatpush2.msra.mxu0 0.0
        %2745 = vmatprep.mubr.f32.mxu0 0.0
        %2746 = vmatmul.mubr.f32.gmra.mxu0 %v2679
        %v2747 = vpop.f32.mrf.mxu0
        %v2748 = vadd.f32 0.0, %v2747
        %v2749 = vpop.f32.mrf.mxu0
        %2750 = vdwg.mxu0
        %2751 = vrot.lane.b32.xlu0 %v1995, 96
        %v2752 = vpop.permute.xlu0 %2751
        %2753 = vrot.lane.b32.xlu0 %v1997, 96
        %v2754 = vpop.permute.xlu0 %2753
        %v2758 = vsel %vm1602, %v2513, 0
        %2760 = vmatprep.subr.mxu0 0.0
        %2761 = vmatpush1.msra.mxu0 0.0
        %2762 = vmatprep.subr.mxu0 0.0
        %2763 = vmatpush1.msra.mxu0 0.0
        %2764 = vmatprep.subr.mxu0 0.0
        %2765 = vmatpush1.msra.mxu0 0.0
        %2766 = vmatprep.subr.mxu0 0.0
        %2767 = vmatpush1.msra.mxu0 0.0
        %2768 = vmatprep.subr.mxu0 0.0
        %2769 = vmatpush1.msra.mxu0 0.0
        %2770 = vmatprep.subr.mxu0 0.0
        %2771 = vmatpush1.msra.mxu0 0.0
        %2772 = vmatprep.subr.mxu0 0.0
        %2773 = vmatpush1.msra.mxu0 0.0
        %2774 = vmatprep.subr.mxu0 0.0
        %2775 = vmatpush1.msra.mxu0 0.0
        %2776 = vmatprep.subr.mxu0 0.0
        %2777 = vmatpush1.msra.mxu0 0.0
        %2778 = vmatprep.subr.mxu0 0.0
        %2779 = vmatpush1.msra.mxu0 0.0
        %2780 = vmatprep.subr.mxu0 0.0
        %2781 = vmatpush1.msra.mxu0 0.0
        %2782 = vmatprep.subr.mxu0 0.0
        %2783 = vmatpush1.msra.mxu0 0.0
        %2784 = vmatprep.subr.mxu0 0.0
        %2785 = vmatpush1.msra.mxu0 0.0
        %2786 = vmatprep.subr.mxu0 0.0
        %2787 = vmatpush1.msra.mxu0 0.0
        %2788 = vmatprep.subr.mxu0 0.0
        %2789 = vmatpush1.msra.mxu0 %v2754
        %2790 = vmatprep.subr.mxu0 0.0
        %2791 = vmatpush1.msra.mxu0 %v2752
        %2792 = vmatprep.subr.mxu0 0.0
        %2793 = vmatpush2.msra.mxu0 0.0
        %2794 = vmatprep.subr.mxu0 0.0
        %2795 = vmatpush2.msra.mxu0 0.0
        %2796 = vmatprep.subr.mxu0 0.0
        %2797 = vmatpush2.msra.mxu0 0.0
        %2798 = vmatprep.subr.mxu0 0.0
        %2799 = vmatpush2.msra.mxu0 0.0
        %2800 = vmatprep.subr.mxu0 0.0
        %2801 = vmatpush2.msra.mxu0 0.0
        %2802 = vmatprep.subr.mxu0 0.0
        %2803 = vmatpush2.msra.mxu0 0.0
        %2804 = vmatprep.subr.mxu0 0.0
        %2805 = vmatpush2.msra.mxu0 0.0
        %2806 = vmatprep.subr.mxu0 0.0
        %2807 = vmatpush2.msra.mxu0 0.0
        %2808 = vmatprep.subr.mxu0 0.0
        %2809 = vmatpush2.msra.mxu0 0.0
        %2810 = vmatprep.subr.mxu0 0.0
        %2811 = vmatpush2.msra.mxu0 0.0
        %2812 = vmatprep.subr.mxu0 0.0
        %2813 = vmatpush2.msra.mxu0 0.0
        %2814 = vmatprep.subr.mxu0 0.0
        %2815 = vmatpush2.msra.mxu0 0.0
        %2816 = vmatprep.subr.mxu0 0.0
        %2817 = vmatpush2.msra.mxu0 0.0
        %2818 = vmatprep.subr.mxu0 0.0
        %2819 = vmatpush2.msra.mxu0 0.0
        %2820 = vmatprep.subr.mxu0 0.0
        %2821 = vmatpush2.msra.mxu0 0.0
        %2822 = vmatprep.subr.mxu0 0.0
        %2823 = vmatpush2.msra.mxu0 0.0
        %2824 = vmatprep.mubr.f32.mxu0 0.0
        %2825 = vmatmul.mubr.f32.gmra.mxu0 %v2758
        %v2826 = vpop.f32.mrf.mxu0
        %v2827 = vadd.f32 0.0, %v2826
        %v2828 = vpop.f32.mrf.mxu0
        %2829 = vdwg.mxu0
        %2831 = vrot.lane.b32.xlu0 %v2669, 8
        %v2832 = vpop.permute.xlu0 %2831
        %2835 = vrot.lane.b32.xlu0 %v2748, 16
        %v2836 = vpop.permute.xlu0 %2835
        %2839 = vrot.lane.b32.xlu0 %v2827, 24
        %v2840 = vpop.permute.xlu0 %2839
        %v2842 = vsel %vm924, %v2590, %v2832
        %v2843 = vsel %vm1602, %v2842, %v2836
        %v2844 = vsel %vm1604, %v2843, %v2840
        %v2845 = vld [vmem:[%s12] sm:$0xff]
        %v2846 = vld [vmem:[%s12 + $0x8] sm:$0xff]
        %v2847 = vld [vmem:[%s12 + $0x10] sm:$0xff]
        %v2848 = vld [vmem:[%s12 + $0x18] sm:$0xff]
        %v2849 = vld [vmem:[%s13] sm:$0x1]
        %v2851 = vlaneseq
        %v2852 = vshrl.u32 %v2851, 7
        %v2853 = vsub.s32 0, %v2852
        %v2854 = vrot.slane %v2849, %v2853
        %v2857 = vsel %vm841, %v2844, 0
        %2859 = vmatprep.subr.mxu0 0.0
        %2860 = vmatpush1.msra.mxu0 0.0
        %2861 = vmatprep.subr.mxu0 0.0
        %2862 = vmatpush1.msra.mxu0 0.0
        %2863 = vmatprep.subr.mxu0 0.0
        %2864 = vmatpush1.msra.mxu0 0.0
        %2865 = vmatprep.subr.mxu0 0.0
        %2866 = vmatpush1.msra.mxu0 0.0
        %2867 = vmatprep.subr.mxu0 0.0
        %2868 = vmatpush1.msra.mxu0 0.0
        %2869 = vmatprep.subr.mxu0 0.0
        %2870 = vmatpush1.msra.mxu0 0.0
        %2871 = vmatprep.subr.mxu0 0.0
        %2872 = vmatpush1.msra.mxu0 0.0
        %2873 = vmatprep.subr.mxu0 0.0
        %2874 = vmatpush1.msra.mxu0 0.0
        %2875 = vmatprep.subr.mxu0 0.0
        %2876 = vmatpush1.msra.mxu0 0.0
        %2877 = vmatprep.subr.mxu0 0.0
        %2878 = vmatpush1.msra.mxu0 0.0
        %2879 = vmatprep.subr.mxu0 0.0
        %2880 = vmatpush1.msra.mxu0 0.0
        %2881 = vmatprep.subr.mxu0 0.0
        %2882 = vmatpush1.msra.mxu0 0.0
        %2883 = vmatprep.subr.mxu0 0.0
        %2884 = vmatpush1.msra.mxu0 %v2848
        %2885 = vmatprep.subr.mxu0 0.0
        %2886 = vmatpush1.msra.mxu0 %v2847
        %2887 = vmatprep.subr.mxu0 0.0
        %2888 = vmatpush1.msra.mxu0 %v2846
        %2889 = vmatprep.subr.mxu0 0.0
        %2890 = vmatpush1.msra.mxu0 %v2845
        %2891 = vmatprep.subr.mxu0 0.0
        %2892 = vmatpush2.msra.mxu0 0.0
        %2893 = vmatprep.subr.mxu0 0.0
        %2894 = vmatpush2.msra.mxu0 0.0
        %2895 = vmatprep.subr.mxu0 0.0
        %2896 = vmatpush2.msra.mxu0 0.0
        %2897 = vmatprep.subr.mxu0 0.0
        %2898 = vmatpush2.msra.mxu0 0.0
        %2899 = vmatprep.subr.mxu0 0.0
        %2900 = vmatpush2.msra.mxu0 0.0
        %2901 = vmatprep.subr.mxu0 0.0
        %2902 = vmatpush2.msra.mxu0 0.0
        %2903 = vmatprep.subr.mxu0 0.0
        %2904 = vmatpush2.msra.mxu0 0.0
        %2905 = vmatprep.subr.mxu0 0.0
        %2906 = vmatpush2.msra.mxu0 0.0
        %2907 = vmatprep.subr.mxu0 0.0
        %2908 = vmatpush2.msra.mxu0 0.0
        %2909 = vmatprep.subr.mxu0 0.0
        %2910 = vmatpush2.msra.mxu0 0.0
        %2911 = vmatprep.subr.mxu0 0.0
        %2912 = vmatpush2.msra.mxu0 0.0
        %2913 = vmatprep.subr.mxu0 0.0
        %2914 = vmatpush2.msra.mxu0 0.0
        %2915 = vmatprep.subr.mxu0 0.0
        %2916 = vmatpush2.msra.mxu0 0.0
        %2917 = vmatprep.subr.mxu0 0.0
        %2918 = vmatpush2.msra.mxu0 0.0
        %2919 = vmatprep.subr.mxu0 0.0
        %2920 = vmatpush2.msra.mxu0 0.0
        %2921 = vmatprep.subr.mxu0 0.0
        %2922 = vmatpush2.msra.mxu0 0.0
        %2923 = vmatprep.mubr.f32.mxu0 0.0
        %2924 = vmatmul.mubr.f32.gmra.mxu0 %v2857
        %v2925 = vpop.f32.mrf.mxu0
        %v2926 = vadd.f32 %v2854, %v2925
        %v2927 = vpop.f32.mrf.mxu0
        %2928 = vdwg.mxu0
        %v2929 = vadd.f32 %v1714, %v2926
        %v2930 = vsel %vm841, %v2929, 0.0
        %2931 = vadd.xlane.f32.xlu0 %v2930
        %v2932 = vpop.xlane.xlu0 %2931
        %v2933 = vmul.f32 %v2932, %v1694
        %v2934 = vsub.f32 %v2929, %v2933
        %v2935 = vmul.f32 %v2934, %v2934
        %v2936 = vsel %vm841, %v2935, 0.0
        %2937 = vadd.xlane.f32.xlu0 %v2936
        %v2938 = vpop.xlane.xlu0 %2937
        %v2939 = vmul.f32 %v2938, %v1694
        %v2940 = vadd.f32 %v2939, 1e-06
        %v2941 = vrsqrt.pop %v2940
        %v2942 = vmul.f32 %v2934, %v2941
        %v2943 = vlaneseq
        %v2944 = vshrl.u32 %v2943, 7
        %v2945 = vsub.s32 1, %v2944
        %v2946 = vrot.slane %v822, %v2945
        %v2947 = vmul.f32 %v2942, %v2946
        %v2948 = vlaneseq
        %v2949 = vshrl.u32 %v2948, 7
        %v2950 = vsub.s32 1, %v2949
        %v2951 = vrot.slane %v823, %v2950
        %v2952 = vadd.f32 %v2947, %v2951
        %v2953 = vld [vmem:[%s17] sm:$0xff]
        %v2954 = vld [vmem:[%s17 + $0x8] sm:$0xff]
        %v2955 = vld [vmem:[%s17 + $0x10] sm:$0xff]
        %v2956 = vld [vmem:[%s17 + $0x18] sm:$0xff]
        %v2957 = vld [vmem:[%s18] sm:$0x1]
        %v2959 = vlaneseq
        %v2960 = vshrl.u32 %v2959, 7
        %v2961 = vsub.s32 0, %v2960
        %v2962 = vrot.slane %v2957, %v2961
        %v2965 = vsel %vm841, %v2952, 0
        %2967 = vmatprep.subr.mxu0 0.0
        %2968 = vmatpush1.msra.mxu0 0.0
        %2969 = vmatprep.subr.mxu0 0.0
        %2970 = vmatpush1.msra.mxu0 0.0
        %2971 = vmatprep.subr.mxu0 0.0
        %2972 = vmatpush1.msra.mxu0 0.0
        %2973 = vmatprep.subr.mxu0 0.0
        %2974 = vmatpush1.msra.mxu0 0.0
        %2975 = vmatprep.subr.mxu0 0.0
        %2976 = vmatpush1.msra.mxu0 0.0
        %2977 = vmatprep.subr.mxu0 0.0
        %2978 = vmatpush1.msra.mxu0 0.0
        %2979 = vmatprep.subr.mxu0 0.0
        %2980 = vmatpush1.msra.mxu0 0.0
        %2981 = vmatprep.subr.mxu0 0.0
        %2982 = vmatpush1.msra.mxu0 0.0
        %2983 = vmatprep.subr.mxu0 0.0
        %2984 = vmatpush1.msra.mxu0 0.0
        %2985 = vmatprep.subr.mxu0 0.0
        %2986 = vmatpush1.msra.mxu0 0.0
        %2987 = vmatprep.subr.mxu0 0.0
        %2988 = vmatpush1.msra.mxu0 0.0
        %2989 = vmatprep.subr.mxu0 0.0
        %2990 = vmatpush1.msra.mxu0 0.0
        %2991 = vmatprep.subr.mxu0 0.0
        %2992 = vmatpush1.msra.mxu0 %v2956
        %2993 = vmatprep.subr.mxu0 0.0
        %2994 = vmatpush1.msra.mxu0 %v2955
        %2995 = vmatprep.subr.mxu0 0.0
        %2996 = vmatpush1.msra.mxu0 %v2954
        %2997 = vmatprep.subr.mxu0 0.0
        %2998 = vmatpush1.msra.mxu0 %v2953
        %2999 = vmatprep.subr.mxu0 0.0
        %3000 = vmatpush2.msra.mxu0 0.0
        %3001 = vmatprep.subr.mxu0 0.0
        %3002 = vmatpush2.msra.mxu0 0.0
        %3003 = vmatprep.subr.mxu0 0.0
        %3004 = vmatpush2.msra.mxu0 0.0
        %3005 = vmatprep.subr.mxu0 0.0
        %3006 = vmatpush2.msra.mxu0 0.0
        %3007 = vmatprep.subr.mxu0 0.0
        %3008 = vmatpush2.msra.mxu0 0.0
        %3009 = vmatprep.subr.mxu0 0.0
        %3010 = vmatpush2.msra.mxu0 0.0
        %3011 = vmatprep.subr.mxu0 0.0
        %3012 = vmatpush2.msra.mxu0 0.0
        %3013 = vmatprep.subr.mxu0 0.0
        %3014 = vmatpush2.msra.mxu0 0.0
        %3015 = vmatprep.subr.mxu0 0.0
        %3016 = vmatpush2.msra.mxu0 0.0
        %3017 = vmatprep.subr.mxu0 0.0
        %3018 = vmatpush2.msra.mxu0 0.0
        %3019 = vmatprep.subr.mxu0 0.0
        %3020 = vmatpush2.msra.mxu0 0.0
        %3021 = vmatprep.subr.mxu0 0.0
        %3022 = vmatpush2.msra.mxu0 0.0
        %3023 = vmatprep.subr.mxu0 0.0
        %3024 = vmatpush2.msra.mxu0 0.0
        %3025 = vmatprep.subr.mxu0 0.0
        %3026 = vmatpush2.msra.mxu0 0.0
        %3027 = vmatprep.subr.mxu0 0.0
        %3028 = vmatpush2.msra.mxu0 0.0
        %3029 = vmatprep.subr.mxu0 0.0
        %3030 = vmatpush2.msra.mxu0 0.0
        %3031 = vmatprep.mubr.f32.mxu0 0.0
        %3032 = vmatmul.mubr.f32.gmra.mxu0 %v2965
        %v3033 = vpop.f32.mrf.mxu0
        %v3034 = vadd.f32 %v2962, %v3033
        %v3035 = vpop.f32.mrf.mxu0
        %3036 = vdwg.mxu0
        %v3037 = vmax.f32 %v3034, 0.0
        %v3038 = vld [vmem:[%s19] sm:$0xff]
        %v3039 = vld [vmem:[%s19 + $0x8] sm:$0xff]
        %v3040 = vld [vmem:[%s19 + $0x10] sm:$0xff]
        %v3041 = vld [vmem:[%s19 + $0x18] sm:$0xff]
        %v3042 = vld [vmem:[%s19 + $0x20] sm:$0xff]
        %v3043 = vld [vmem:[%s19 + $0x28] sm:$0xff]
        %v3044 = vld [vmem:[%s19 + $0x30] sm:$0xff]
        %v3045 = vld [vmem:[%s19 + $0x38] sm:$0xff]
        %v3046 = vld [vmem:[%s20] sm:$0x1]
        %v3048 = vlaneseq
        %v3049 = vshrl.u32 %v3048, 7
        %v3050 = vsub.s32 0, %v3049
        %v3051 = vrot.slane %v3046, %v3050
        %vm3053 = vcmask 523264
        %v3055 = vsel %vm3053, %v3037, 0
        %3057 = vmatprep.subr.mxu0 0.0
        %3058 = vmatpush1.msra.mxu0 0.0
        %3059 = vmatprep.subr.mxu0 0.0
        %3060 = vmatpush1.msra.mxu0 0.0
        %3061 = vmatprep.subr.mxu0 0.0
        %3062 = vmatpush1.msra.mxu0 0.0
        %3063 = vmatprep.subr.mxu0 0.0
        %3064 = vmatpush1.msra.mxu0 0.0
        %3065 = vmatprep.subr.mxu0 0.0
        %3066 = vmatpush1.msra.mxu0 0.0
        %3067 = vmatprep.subr.mxu0 0.0
        %3068 = vmatpush1.msra.mxu0 0.0
        %3069 = vmatprep.subr.mxu0 0.0
        %3070 = vmatpush1.msra.mxu0 0.0
        %3071 = vmatprep.subr.mxu0 0.0
        %3072 = vmatpush1.msra.mxu0 0.0
        %3073 = vmatprep.subr.mxu0 0.0
        %3074 = vmatpush1.msra.mxu0 %v3045
        %3075 = vmatprep.subr.mxu0 0.0
        %3076 = vmatpush1.msra.mxu0 %v3044
        %3077 = vmatprep.subr.mxu0 0.0
        %3078 = vmatpush1.msra.mxu0 %v3043
        %3079 = vmatprep.subr.mxu0 0.0
        %3080 = vmatpush1.msra.mxu0 %v3042
        %3081 = vmatprep.subr.mxu0 0.0
        %3082 = vmatpush1.msra.mxu0 %v3041
        %3083 = vmatprep.subr.mxu0 0.0
        %3084 = vmatpush1.msra.mxu0 %v3040
        %3085 = vmatprep.subr.mxu0 0.0
        %3086 = vmatpush1.msra.mxu0 %v3039
        %3087 = vmatprep.subr.mxu0 0.0
        %3088 = vmatpush1.msra.mxu0 %v3038
        %3089 = vmatprep.subr.mxu0 0.0
        %3090 = vmatpush2.msra.mxu0 0.0
        %3091 = vmatprep.subr.mxu0 0.0
        %3092 = vmatpush2.msra.mxu0 0.0
        %3093 = vmatprep.subr.mxu0 0.0
        %3094 = vmatpush2.msra.mxu0 0.0
        %3095 = vmatprep.subr.mxu0 0.0
        %3096 = vmatpush2.msra.mxu0 0.0
        %3097 = vmatprep.subr.mxu0 0.0
        %3098 = vmatpush2.msra.mxu0 0.0
        %3099 = vmatprep.subr.mxu0 0.0
        %3100 = vmatpush2.msra.mxu0 0.0
        %3101 = vmatprep.subr.mxu0 0.0
        %3102 = vmatpush2.msra.mxu0 0.0
        %3103 = vmatprep.subr.mxu0 0.0
        %3104 = vmatpush2.msra.mxu0 0.0
        %3105 = vmatprep.subr.mxu0 0.0
        %3106 = vmatpush2.msra.mxu0 0.0
        %3107 = vmatprep.subr.mxu0 0.0
        %3108 = vmatpush2.msra.mxu0 0.0
        %3109 = vmatprep.subr.mxu0 0.0
        %3110 = vmatpush2.msra.mxu0 0.0
        %3111 = vmatprep.subr.mxu0 0.0
        %3112 = vmatpush2.msra.mxu0 0.0
        %3113 = vmatprep.subr.mxu0 0.0
        %3114 = vmatpush2.msra.mxu0 0.0
        %3115 = vmatprep.subr.mxu0 0.0
        %3116 = vmatpush2.msra.mxu0 0.0
        %3117 = vmatprep.subr.mxu0 0.0
        %3118 = vmatpush2.msra.mxu0 0.0
        %3119 = vmatprep.subr.mxu0 0.0
        %3120 = vmatpush2.msra.mxu0 0.0
        %3121 = vmatprep.mubr.f32.mxu0 0.0
        %3122 = vmatmul.mubr.f32.gmra.mxu0 %v3055
        %v3123 = vpop.f32.mrf.mxu0
        %v3124 = vadd.f32 %v3051, %v3123
        %v3125 = vpop.f32.mrf.mxu0
        %3126 = vdwg.mxu0
        %v3127 = vadd.f32 %v2952, %v3124
        %v3128 = vsel %vm841, %v3127, 0.0
        %3129 = vadd.xlane.f32.xlu0 %v3128
        %v3130 = vpop.xlane.xlu0 %3129
        %v3131 = vmul.f32 %v3130, %v1694
        %v3132 = vsub.f32 %v3127, %v3131
        %v3133 = vmul.f32 %v3132, %v3132
        %v3134 = vsel %vm841, %v3133, 0.0
        %3135 = vadd.xlane.f32.xlu0 %v3134
        %v3136 = vpop.xlane.xlu0 %3135
        %v3137 = vmul.f32 %v3136, %v1694
        %v3138 = vadd.f32 %v3137, 1e-06
        %v3139 = vrsqrt.pop %v3138
        %v3140 = vmul.f32 %v3132, %v3139
        %v3141 = vlaneseq
        %v3142 = vshrl.u32 %v3141, 7
        %v3143 = vsub.s32 2, %v3142
        %v3144 = vrot.slane %v822, %v3143
        %v3145 = vmul.f32 %v3140, %v3144
        %v3146 = vlaneseq
        %v3147 = vshrl.u32 %v3146, 7
        %v3148 = vsub.s32 2, %v3147
        %v3149 = vrot.slane %v823, %v3148
        %v3150 = vadd.f32 %v3145, %v3149
        %3151 = vst.msk [vmem:[%s810] sm:$0xff] %vm841, %v3150
        %s3152 = sand.u32 %s551, 1
        %s3153 = scalar_lea.sflag [#allocation4], %s3152
        %s3154 = sand.u32 %s551, 1
        %s3155 = smul.addr %s3154, 8
        %s3156 = scalar_lea.vmem [#allocation6], %s3155
        // Predicated region
        $region155: #{sa_multitrar_forward.1} parent=145 // pred_check
          %p3157 = pneg %p561
        $region156: #{sa_multitrar_forward.1} parent=145 // pred_check_branch
          %3159 = sbr.rel (%p3157) target = $region158
        $region157: #{sa_multitrar_forward.1} parent=145 // pred_region
          %s3161 = ssub.s32 128, 128
          %3162 = vsyncadd %s3153, %s3161
          %s3163 = smul.addr %s40, 128
          %s3164 = scalar_lea.hbm %s23, %s3163
          %s3166 = sshll.u32 %s3156, 4
          %s3167 = int_to_ptr.vmem [resolvable:$true] %s3166
          %3169 = dma.vmem_to_hbm [thread:$0]  %s3167, 128, %s3164, %s3153
        $region158: #{sa_multitrar_forward.1} parent=145 // pred_fallthru
          _
      $region146: #{sa_multitrar_forward.1} parent=5 // pred_fallthru
        _
      %p3170 = scmp.le.s32.totalorder 2, %s35
      // Predicated region
      $region159: #{sa_multitrar_forward.1} parent=5 // pred_check
        %p3171 = pneg %p3170
      $region160: #{sa_multitrar_forward.1} parent=5 // pred_check_branch
        %3173 = sbr.rel (%p3171) target = $region162
      $region161: #{sa_multitrar_forward.1} parent=5 // pred_region
        %s3174 = ssub.s32 %s35, 2
        // Predicated region
        $region163: #{sa_multitrar_forward.1} parent=161 // pred_check
          %p3175 = pneg %p567
        $region164: #{sa_multitrar_forward.1} parent=161 // pred_check_branch
          %3177 = sbr.rel (%p3175) target = $region166
        $region165: #{sa_multitrar_forward.1} parent=161 // pred_region
          %s3178 = sand.u32 %s552, 1
          %s3179 = scalar_lea.sflag [#allocation4], %s3178
          %s3180 = sand.u32 %s552, 1
          %s3181 = smul.addr %s3180, 8
          %s3182 = scalar_lea.vmem [#allocation6], %s3181
          %3183 = dma.done %s3179, 128
        $region166: #{sa_multitrar_forward.1} parent=161 // pred_fallthru
          _
      $region162: #{sa_multitrar_forward.1} parent=5 // pred_fallthru
        _
    $region6: #{sa_multitrar_forward.1} parent=1 // loop_footer
      %s39 = sadd.s32 1, %s35
    $region7: #{sa_multitrar_forward.1} parent=1 // loop_footer_branch
      %34 = sbr.rel target = $region3
    $region8: #{sa_multitrar_forward.1} parent=1 // loop_exit
      _
    %3184 = vsyncpa [#allocation3], 1
    %s3185 = scalar_lea.sflag [#allocation3], 1
    %3186 = vsyncpa %s3185, 1
    %3187 = vsyncpa [#allocation4], 1
    %s3188 = scalar_lea.sflag [#allocation4], 1
    %3189 = vsyncpa %s3188, 1

</llo_original>
